<compile_context>
chip_gen: v6e
topology: v6e:2x2x1
jax: 0.10.0
libtpu: 0.0.40
codegen_flags: <defaults>
</compile_context>

<pallas_src>
import functools

import jax
import jax.numpy as jnp
from jax import lax
from jax.experimental import pallas as pl
from jax.experimental.pallas import tpu as pltpu


# -----------------------------------------------------------------------------
# Fused kernel: polyphase deconv -> concat -> 3 x (conv -> folded BN -> ReLU)
# All activations inside the kernel are (phase, channel, Lq) with Lq (padded to
# a multiple of 128) on the lane axis.
# -----------------------------------------------------------------------------
def _up_triple_conv_kernel(
    x_ref, down_ref, wd_ref, bd_ref,
    w0_ref, s0_ref, t0_ref,
    w1_ref, s1_ref, t1_ref,
    w2_ref, s2_ref, t2_ref,
    o_ref,
    xpad_ref, buf_a, buf_b,
    *, S, Kd, Pd, Kc, Pc, XP, HP, HALO, Lq, l_in, c_in, c_down, c_outs, lchunk,
):
    f32 = jnp.float32

    # ---- tiny halo zeroing (per step; interiors are fully rewritten below) ----
    if XP > 0:
        zx = jnp.zeros((c_in, XP), f32)
        xpad_ref[:, HALO - XP:HALO] = zx
        xpad_ref[:, HALO + Lq:HALO + Lq + XP] = zx
    if HP > 0:
        za = jnp.zeros((buf_a.shape[1], HP), f32)
        for p in range(S):
            buf_a[p, :, HALO - HP:HALO] = za
            buf_a[p, :, HALO + Lq:HALO + Lq + HP] = za
            buf_b[p, :, HALO - HP:HALO] = za
            buf_b[p, :, HALO + Lq:HALO + Lq + HP] = za

    # Validity mask over the lane-padded columns [l_in, Lq); hoisted once.
    if l_in < Lq:
        lane = lax.broadcasted_iota(jnp.int32, (1, Lq), 1)
        mask = (lane < l_in).astype(f32)
    else:
        mask = None

    # Stage the (zero-padded in HBM) deconv input; interior is lane-aligned.
    xpad_ref[:, HALO:HALO + Lq] = x_ref[0].astype(f32)

    # ---- h0 = concat([down_output, up], channel), phase-major, in buf_a ----
    # down part: already zero-padded + phase-major (S, c_down, Lq) from HBM.
    for p in range(S):
        buf_a[p, 0:c_down, HALO:HALO + Lq] = down_ref[0, p].astype(f32)

    # up part: polyphase ConvTranspose1d.  For output index t = q*S + p the
    # contributing taps satisfy s*S + k = t + Pd, i.e. k == (p + Pd) (mod S)
    # and s = q + (p + Pd - k) // S.
    wd = [wd_ref[k].astype(f32) for k in range(Kd)]     # (c_in, c_in) each
    bias_d = bd_ref[...]                                # (c_in, 1), hoisted
    for p in range(S):
        acc = jnp.zeros((c_in, Lq), f32)
        for k in range((p + Pd) % S, Kd, S):
            o = (p + Pd - k) // S
            acc = acc + jnp.dot(
                wd[k],
                xpad_ref[:, HALO + o:HALO + o + Lq],
                preferred_element_type=f32,
            )
        y = acc + bias_d
        if mask is not None:
            y = y * mask     # keep lane-pad columns exactly zero ("same" pad)
        buf_a[p, c_down:c_down + c_in, HALO:HALO + Lq] = y

    # ---- TripleConv: stride-1 "same" conv + folded BN + ReLU, phase-major ----
    def conv_bn_relu(in_buf, ci_n, w_ref, s_ref, t_ref, co_n, write, apply_mask):
        ws = [w_ref[d].astype(f32) for d in range(Kc)]  # hoisted weight taps
        scale = s_ref[...]                              # (co_n, 1), hoisted
        shift = t_ref[...]
        # full-res input index t + d - Pc maps to phase (p + d - Pc) % S at
        # q-offset (p + d - Pc) // S (Python floor semantics).
        for p in range(S):
            for cb in range(0, Lq, lchunk):             # bound vreg pressure
                cw = min(lchunk, Lq - cb)
                acc = jnp.zeros((co_n, cw), f32)
                for d in range(Kc):
                    e = p + d - Pc
                    p_in = e % S
                    o = e // S
                    base = HALO + o + cb
                    acc = acc + jnp.dot(
                        ws[d],
                        in_buf[p_in, 0:ci_n, base:base + cw],
                        preferred_element_type=f32,
                    )
                y = jnp.maximum(acc * scale + shift, 0.0)
                if apply_mask and mask is not None and (cb + cw > l_in):
                    y = y * mask[:, cb:cb + cw]
                write(p, cb, cw, y)

    def _to_b(p, cb, cw, y):
        buf_b[p, 0:c_outs[0], HALO + cb:HALO + cb + cw] = y

    def _to_a(p, cb, cw, y):
        buf_a[p, 0:c_outs[1], HALO + cb:HALO + cb + cw] = y

    def _to_o(p, cb, cw, y):
        o_ref[0, p, :, cb:cb + cw] = y.astype(o_ref.dtype)

    c_cat = c_down + c_in
    conv_bn_relu(buf_a, c_cat,      w0_ref, s0_ref, t0_ref, c_outs[0], _to_b, True)
    conv_bn_relu(buf_b, c_outs[0],  w1_ref, s1_ref, t1_ref, c_outs[1], _to_a, True)
    conv_bn_relu(buf_a, c_outs[1],  w2_ref, s2_ref, t2_ref, c_outs[2], _to_o, False)


# -----------------------------------------------------------------------------
# Wrapper: layout plumbing + pallas_call
# -----------------------------------------------------------------------------
def up_triple_conv_forward(x_ncl, down_ncl, params, *, up_scale,
                           deconv_filter_length, filter_len, lane_chunk=512):
    n, c_in, l_in = x_ncl.shape
    S = int(up_scale)
    Kd = int(deconv_filter_length)
    Pd = max(0, (Kd - S) // 2)
    l_up = (l_in - 1) * S - 2 * Pd + Kd
    _, c_down, l_down = down_ncl.shape
    # Restriction: requires (Kd - S) even and Kd >= S so that l_up == S*l_in.
    assert l_up == S * l_in and l_down == l_up, (l_up, l_down)
    Kc = int(filter_len)
    Pc = (Kc - 1) // 2
    c_outs = tuple(int(params[f"w{j}"].shape[1]) for j in range(3))
    assert lane_chunk % 128 == 0

    # Lane-dense q-length (multiple of 128).
    Lq = ((l_in + 127) // 128) * 128
    lchunk = min(lane_chunk, Lq)

    # Static halo reach (in q-space) for the polyphase index arithmetic.
    XP = 0
    for p in range(S):
        for k in range((p + Pd) % S, Kd, S):
            XP = max(XP, abs((p + Pd - k) // S))
    HP = 0
    for p in range(S):
        for d in range(Kc):
            HP = max(HP, abs((p + d - Pc) // S))
    # Allocate a 128-aligned halo so the interior starts lane-aligned.
    HALO = ((max(XP, HP, 1) + 127) // 128) * 128

    c_max = max(c_down + c_in, c_outs[0], c_outs[1])

    # Lane padding + phase-major split of the skip connection, fused into one
    # XLA copy (pure layout plumbing; x is tiny).
    if Lq != l_in:
        x_p = jnp.pad(x_ncl, ((0, 0), (0, 0), (0, Lq - l_in)))
        down_p = jnp.pad(down_ncl, ((0, 0), (0, 0), (0, S * (Lq - l_in))))
    else:
        x_p, down_p = x_ncl, down_ncl
    down_ph = jnp.transpose(down_p.reshape(n, c_down, Lq, S), (0, 3, 1, 2))

    kernel = functools.partial(
        _up_triple_conv_kernel,
        S=S, Kd=Kd, Pd=Pd, Kc=Kc, Pc=Pc, XP=XP, HP=HP, HALO=HALO,
        Lq=Lq, l_in=l_in, c_in=c_in, c_down=c_down, c_outs=c_outs,
        lchunk=lchunk)

    # Advisory cost estimate (for the pallas_call op itself).
    macs = Kd * c_in * c_in * Lq
    ci_prev = c_down + c_in
    for j in range(3):
        macs += Kc * ci_prev * c_outs[j] * (S * Lq)
        ci_prev = c_outs[j]
    flops = 2 * n * macs
    param_bytes = 4 * sum(int(v.size) for v in params.values())
    bytes_accessed = (4 * n * (c_in * Lq + S * c_down * Lq + S * c_outs[2] * Lq)
                      + param_bytes)

    # Explicit VMEM budget: scratch + double-buffered I/O blocks + params,
    # with headroom; capped at 64 MiB so it is valid on v7x too.
    halo_w = Lq + 2 * HALO
    scratch_bytes = 4 * (c_in * halo_w + 2 * S * c_max * halo_w)
    io_bytes = 4 * 2 * (c_in * Lq + S * c_down * Lq + S * c_outs[2] * Lq)
    vmem_need = scratch_bytes + io_bytes + 2 * param_bytes
    vmem_limit = int(min(max(2 * vmem_need, 32 * 1024 * 1024), 64 * 1024 * 1024))

    out_ph = pl.pallas_call(
        kernel,
        out_shape=jax.ShapeDtypeStruct((n, S, c_outs[2], Lq), x_ncl.dtype),
        grid_spec=pltpu.PrefetchScalarGridSpec(
            num_scalar_prefetch=0,
            grid=(n,),
            in_specs=[
                pl.BlockSpec((1, c_in, Lq), lambda i: (i, 0, 0)),
                pl.BlockSpec((1, S, c_down, Lq), lambda i: (i, 0, 0, 0)),
                pl.BlockSpec(params["wd"].shape, lambda i: (0, 0, 0)),
                pl.BlockSpec(params["bd"].shape, lambda i: (0, 0)),
                pl.BlockSpec(params["w0"].shape, lambda i: (0, 0, 0)),
                pl.BlockSpec(params["scale0"].shape, lambda i: (0, 0)),
                pl.BlockSpec(params["shift0"].shape, lambda i: (0, 0)),
                pl.BlockSpec(params["w1"].shape, lambda i: (0, 0, 0)),
                pl.BlockSpec(params["scale1"].shape, lambda i: (0, 0)),
                pl.BlockSpec(params["shift1"].shape, lambda i: (0, 0)),
                pl.BlockSpec(params["w2"].shape, lambda i: (0, 0, 0)),
                pl.BlockSpec(params["scale2"].shape, lambda i: (0, 0)),
                pl.BlockSpec(params["shift2"].shape, lambda i: (0, 0)),
            ],
            out_specs=pl.BlockSpec((1, S, c_outs[2], Lq), lambda i: (i, 0, 0, 0)),
            scratch_shapes=[
                pltpu.VMEM((c_in, Lq + 2 * HALO), jnp.float32),       # padded x
                pltpu.VMEM((S, c_max, Lq + 2 * HALO), jnp.float32),   # h0 / h2
                pltpu.VMEM((S, c_max, Lq + 2 * HALO), jnp.float32),   # h1
            ],
        ),
        compiler_params=pltpu.CompilerParams(
            dimension_semantics=("parallel",),
            vmem_limit_bytes=vmem_limit),
        cost_estimate=pl.CostEstimate(flops=flops, transcendentals=0,
                                      bytes_accessed=bytes_accessed),
    )(x_p, down_ph,
      params["wd"], params["bd"],
      params["w0"], params["scale0"], params["shift0"],
      params["w1"], params["scale1"], params["shift1"],
      params["w2"], params["scale2"], params["shift2"])

    # Interleave phases back: (N, S, C, Lq) -> (N, C, Lq, S) -> (N, C, Lq*S),
    # then crop the lane padding.  One fused copy + free reshape/slice.
    out = jnp.transpose(out_ph, (0, 2, 3, 1)).reshape(n, c_outs[2], Lq * S)
    if Lq != l_in:
        out = out[:, :, :l_up]
    return out


# -----------------------------------------------------------------------------
# One-time parameter preparation: fold bias + eval BatchNorm, pre-transpose
# weights into the kernel's (tap, C_out, C_in) layout.
# -----------------------------------------------------------------------------
def prepare_params(tp, *, bn_eps=1e-5):
    p = {}
    # ConvTranspose1d weight: torch (C_in, C_out, Kd) -> (Kd, C_out, C_in)
    p["wd"] = jnp.transpose(tp["deconv_w"], (2, 1, 0)).astype(jnp.float32)
    p["bd"] = tp["deconv_b"].reshape(-1, 1).astype(jnp.float32)
    for j in range(3):
        w = tp[f"conv{j}_w"]                               # (C_out, C_in, Kc)
        scale = tp[f"bn{j}_gamma"] / jnp.sqrt(tp[f"bn{j}_var"] + bn_eps)
        shift = (tp[f"conv{j}_b"] - tp[f"bn{j}_mean"]) * scale + tp[f"bn{j}_beta"]
        p[f"w{j}"] = jnp.transpose(w, (2, 0, 1)).astype(jnp.float32)  # (Kc, C_out, C_in)
        p[f"scale{j}"] = scale.reshape(-1, 1).astype(jnp.float32)
        p[f"shift{j}"] = shift.reshape(-1, 1).astype(jnp.float32)
    return p


# -----------------------------------------------------------------------------
# Pure-JAX reference (independent formulation: zero-dilated flipped-weight conv)
# -----------------------------------------------------------------------------
def up_triple_conv_reference(x_ncl, down_ncl, tp, *, up_scale,
                             deconv_filter_length, filter_len, bn_eps=1e-5):
    S = up_scale
    Kd = deconv_filter_length
    Pd = max(0, (Kd - S) // 2)
    Kc = filter_len
    Pc = (Kc - 1) // 2
    x = jnp.transpose(x_ncl, (0, 2, 1))        # NLC
    d = jnp.transpose(down_ncl, (0, 2, 1))
    n, l, c_in = x.shape
    l_dil = (l - 1) * S + 1
    x_dil = jnp.zeros((n, l_dil, c_in), x.dtype).at[:, ::S, :].set(x)
    w_conv = jnp.flip(tp["deconv_w"], axis=-1).transpose(2, 0, 1)   # (Kd, C_in, C_out)
    up = lax.conv_general_dilated(
        x_dil, w_conv, window_strides=(1,),
        padding=[(Kd - 1 - Pd, Kd - 1 - Pd)],
        dimension_numbers=("NWC", "WIO", "NWC")) + tp["deconv_b"]
    h = jnp.concatenate([d, up], axis=-1)
    for j in range(3):
        wio = jnp.transpose(tp[f"conv{j}_w"], (2, 1, 0))            # (Kc, C_in, C_out)
        h = lax.conv_general_dilated(
            h, wio, window_strides=(1,), padding=[(Pc, Pc)],
            dimension_numbers=("NWC", "WIO", "NWC"))
        scale = tp[f"bn{j}_gamma"] / jnp.sqrt(tp[f"bn{j}_var"] + bn_eps)
        shift = (tp[f"conv{j}_b"] - tp[f"bn{j}_mean"]) * scale + tp[f"bn{j}_beta"]
        h = jnp.maximum(h * scale + shift, 0.0)
    return jnp.transpose(h, (0, 2, 1))


# -----------------------------------------------------------------------------
if __name__ == "__main__":
    UP_SCALE = 2
    IN_CH = 4                       # channels of `input`
    OUT_CH = [8, 8, 8]              # TripleConv out_channels
    FILTER_LEN = 3                  # conv kernel size, "same" pad = 1
    DECONV_K = 4                    # deconv_filter_length
    BATCH, SEQ = 2, 8
    BN_EPS = 1e-5

    key = jax.random.PRNGKey(0)
    keys = jax.random.split(key, 40)
    ki = iter(keys)

    torch_params = {
        "deconv_w": 0.1 * jax.random.normal(next(ki), (IN_CH, IN_CH, DECONV_K), jnp.float32),
        "deconv_b": 0.1 * jax.random.normal(next(ki), (IN_CH,), jnp.float32),
    }
    c_prev = IN_CH + OUT_CH[-1]
    for j, c_out in enumerate(OUT_CH):
        torch_params[f"conv{j}_w"] = 0.1 * jax.random.normal(next(ki), (c_out, c_prev, FILTER_LEN), jnp.float32)
        torch_params[f"conv{j}_b"] = 0.1 * jax.random.normal(next(ki), (c_out,), jnp.float32)
        torch_params[f"bn{j}_gamma"] = 1.0 + 0.1 * jax.random.normal(next(ki), (c_out,), jnp.float32)
        torch_params[f"bn{j}_beta"] = 0.1 * jax.random.normal(next(ki), (c_out,), jnp.float32)
        torch_params[f"bn{j}_mean"] = 0.05 * jax.random.normal(next(ki), (c_out,), jnp.float32)
        torch_params[f"bn{j}_var"] = 1.0 + 0.1 * jnp.abs(jax.random.normal(next(ki), (c_out,), jnp.float32))
        c_prev = c_out

    params = prepare_params(torch_params, bn_eps=BN_EPS)

    # Two configs: small (exercises the lane-pad mask path) and a slightly
    # longer one with lane_chunk=128 (exercises the multi-chunk path).
    for seq, lane_chunk in ((SEQ, 512), (200, 128)):
        x = jax.random.normal(next(ki), (BATCH, IN_CH, seq), jnp.float32)
        down = jax.random.normal(next(ki), (BATCH, OUT_CH[-1], UP_SCALE * seq), jnp.float32)

        out = up_triple_conv_forward(x, down, params, up_scale=UP_SCALE,
                                     deconv_filter_length=DECONV_K,
                                     filter_len=FILTER_LEN,
                                     lane_chunk=lane_chunk)
        out = jax.block_until_ready(out)

        ref = up_triple_conv_reference(x, down, torch_params, up_scale=UP_SCALE,
                                       deconv_filter_length=DECONV_K,
                                       filter_len=FILTER_LEN, bn_eps=BN_EPS)
        ref = jax.block_until_ready(ref)

        assert out.shape == (BATCH, OUT_CH[-1], UP_SCALE * seq), out.shape
        max_err = float(jnp.max(jnp.abs(out - ref)))
        assert jnp.allclose(out, ref, rtol=1e-4, atol=1e-4), max_err

    print("KERNEL_OK")
</pallas_src>

<mosaic_0001>
module attributes {stable_mosaic.version = 11 : i64} {
  func.func @_up_triple_conv_kernel(%arg0: i32, %arg1: memref<1x4x128xf32, #tpu.memory_space<vmem>>, %arg2: memref<1x2x8x128xf32, #tpu.memory_space<vmem>>, %arg3: memref<4x4x4xf32, #tpu.memory_space<vmem>>, %arg4: memref<4x1xf32, #tpu.memory_space<vmem>>, %arg5: memref<3x8x12xf32, #tpu.memory_space<vmem>>, %arg6: memref<8x1xf32, #tpu.memory_space<vmem>>, %arg7: memref<8x1xf32, #tpu.memory_space<vmem>>, %arg8: memref<3x8x8xf32, #tpu.memory_space<vmem>>, %arg9: memref<8x1xf32, #tpu.memory_space<vmem>>, %arg10: memref<8x1xf32, #tpu.memory_space<vmem>>, %arg11: memref<3x8x8xf32, #tpu.memory_space<vmem>>, %arg12: memref<8x1xf32, #tpu.memory_space<vmem>>, %arg13: memref<8x1xf32, #tpu.memory_space<vmem>>, %arg14: memref<1x2x8x128xf32, #tpu.memory_space<vmem>>, %arg15: memref<4x384xf32, #tpu.memory_space<vmem>>, %arg16: memref<2x12x384xf32, #tpu.memory_space<vmem>>, %arg17: memref<2x12x384xf32, #tpu.memory_space<vmem>>) attributes {dimension_semantics = [#tpu.dimension_semantics<parallel>], iteration_bounds = array<i64: 2>, scalar_prefetch = 0 : i64, scratch_operands = 3 : i64, tpu.core_type = #tpu.core_type<tc>, window_params = [{transform_indices = @transform_0, window_bounds = array<i64: 1, 4, 128>}, {transform_indices = @transform_1, window_bounds = array<i64: 1, 2, 8, 128>}, {pipeline_mode = #tpu.pipeline_mode<synchronous>, transform_indices = @transform_2, window_bounds = array<i64: 4, 4, 4>}, {pipeline_mode = #tpu.pipeline_mode<synchronous>, transform_indices = @transform_3, window_bounds = array<i64: 4, 1>}, {pipeline_mode = #tpu.pipeline_mode<synchronous>, transform_indices = @transform_4, window_bounds = array<i64: 3, 8, 12>}, {pipeline_mode = #tpu.pipeline_mode<synchronous>, transform_indices = @transform_5, window_bounds = array<i64: 8, 1>}, {pipeline_mode = #tpu.pipeline_mode<synchronous>, transform_indices = @transform_6, window_bounds = array<i64: 8, 1>}, {pipeline_mode = #tpu.pipeline_mode<synchronous>, transform_indices = @transform_7, window_bounds = array<i64: 3, 8, 8>}, {pipeline_mode = #tpu.pipeline_mode<synchronous>, transform_indices = @transform_8, window_bounds = array<i64: 8, 1>}, {pipeline_mode = #tpu.pipeline_mode<synchronous>, transform_indices = @transform_9, window_bounds = array<i64: 8, 1>}, {pipeline_mode = #tpu.pipeline_mode<synchronous>, transform_indices = @transform_10, window_bounds = array<i64: 3, 8, 8>}, {pipeline_mode = #tpu.pipeline_mode<synchronous>, transform_indices = @transform_11, window_bounds = array<i64: 8, 1>}, {pipeline_mode = #tpu.pipeline_mode<synchronous>, transform_indices = @transform_12, window_bounds = array<i64: 8, 1>}, {transform_indices = @transform_13, window_bounds = array<i64: 1, 2, 8, 128>}]} {
    %cst = arith.constant 0.000000e+00 : f32
    %0 = vector.broadcast %cst : f32 to vector<4x1xf32>
    %c0 = arith.constant 0 : index
    %c127 = arith.constant 127 : index
    %1 = vector.load %arg15[%c0, %c127] : memref<4x384xf32, #tpu.memory_space<vmem>>, vector<4x1xf32>
    tpu.vector_store %arg15[%c0, %c127], %0 {strides = array<i32>} : memref<4x384xf32, #tpu.memory_space<vmem>>, vector<4x1xf32>,
    %c0_0 = arith.constant 0 : index
    %c256 = arith.constant 256 : index
    %2 = vector.load %arg15[%c0_0, %c256] : memref<4x384xf32, #tpu.memory_space<vmem>>, vector<4x1xf32>
    tpu.vector_store %arg15[%c0_0, %c256], %0 {strides = array<i32>} : memref<4x384xf32, #tpu.memory_space<vmem>>, vector<4x1xf32>,
    %cst_1 = arith.constant 0.000000e+00 : f32
    %3 = vector.broadcast %cst_1 : f32 to vector<12x1xf32>
    %c0_2 = arith.constant 0 : index
    %c0_3 = arith.constant 0 : index
    %c127_4 = arith.constant 127 : index
    %4 = vector.load %arg16[%c0_2, %c0_3, %c127_4] : memref<2x12x384xf32, #tpu.memory_space<vmem>>, vector<1x12x1xf32>
    %5 = vector.shape_cast %4 : vector<1x12x1xf32> to vector<12x1xf32>
    %6 = vector.shape_cast %3 : vector<12x1xf32> to vector<1x12x1xf32>
    tpu.vector_store %arg16[%c0_2, %c0_3, %c127_4], %6 {strides = array<i32>} : memref<2x12x384xf32, #tpu.memory_space<vmem>>, vector<1x12x1xf32>,
    %c0_5 = arith.constant 0 : index
    %c0_6 = arith.constant 0 : index
    %c256_7 = arith.constant 256 : index
    %7 = vector.load %arg16[%c0_5, %c0_6, %c256_7] : memref<2x12x384xf32, #tpu.memory_space<vmem>>, vector<1x12x1xf32>
    %8 = vector.shape_cast %7 : vector<1x12x1xf32> to vector<12x1xf32>
    %9 = vector.shape_cast %3 : vector<12x1xf32> to vector<1x12x1xf32>
    tpu.vector_store %arg16[%c0_5, %c0_6, %c256_7], %9 {strides = array<i32>} : memref<2x12x384xf32, #tpu.memory_space<vmem>>, vector<1x12x1xf32>,
    %c0_8 = arith.constant 0 : index
    %c0_9 = arith.constant 0 : index
    %c127_10 = arith.constant 127 : index
    %10 = vector.load %arg17[%c0_8, %c0_9, %c127_10] : memref<2x12x384xf32, #tpu.memory_space<vmem>>, vector<1x12x1xf32>
    %11 = vector.shape_cast %10 : vector<1x12x1xf32> to vector<12x1xf32>
    %12 = vector.shape_cast %3 : vector<12x1xf32> to vector<1x12x1xf32>
    tpu.vector_store %arg17[%c0_8, %c0_9, %c127_10], %12 {strides = array<i32>} : memref<2x12x384xf32, #tpu.memory_space<vmem>>, vector<1x12x1xf32>,
    %c0_11 = arith.constant 0 : index
    %c0_12 = arith.constant 0 : index
    %c256_13 = arith.constant 256 : index
    %13 = vector.load %arg17[%c0_11, %c0_12, %c256_13] : memref<2x12x384xf32, #tpu.memory_space<vmem>>, vector<1x12x1xf32>
    %14 = vector.shape_cast %13 : vector<1x12x1xf32> to vector<12x1xf32>
    %15 = vector.shape_cast %3 : vector<12x1xf32> to vector<1x12x1xf32>
    tpu.vector_store %arg17[%c0_11, %c0_12, %c256_13], %15 {strides = array<i32>} : memref<2x12x384xf32, #tpu.memory_space<vmem>>, vector<1x12x1xf32>,
    %c1 = arith.constant 1 : index
    %c0_14 = arith.constant 0 : index
    %c127_15 = arith.constant 127 : index
    %16 = vector.load %arg16[%c1, %c0_14, %c127_15] : memref<2x12x384xf32, #tpu.memory_space<vmem>>, vector<1x12x1xf32>
    %17 = vector.shape_cast %16 : vector<1x12x1xf32> to vector<12x1xf32>
    %18 = vector.shape_cast %3 : vector<12x1xf32> to vector<1x12x1xf32>
    tpu.vector_store %arg16[%c1, %c0_14, %c127_15], %18 {strides = array<i32>} : memref<2x12x384xf32, #tpu.memory_space<vmem>>, vector<1x12x1xf32>,
    %c1_16 = arith.constant 1 : index
    %c0_17 = arith.constant 0 : index
    %c256_18 = arith.constant 256 : index
    %19 = vector.load %arg16[%c1_16, %c0_17, %c256_18] : memref<2x12x384xf32, #tpu.memory_space<vmem>>, vector<1x12x1xf32>
    %20 = vector.shape_cast %19 : vector<1x12x1xf32> to vector<12x1xf32>
    %21 = vector.shape_cast %3 : vector<12x1xf32> to vector<1x12x1xf32>
    tpu.vector_store %arg16[%c1_16, %c0_17, %c256_18], %21 {strides = array<i32>} : memref<2x12x384xf32, #tpu.memory_space<vmem>>, vector<1x12x1xf32>,
    %c1_19 = arith.constant 1 : index
    %c0_20 = arith.constant 0 : index
    %c127_21 = arith.constant 127 : index
    %22 = vector.load %arg17[%c1_19, %c0_20, %c127_21] : memref<2x12x384xf32, #tpu.memory_space<vmem>>, vector<1x12x1xf32>
    %23 = vector.shape_cast %22 : vector<1x12x1xf32> to vector<12x1xf32>
    %24 = vector.shape_cast %3 : vector<12x1xf32> to vector<1x12x1xf32>
    tpu.vector_store %arg17[%c1_19, %c0_20, %c127_21], %24 {strides = array<i32>} : memref<2x12x384xf32, #tpu.memory_space<vmem>>, vector<1x12x1xf32>,
    %c1_22 = arith.constant 1 : index
    %c0_23 = arith.constant 0 : index
    %c256_24 = arith.constant 256 : index
    %25 = vector.load %arg17[%c1_22, %c0_23, %c256_24] : memref<2x12x384xf32, #tpu.memory_space<vmem>>, vector<1x12x1xf32>
    %26 = vector.shape_cast %25 : vector<1x12x1xf32> to vector<12x1xf32>
    %27 = vector.shape_cast %3 : vector<12x1xf32> to vector<1x12x1xf32>
    tpu.vector_store %arg17[%c1_22, %c0_23, %c256_24], %27 {strides = array<i32>} : memref<2x12x384xf32, #tpu.memory_space<vmem>>, vector<1x12x1xf32>,
    %28 = tpu.iota {dimensions = array<i32: 1>} : vector<1x128xi32>
    %c8_i32 = arith.constant 8 : i32
    %29 = vector.broadcast %c8_i32 : i32 to vector<1x128xi32>
    %30 = arith.cmpi slt, %28, %29 : vector<1x128xi32>
    %31 = arith.extui %30 : vector<1x128xi1> to vector<1x128xi32>
    %32 = arith.sitofp %31 : vector<1x128xi32> to vector<1x128xf32>
    %c0_25 = arith.constant 0 : index
    %c0_26 = arith.constant 0 : index
    %c0_27 = arith.constant 0 : index
    %33 = vector.load %arg1[%c0_25, %c0_26, %c0_27] : memref<1x4x128xf32, #tpu.memory_space<vmem>>, vector<1x4x128xf32>
    %34 = vector.shape_cast %33 : vector<1x4x128xf32> to vector<4x128xf32>
    %c0_28 = arith.constant 0 : index
    %c128 = arith.constant 128 : index
    %35 = vector.load %arg15[%c0_28, %c128] : memref<4x384xf32, #tpu.memory_space<vmem>>, vector<4x128xf32>
    tpu.vector_store %arg15[%c0_28, %c128], %34 {strides = array<i32>} : memref<4x384xf32, #tpu.memory_space<vmem>>, vector<4x128xf32>,
    %c0_29 = arith.constant 0 : index
    %c0_30 = arith.constant 0 : index
    %c0_31 = arith.constant 0 : index
    %c0_32 = arith.constant 0 : index
    %36 = vector.load %arg2[%c0_29, %c0_30, %c0_31, %c0_32] : memref<1x2x8x128xf32, #tpu.memory_space<vmem>>, vector<1x1x8x128xf32>
    %37 = vector.shape_cast %36 : vector<1x1x8x128xf32> to vector<8x128xf32>
    %c0_33 = arith.constant 0 : index
    %c0_34 = arith.constant 0 : index
    %c128_35 = arith.constant 128 : index
    %38 = vector.load %arg16[%c0_33, %c0_34, %c128_35] : memref<2x12x384xf32, #tpu.memory_space<vmem>>, vector<1x8x128xf32>
    %39 = vector.shape_cast %38 : vector<1x8x128xf32> to vector<8x128xf32>
    %40 = vector.shape_cast %37 : vector<8x128xf32> to vector<1x8x128xf32>
    tpu.vector_store %arg16[%c0_33, %c0_34, %c128_35], %40 {strides = array<i32>} : memref<2x12x384xf32, #tpu.memory_space<vmem>>, vector<1x8x128xf32>,
    %c0_36 = arith.constant 0 : index
    %c1_37 = arith.constant 1 : index
    %c0_38 = arith.constant 0 : index
    %c0_39 = arith.constant 0 : index
    %41 = vector.load %arg2[%c0_36, %c1_37, %c0_38, %c0_39] : memref<1x2x8x128xf32, #tpu.memory_space<vmem>>, vector<1x1x8x128xf32>
    %42 = vector.shape_cast %41 : vector<1x1x8x128xf32> to vector<8x128xf32>
    %c1_40 = arith.constant 1 : index
    %c0_41 = arith.constant 0 : index
    %c128_42 = arith.constant 128 : index
    %43 = vector.load %arg16[%c1_40, %c0_41, %c128_42] : memref<2x12x384xf32, #tpu.memory_space<vmem>>, vector<1x8x128xf32>
    %44 = vector.shape_cast %43 : vector<1x8x128xf32> to vector<8x128xf32>
    %45 = vector.shape_cast %42 : vector<8x128xf32> to vector<1x8x128xf32>
    tpu.vector_store %arg16[%c1_40, %c0_41, %c128_42], %45 {strides = array<i32>} : memref<2x12x384xf32, #tpu.memory_space<vmem>>, vector<1x8x128xf32>,
    %c0_43 = arith.constant 0 : index
    %c0_44 = arith.constant 0 : index
    %c0_45 = arith.constant 0 : index
    %46 = vector.load %arg3[%c0_43, %c0_44, %c0_45] : memref<4x4x4xf32, #tpu.memory_space<vmem>>, vector<1x4x4xf32>
    %47 = vector.shape_cast %46 : vector<1x4x4xf32> to vector<4x4xf32>
    %c1_46 = arith.constant 1 : index
    %c0_47 = arith.constant 0 : index
    %c0_48 = arith.constant 0 : index
    %48 = vector.load %arg3[%c1_46, %c0_47, %c0_48] : memref<4x4x4xf32, #tpu.memory_space<vmem>>, vector<1x4x4xf32>
    %49 = vector.shape_cast %48 : vector<1x4x4xf32> to vector<4x4xf32>
    %c2 = arith.constant 2 : index
    %c0_49 = arith.constant 0 : index
    %c0_50 = arith.constant 0 : index
    %50 = vector.load %arg3[%c2, %c0_49, %c0_50] : memref<4x4x4xf32, #tpu.memory_space<vmem>>, vector<1x4x4xf32>
    %51 = vector.shape_cast %50 : vector<1x4x4xf32> to vector<4x4xf32>
    %c3 = arith.constant 3 : index
    %c0_51 = arith.constant 0 : index
    %c0_52 = arith.constant 0 : index
    %52 = vector.load %arg3[%c3, %c0_51, %c0_52] : memref<4x4x4xf32, #tpu.memory_space<vmem>>, vector<1x4x4xf32>
    %53 = vector.shape_cast %52 : vector<1x4x4xf32> to vector<4x4xf32>
    %c0_53 = arith.constant 0 : index
    %c0_54 = arith.constant 0 : index
    %54 = vector.load %arg4[%c0_53, %c0_54] : memref<4x1xf32, #tpu.memory_space<vmem>>, vector<4x1xf32>
    %cst_55 = arith.constant 0.000000e+00 : f32
    %55 = vector.broadcast %cst_55 : f32 to vector<4x128xf32>
    %c0_56 = arith.constant 0 : index
    %c128_57 = arith.constant 128 : index
    %56 = vector.load %arg15[%c0_56, %c128_57] : memref<4x384xf32, #tpu.memory_space<vmem>>, vector<4x128xf32>
    %cst_58 = arith.constant dense<0.000000e+00> : vector<4x128xf32>
    %57 = tpu.matmul %49, %56, %cst_58 {dimension_numbers = #tpu.dot_dimension_numbers<[1], [0], [0], [1], [0, 0, 1, 1], [], []>} : vector<4x4xf32>, vector<4x128xf32>, vector<4x128xf32> -> vector<4x128xf32>
    %58 = arith.addf %55, %57 : vector<4x128xf32>
    %c0_59 = arith.constant 0 : index
    %c127_60 = arith.constant 127 : index
    %59 = vector.load %arg15[%c0_59, %c127_60] : memref<4x384xf32, #tpu.memory_space<vmem>>, vector<4x128xf32>
    %cst_61 = arith.constant dense<0.000000e+00> : vector<4x128xf32>
    %60 = tpu.matmul %53, %59, %cst_61 {dimension_numbers = #tpu.dot_dimension_numbers<[1], [0], [0], [1], [0, 0, 1, 1], [], []>} : vector<4x4xf32>, vector<4x128xf32>, vector<4x128xf32> -> vector<4x128xf32>
    %61 = arith.addf %58, %60 : vector<4x128xf32>
    %62 = vector.broadcast %54 : vector<4x1xf32> to vector<4x128xf32>
    %63 = arith.addf %61, %62 : vector<4x128xf32>
    %64 = vector.broadcast %32 : vector<1x128xf32> to vector<4x128xf32>
    %65 = arith.mulf %63, %64 : vector<4x128xf32>
    %c0_62 = arith.constant 0 : index
    %c8 = arith.constant 8 : index
    %c128_63 = arith.constant 128 : index
    %66 = vector.load %arg16[%c0_62, %c8, %c128_63] : memref<2x12x384xf32, #tpu.memory_space<vmem>>, vector<1x4x128xf32>
    %67 = vector.shape_cast %66 : vector<1x4x128xf32> to vector<4x128xf32>
    %68 = vector.shape_cast %65 : vector<4x128xf32> to vector<1x4x128xf32>
    tpu.vector_store %arg16[%c0_62, %c8, %c128_63], %68 {strides = array<i32>} : memref<2x12x384xf32, #tpu.memory_space<vmem>>, vector<1x4x128xf32>,
    %cst_64 = arith.constant 0.000000e+00 : f32
    %69 = vector.broadcast %cst_64 : f32 to vector<4x128xf32>
    %c0_65 = arith.constant 0 : index
    %c129 = arith.constant 129 : index
    %70 = vector.load %arg15[%c0_65, %c129] : memref<4x384xf32, #tpu.memory_space<vmem>>, vector<4x128xf32>
    %cst_66 = arith.constant dense<0.000000e+00> : vector<4x128xf32>
    %71 = tpu.matmul %47, %70, %cst_66 {dimension_numbers = #tpu.dot_dimension_numbers<[1], [0], [0], [1], [0, 0, 1, 1], [], []>} : vector<4x4xf32>, vector<4x128xf32>, vector<4x128xf32> -> vector<4x128xf32>
    %72 = arith.addf %69, %71 : vector<4x128xf32>
    %c0_67 = arith.constant 0 : index
    %c128_68 = arith.constant 128 : index
    %73 = vector.load %arg15[%c0_67, %c128_68] : memref<4x384xf32, #tpu.memory_space<vmem>>, vector<4x128xf32>
    %cst_69 = arith.constant dense<0.000000e+00> : vector<4x128xf32>
    %74 = tpu.matmul %51, %73, %cst_69 {dimension_numbers = #tpu.dot_dimension_numbers<[1], [0], [0], [1], [0, 0, 1, 1], [], []>} : vector<4x4xf32>, vector<4x128xf32>, vector<4x128xf32> -> vector<4x128xf32>
    %75 = arith.addf %72, %74 : vector<4x128xf32>
    %76 = vector.broadcast %54 : vector<4x1xf32> to vector<4x128xf32>
    %77 = arith.addf %75, %76 : vector<4x128xf32>
    %78 = vector.broadcast %32 : vector<1x128xf32> to vector<4x128xf32>
    %79 = arith.mulf %77, %78 : vector<4x128xf32>
    %c1_70 = arith.constant 1 : index
    %c8_71 = arith.constant 8 : index
    %c128_72 = arith.constant 128 : index
    %80 = vector.load %arg16[%c1_70, %c8_71, %c128_72] : memref<2x12x384xf32, #tpu.memory_space<vmem>>, vector<1x4x128xf32>
    %81 = vector.shape_cast %80 : vector<1x4x128xf32> to vector<4x128xf32>
    %82 = vector.shape_cast %79 : vector<4x128xf32> to vector<1x4x128xf32>
    tpu.vector_store %arg16[%c1_70, %c8_71, %c128_72], %82 {strides = array<i32>} : memref<2x12x384xf32, #tpu.memory_space<vmem>>, vector<1x4x128xf32>,
    %c0_73 = arith.constant 0 : index
    %c0_74 = arith.constant 0 : index
    %c0_75 = arith.constant 0 : index
    %83 = vector.load %arg5[%c0_73, %c0_74, %c0_75] : memref<3x8x12xf32, #tpu.memory_space<vmem>>, vector<1x8x12xf32>
    %84 = vector.shape_cast %83 : vector<1x8x12xf32> to vector<8x12xf32>
    %c1_76 = arith.constant 1 : index
    %c0_77 = arith.constant 0 : index
    %c0_78 = arith.constant 0 : index
    %85 = vector.load %arg5[%c1_76, %c0_77, %c0_78] : memref<3x8x12xf32, #tpu.memory_space<vmem>>, vector<1x8x12xf32>
    %86 = vector.shape_cast %85 : vector<1x8x12xf32> to vector<8x12xf32>
    %c2_79 = arith.constant 2 : index
    %c0_80 = arith.constant 0 : index
    %c0_81 = arith.constant 0 : index
    %87 = vector.load %arg5[%c2_79, %c0_80, %c0_81] : memref<3x8x12xf32, #tpu.memory_space<vmem>>, vector<1x8x12xf32>
    %88 = vector.shape_cast %87 : vector<1x8x12xf32> to vector<8x12xf32>
    %c0_82 = arith.constant 0 : index
    %c0_83 = arith.constant 0 : index
    %89 = vector.load %arg6[%c0_82, %c0_83] : memref<8x1xf32, #tpu.memory_space<vmem>>, vector<8x1xf32>
    %c0_84 = arith.constant 0 : index
    %c0_85 = arith.constant 0 : index
    %90 = vector.load %arg7[%c0_84, %c0_85] : memref<8x1xf32, #tpu.memory_space<vmem>>, vector<8x1xf32>
    %cst_86 = arith.constant 0.000000e+00 : f32
    %91 = vector.broadcast %cst_86 : f32 to vector<8x128xf32>
    %c1_87 = arith.constant 1 : index
    %c0_88 = arith.constant 0 : index
    %c127_89 = arith.constant 127 : index
    %92 = vector.load %arg16[%c1_87, %c0_88, %c127_89] : memref<2x12x384xf32, #tpu.memory_space<vmem>>, vector<1x12x128xf32>
    %93 = vector.shape_cast %92 : vector<1x12x128xf32> to vector<12x128xf32>
    %cst_90 = arith.constant dense<0.000000e+00> : vector<8x128xf32>
    %94 = tpu.matmul %84, %93, %cst_90 {dimension_numbers = #tpu.dot_dimension_numbers<[1], [0], [0], [1], [0, 0, 1, 1], [], []>} : vector<8x12xf32>, vector<12x128xf32>, vector<8x128xf32> -> vector<8x128xf32>
    %95 = arith.addf %91, %94 : vector<8x128xf32>
    %c0_91 = arith.constant 0 : index
    %c0_92 = arith.constant 0 : index
    %c128_93 = arith.constant 128 : index
    %96 = vector.load %arg16[%c0_91, %c0_92, %c128_93] : memref<2x12x384xf32, #tpu.memory_space<vmem>>, vector<1x12x128xf32>
    %97 = vector.shape_cast %96 : vector<1x12x128xf32> to vector<12x128xf32>
    %cst_94 = arith.constant dense<0.000000e+00> : vector<8x128xf32>
    %98 = tpu.matmul %86, %97, %cst_94 {dimension_numbers = #tpu.dot_dimension_numbers<[1], [0], [0], [1], [0, 0, 1, 1], [], []>} : vector<8x12xf32>, vector<12x128xf32>, vector<8x128xf32> -> vector<8x128xf32>
    %99 = arith.addf %95, %98 : vector<8x128xf32>
    %c1_95 = arith.constant 1 : index
    %c0_96 = arith.constant 0 : index
    %c128_97 = arith.constant 128 : index
    %100 = vector.load %arg16[%c1_95, %c0_96, %c128_97] : memref<2x12x384xf32, #tpu.memory_space<vmem>>, vector<1x12x128xf32>
    %101 = vector.shape_cast %100 : vector<1x12x128xf32> to vector<12x128xf32>
    %cst_98 = arith.constant dense<0.000000e+00> : vector<8x128xf32>
    %102 = tpu.matmul %88, %101, %cst_98 {dimension_numbers = #tpu.dot_dimension_numbers<[1], [0], [0], [1], [0, 0, 1, 1], [], []>} : vector<8x12xf32>, vector<12x128xf32>, vector<8x128xf32> -> vector<8x128xf32>
    %103 = arith.addf %99, %102 : vector<8x128xf32>
    %104 = vector.broadcast %89 : vector<8x1xf32> to vector<8x128xf32>
    %105 = arith.mulf %103, %104 : vector<8x128xf32>
    %106 = vector.broadcast %90 : vector<8x1xf32> to vector<8x128xf32>
    %107 = arith.addf %105, %106 : vector<8x128xf32>
    %cst_99 = arith.constant 0.000000e+00 : f32
    %108 = vector.broadcast %cst_99 : f32 to vector<8x128xf32>
    %109 = arith.maximumf %107, %108 : vector<8x128xf32>
    %110 = vector.broadcast %32 : vector<1x128xf32> to vector<8x128xf32>
    %111 = arith.mulf %109, %110 : vector<8x128xf32>
    %c0_100 = arith.constant 0 : index
    %c0_101 = arith.constant 0 : index
    %c128_102 = arith.constant 128 : index
    %112 = vector.load %arg17[%c0_100, %c0_101, %c128_102] : memref<2x12x384xf32, #tpu.memory_space<vmem>>, vector<1x8x128xf32>
    %113 = vector.shape_cast %112 : vector<1x8x128xf32> to vector<8x128xf32>
    %114 = vector.shape_cast %111 : vector<8x128xf32> to vector<1x8x128xf32>
    tpu.vector_store %arg17[%c0_100, %c0_101, %c128_102], %114 {strides = array<i32>} : memref<2x12x384xf32, #tpu.memory_space<vmem>>, vector<1x8x128xf32>,
    %cst_103 = arith.constant 0.000000e+00 : f32
    %115 = vector.broadcast %cst_103 : f32 to vector<8x128xf32>
    %c0_104 = arith.constant 0 : index
    %c0_105 = arith.constant 0 : index
    %c128_106 = arith.constant 128 : index
    %116 = vector.load %arg16[%c0_104, %c0_105, %c128_106] : memref<2x12x384xf32, #tpu.memory_space<vmem>>, vector<1x12x128xf32>
    %117 = vector.shape_cast %116 : vector<1x12x128xf32> to vector<12x128xf32>
    %cst_107 = arith.constant dense<0.000000e+00> : vector<8x128xf32>
    %118 = tpu.matmul %84, %117, %cst_107 {dimension_numbers = #tpu.dot_dimension_numbers<[1], [0], [0], [1], [0, 0, 1, 1], [], []>} : vector<8x12xf32>, vector<12x128xf32>, vector<8x128xf32> -> vector<8x128xf32>
    %119 = arith.addf %115, %118 : vector<8x128xf32>
    %c1_108 = arith.constant 1 : index
    %c0_109 = arith.constant 0 : index
    %c128_110 = arith.constant 128 : index
    %120 = vector.load %arg16[%c1_108, %c0_109, %c128_110] : memref<2x12x384xf32, #tpu.memory_space<vmem>>, vector<1x12x128xf32>
    %121 = vector.shape_cast %120 : vector<1x12x128xf32> to vector<12x128xf32>
    %cst_111 = arith.constant dense<0.000000e+00> : vector<8x128xf32>
    %122 = tpu.matmul %86, %121, %cst_111 {dimension_numbers = #tpu.dot_dimension_numbers<[1], [0], [0], [1], [0, 0, 1, 1], [], []>} : vector<8x12xf32>, vector<12x128xf32>, vector<8x128xf32> -> vector<8x128xf32>
    %123 = arith.addf %119, %122 : vector<8x128xf32>
    %c0_112 = arith.constant 0 : index
    %c0_113 = arith.constant 0 : index
    %c129_114 = arith.constant 129 : index
    %124 = vector.load %arg16[%c0_112, %c0_113, %c129_114] : memref<2x12x384xf32, #tpu.memory_space<vmem>>, vector<1x12x128xf32>
    %125 = vector.shape_cast %124 : vector<1x12x128xf32> to vector<12x128xf32>
    %cst_115 = arith.constant dense<0.000000e+00> : vector<8x128xf32>
    %126 = tpu.matmul %88, %125, %cst_115 {dimension_numbers = #tpu.dot_dimension_numbers<[1], [0], [0], [1], [0, 0, 1, 1], [], []>} : vector<8x12xf32>, vector<12x128xf32>, vector<8x128xf32> -> vector<8x128xf32>
    %127 = arith.addf %123, %126 : vector<8x128xf32>
    %128 = vector.broadcast %89 : vector<8x1xf32> to vector<8x128xf32>
    %129 = arith.mulf %127, %128 : vector<8x128xf32>
    %130 = vector.broadcast %90 : vector<8x1xf32> to vector<8x128xf32>
    %131 = arith.addf %129, %130 : vector<8x128xf32>
    %cst_116 = arith.constant 0.000000e+00 : f32
    %132 = vector.broadcast %cst_116 : f32 to vector<8x128xf32>
    %133 = arith.maximumf %131, %132 : vector<8x128xf32>
    %134 = vector.broadcast %32 : vector<1x128xf32> to vector<8x128xf32>
    %135 = arith.mulf %133, %134 : vector<8x128xf32>
    %c1_117 = arith.constant 1 : index
    %c0_118 = arith.constant 0 : index
    %c128_119 = arith.constant 128 : index
    %136 = vector.load %arg17[%c1_117, %c0_118, %c128_119] : memref<2x12x384xf32, #tpu.memory_space<vmem>>, vector<1x8x128xf32>
    %137 = vector.shape_cast %136 : vector<1x8x128xf32> to vector<8x128xf32>
    %138 = vector.shape_cast %135 : vector<8x128xf32> to vector<1x8x128xf32>
    tpu.vector_store %arg17[%c1_117, %c0_118, %c128_119], %138 {strides = array<i32>} : memref<2x12x384xf32, #tpu.memory_space<vmem>>, vector<1x8x128xf32>,
    %c0_120 = arith.constant 0 : index
    %c0_121 = arith.constant 0 : index
    %c0_122 = arith.constant 0 : index
    %139 = vector.load %arg8[%c0_120, %c0_121, %c0_122] : memref<3x8x8xf32, #tpu.memory_space<vmem>>, vector<1x8x8xf32>
    %140 = vector.shape_cast %139 : vector<1x8x8xf32> to vector<8x8xf32>
    %c1_123 = arith.constant 1 : index
    %c0_124 = arith.constant 0 : index
    %c0_125 = arith.constant 0 : index
    %141 = vector.load %arg8[%c1_123, %c0_124, %c0_125] : memref<3x8x8xf32, #tpu.memory_space<vmem>>, vector<1x8x8xf32>
    %142 = vector.shape_cast %141 : vector<1x8x8xf32> to vector<8x8xf32>
    %c2_126 = arith.constant 2 : index
    %c0_127 = arith.constant 0 : index
    %c0_128 = arith.constant 0 : index
    %143 = vector.load %arg8[%c2_126, %c0_127, %c0_128] : memref<3x8x8xf32, #tpu.memory_space<vmem>>, vector<1x8x8xf32>
    %144 = vector.shape_cast %143 : vector<1x8x8xf32> to vector<8x8xf32>
    %c0_129 = arith.constant 0 : index
    %c0_130 = arith.constant 0 : index
    %145 = vector.load %arg9[%c0_129, %c0_130] : memref<8x1xf32, #tpu.memory_space<vmem>>, vector<8x1xf32>
    %c0_131 = arith.constant 0 : index
    %c0_132 = arith.constant 0 : index
    %146 = vector.load %arg10[%c0_131, %c0_132] : memref<8x1xf32, #tpu.memory_space<vmem>>, vector<8x1xf32>
    %cst_133 = arith.constant 0.000000e+00 : f32
    %147 = vector.broadcast %cst_133 : f32 to vector<8x128xf32>
    %c1_134 = arith.constant 1 : index
    %c0_135 = arith.constant 0 : index
    %c127_136 = arith.constant 127 : index
    %148 = vector.load %arg17[%c1_134, %c0_135, %c127_136] : memref<2x12x384xf32, #tpu.memory_space<vmem>>, vector<1x8x128xf32>
    %149 = vector.shape_cast %148 : vector<1x8x128xf32> to vector<8x128xf32>
    %cst_137 = arith.constant dense<0.000000e+00> : vector<8x128xf32>
    %150 = tpu.matmul %140, %149, %cst_137 {dimension_numbers = #tpu.dot_dimension_numbers<[1], [0], [0], [1], [0, 0, 1, 1], [], []>} : vector<8x8xf32>, vector<8x128xf32>, vector<8x128xf32> -> vector<8x128xf32>
    %151 = arith.addf %147, %150 : vector<8x128xf32>
    %c0_138 = arith.constant 0 : index
    %c0_139 = arith.constant 0 : index
    %c128_140 = arith.constant 128 : index
    %152 = vector.load %arg17[%c0_138, %c0_139, %c128_140] : memref<2x12x384xf32, #tpu.memory_space<vmem>>, vector<1x8x128xf32>
    %153 = vector.shape_cast %152 : vector<1x8x128xf32> to vector<8x128xf32>
    %cst_141 = arith.constant dense<0.000000e+00> : vector<8x128xf32>
    %154 = tpu.matmul %142, %153, %cst_141 {dimension_numbers = #tpu.dot_dimension_numbers<[1], [0], [0], [1], [0, 0, 1, 1], [], []>} : vector<8x8xf32>, vector<8x128xf32>, vector<8x128xf32> -> vector<8x128xf32>
    %155 = arith.addf %151, %154 : vector<8x128xf32>
    %c1_142 = arith.constant 1 : index
    %c0_143 = arith.constant 0 : index
    %c128_144 = arith.constant 128 : index
    %156 = vector.load %arg17[%c1_142, %c0_143, %c128_144] : memref<2x12x384xf32, #tpu.memory_space<vmem>>, vector<1x8x128xf32>
    %157 = vector.shape_cast %156 : vector<1x8x128xf32> to vector<8x128xf32>
    %cst_145 = arith.constant dense<0.000000e+00> : vector<8x128xf32>
    %158 = tpu.matmul %144, %157, %cst_145 {dimension_numbers = #tpu.dot_dimension_numbers<[1], [0], [0], [1], [0, 0, 1, 1], [], []>} : vector<8x8xf32>, vector<8x128xf32>, vector<8x128xf32> -> vector<8x128xf32>
    %159 = arith.addf %155, %158 : vector<8x128xf32>
    %160 = vector.broadcast %145 : vector<8x1xf32> to vector<8x128xf32>
    %161 = arith.mulf %159, %160 : vector<8x128xf32>
    %162 = vector.broadcast %146 : vector<8x1xf32> to vector<8x128xf32>
    %163 = arith.addf %161, %162 : vector<8x128xf32>
    %cst_146 = arith.constant 0.000000e+00 : f32
    %164 = vector.broadcast %cst_146 : f32 to vector<8x128xf32>
    %165 = arith.maximumf %163, %164 : vector<8x128xf32>
    %166 = vector.broadcast %32 : vector<1x128xf32> to vector<8x128xf32>
    %167 = arith.mulf %165, %166 : vector<8x128xf32>
    %c0_147 = arith.constant 0 : index
    %c0_148 = arith.constant 0 : index
    %c128_149 = arith.constant 128 : index
    %168 = vector.load %arg16[%c0_147, %c0_148, %c128_149] : memref<2x12x384xf32, #tpu.memory_space<vmem>>, vector<1x8x128xf32>
    %169 = vector.shape_cast %168 : vector<1x8x128xf32> to vector<8x128xf32>
    %170 = vector.shape_cast %167 : vector<8x128xf32> to vector<1x8x128xf32>
    tpu.vector_store %arg16[%c0_147, %c0_148, %c128_149], %170 {strides = array<i32>} : memref<2x12x384xf32, #tpu.memory_space<vmem>>, vector<1x8x128xf32>,
    %cst_150 = arith.constant 0.000000e+00 : f32
    %171 = vector.broadcast %cst_150 : f32 to vector<8x128xf32>
    %c0_151 = arith.constant 0 : index
    %c0_152 = arith.constant 0 : index
    %c128_153 = arith.constant 128 : index
    %172 = vector.load %arg17[%c0_151, %c0_152, %c128_153] : memref<2x12x384xf32, #tpu.memory_space<vmem>>, vector<1x8x128xf32>
    %173 = vector.shape_cast %172 : vector<1x8x128xf32> to vector<8x128xf32>
    %cst_154 = arith.constant dense<0.000000e+00> : vector<8x128xf32>
    %174 = tpu.matmul %140, %173, %cst_154 {dimension_numbers = #tpu.dot_dimension_numbers<[1], [0], [0], [1], [0, 0, 1, 1], [], []>} : vector<8x8xf32>, vector<8x128xf32>, vector<8x128xf32> -> vector<8x128xf32>
    %175 = arith.addf %171, %174 : vector<8x128xf32>
    %c1_155 = arith.constant 1 : index
    %c0_156 = arith.constant 0 : index
    %c128_157 = arith.constant 128 : index
    %176 = vector.load %arg17[%c1_155, %c0_156, %c128_157] : memref<2x12x384xf32, #tpu.memory_space<vmem>>, vector<1x8x128xf32>
    %177 = vector.shape_cast %176 : vector<1x8x128xf32> to vector<8x128xf32>
    %cst_158 = arith.constant dense<0.000000e+00> : vector<8x128xf32>
    %178 = tpu.matmul %142, %177, %cst_158 {dimension_numbers = #tpu.dot_dimension_numbers<[1], [0], [0], [1], [0, 0, 1, 1], [], []>} : vector<8x8xf32>, vector<8x128xf32>, vector<8x128xf32> -> vector<8x128xf32>
    %179 = arith.addf %175, %178 : vector<8x128xf32>
    %c0_159 = arith.constant 0 : index
    %c0_160 = arith.constant 0 : index
    %c129_161 = arith.constant 129 : index
    %180 = vector.load %arg17[%c0_159, %c0_160, %c129_161] : memref<2x12x384xf32, #tpu.memory_space<vmem>>, vector<1x8x128xf32>
    %181 = vector.shape_cast %180 : vector<1x8x128xf32> to vector<8x128xf32>
    %cst_162 = arith.constant dense<0.000000e+00> : vector<8x128xf32>
    %182 = tpu.matmul %144, %181, %cst_162 {dimension_numbers = #tpu.dot_dimension_numbers<[1], [0], [0], [1], [0, 0, 1, 1], [], []>} : vector<8x8xf32>, vector<8x128xf32>, vector<8x128xf32> -> vector<8x128xf32>
    %183 = arith.addf %179, %182 : vector<8x128xf32>
    %184 = vector.broadcast %145 : vector<8x1xf32> to vector<8x128xf32>
    %185 = arith.mulf %183, %184 : vector<8x128xf32>
    %186 = vector.broadcast %146 : vector<8x1xf32> to vector<8x128xf32>
    %187 = arith.addf %185, %186 : vector<8x128xf32>
    %cst_163 = arith.constant 0.000000e+00 : f32
    %188 = vector.broadcast %cst_163 : f32 to vector<8x128xf32>
    %189 = arith.maximumf %187, %188 : vector<8x128xf32>
    %190 = vector.broadcast %32 : vector<1x128xf32> to vector<8x128xf32>
    %191 = arith.mulf %189, %190 : vector<8x128xf32>
    %c1_164 = arith.constant 1 : index
    %c0_165 = arith.constant 0 : index
    %c128_166 = arith.constant 128 : index
    %192 = vector.load %arg16[%c1_164, %c0_165, %c128_166] : memref<2x12x384xf32, #tpu.memory_space<vmem>>, vector<1x8x128xf32>
    %193 = vector.shape_cast %192 : vector<1x8x128xf32> to vector<8x128xf32>
    %194 = vector.shape_cast %191 : vector<8x128xf32> to vector<1x8x128xf32>
    tpu.vector_store %arg16[%c1_164, %c0_165, %c128_166], %194 {strides = array<i32>} : memref<2x12x384xf32, #tpu.memory_space<vmem>>, vector<1x8x128xf32>,
    %c0_167 = arith.constant 0 : index
    %c0_168 = arith.constant 0 : index
    %c0_169 = arith.constant 0 : index
    %195 = vector.load %arg11[%c0_167, %c0_168, %c0_169] : memref<3x8x8xf32, #tpu.memory_space<vmem>>, vector<1x8x8xf32>
    %196 = vector.shape_cast %195 : vector<1x8x8xf32> to vector<8x8xf32>
    %c1_170 = arith.constant 1 : index
    %c0_171 = arith.constant 0 : index
    %c0_172 = arith.constant 0 : index
    %197 = vector.load %arg11[%c1_170, %c0_171, %c0_172] : memref<3x8x8xf32, #tpu.memory_space<vmem>>, vector<1x8x8xf32>
    %198 = vector.shape_cast %197 : vector<1x8x8xf32> to vector<8x8xf32>
    %c2_173 = arith.constant 2 : index
    %c0_174 = arith.constant 0 : index
    %c0_175 = arith.constant 0 : index
    %199 = vector.load %arg11[%c2_173, %c0_174, %c0_175] : memref<3x8x8xf32, #tpu.memory_space<vmem>>, vector<1x8x8xf32>
    %200 = vector.shape_cast %199 : vector<1x8x8xf32> to vector<8x8xf32>
    %c0_176 = arith.constant 0 : index
    %c0_177 = arith.constant 0 : index
    %201 = vector.load %arg12[%c0_176, %c0_177] : memref<8x1xf32, #tpu.memory_space<vmem>>, vector<8x1xf32>
    %c0_178 = arith.constant 0 : index
    %c0_179 = arith.constant 0 : index
    %202 = vector.load %arg13[%c0_178, %c0_179] : memref<8x1xf32, #tpu.memory_space<vmem>>, vector<8x1xf32>
    %cst_180 = arith.constant 0.000000e+00 : f32
    %203 = vector.broadcast %cst_180 : f32 to vector<8x128xf32>
    %c1_181 = arith.constant 1 : index
    %c0_182 = arith.constant 0 : index
    %c127_183 = arith.constant 127 : index
    %204 = vector.load %arg16[%c1_181, %c0_182, %c127_183] : memref<2x12x384xf32, #tpu.memory_space<vmem>>, vector<1x8x128xf32>
    %205 = vector.shape_cast %204 : vector<1x8x128xf32> to vector<8x128xf32>
    %cst_184 = arith.constant dense<0.000000e+00> : vector<8x128xf32>
    %206 = tpu.matmul %196, %205, %cst_184 {dimension_numbers = #tpu.dot_dimension_numbers<[1], [0], [0], [1], [0, 0, 1, 1], [], []>} : vector<8x8xf32>, vector<8x128xf32>, vector<8x128xf32> -> vector<8x128xf32>
    %207 = arith.addf %203, %206 : vector<8x128xf32>
    %c0_185 = arith.constant 0 : index
    %c0_186 = arith.constant 0 : index
    %c128_187 = arith.constant 128 : index
    %208 = vector.load %arg16[%c0_185, %c0_186, %c128_187] : memref<2x12x384xf32, #tpu.memory_space<vmem>>, vector<1x8x128xf32>
    %209 = vector.shape_cast %208 : vector<1x8x128xf32> to vector<8x128xf32>
    %cst_188 = arith.constant dense<0.000000e+00> : vector<8x128xf32>
    %210 = tpu.matmul %198, %209, %cst_188 {dimension_numbers = #tpu.dot_dimension_numbers<[1], [0], [0], [1], [0, 0, 1, 1], [], []>} : vector<8x8xf32>, vector<8x128xf32>, vector<8x128xf32> -> vector<8x128xf32>
    %211 = arith.addf %207, %210 : vector<8x128xf32>
    %c1_189 = arith.constant 1 : index
    %c0_190 = arith.constant 0 : index
    %c128_191 = arith.constant 128 : index
    %212 = vector.load %arg16[%c1_189, %c0_190, %c128_191] : memref<2x12x384xf32, #tpu.memory_space<vmem>>, vector<1x8x128xf32>
    %213 = vector.shape_cast %212 : vector<1x8x128xf32> to vector<8x128xf32>
    %cst_192 = arith.constant dense<0.000000e+00> : vector<8x128xf32>
    %214 = tpu.matmul %200, %213, %cst_192 {dimension_numbers = #tpu.dot_dimension_numbers<[1], [0], [0], [1], [0, 0, 1, 1], [], []>} : vector<8x8xf32>, vector<8x128xf32>, vector<8x128xf32> -> vector<8x128xf32>
    %215 = arith.addf %211, %214 : vector<8x128xf32>
    %216 = vector.broadcast %201 : vector<8x1xf32> to vector<8x128xf32>
    %217 = arith.mulf %215, %216 : vector<8x128xf32>
    %218 = vector.broadcast %202 : vector<8x1xf32> to vector<8x128xf32>
    %219 = arith.addf %217, %218 : vector<8x128xf32>
    %cst_193 = arith.constant 0.000000e+00 : f32
    %220 = vector.broadcast %cst_193 : f32 to vector<8x128xf32>
    %221 = arith.maximumf %219, %220 : vector<8x128xf32>
    %c0_194 = arith.constant 0 : index
    %c0_195 = arith.constant 0 : index
    %c0_196 = arith.constant 0 : index
    %c0_197 = arith.constant 0 : index
    %222 = vector.load %arg14[%c0_194, %c0_195, %c0_196, %c0_197] : memref<1x2x8x128xf32, #tpu.memory_space<vmem>>, vector<1x1x8x128xf32>
    %223 = vector.shape_cast %222 : vector<1x1x8x128xf32> to vector<8x128xf32>
    %224 = vector.shape_cast %221 : vector<8x128xf32> to vector<1x1x8x128xf32>
    tpu.vector_store %arg14[%c0_194, %c0_195, %c0_196, %c0_197], %224 {strides = array<i32>} : memref<1x2x8x128xf32, #tpu.memory_space<vmem>>, vector<1x1x8x128xf32>,
    %cst_198 = arith.constant 0.000000e+00 : f32
    %225 = vector.broadcast %cst_198 : f32 to vector<8x128xf32>
    %c0_199 = arith.constant 0 : index
    %c0_200 = arith.constant 0 : index
    %c128_201 = arith.constant 128 : index
    %226 = vector.load %arg16[%c0_199, %c0_200, %c128_201] : memref<2x12x384xf32, #tpu.memory_space<vmem>>, vector<1x8x128xf32>
    %227 = vector.shape_cast %226 : vector<1x8x128xf32> to vector<8x128xf32>
    %cst_202 = arith.constant dense<0.000000e+00> : vector<8x128xf32>
    %228 = tpu.matmul %196, %227, %cst_202 {dimension_numbers = #tpu.dot_dimension_numbers<[1], [0], [0], [1], [0, 0, 1, 1], [], []>} : vector<8x8xf32>, vector<8x128xf32>, vector<8x128xf32> -> vector<8x128xf32>
    %229 = arith.addf %225, %228 : vector<8x128xf32>
    %c1_203 = arith.constant 1 : index
    %c0_204 = arith.constant 0 : index
    %c128_205 = arith.constant 128 : index
    %230 = vector.load %arg16[%c1_203, %c0_204, %c128_205] : memref<2x12x384xf32, #tpu.memory_space<vmem>>, vector<1x8x128xf32>
    %231 = vector.shape_cast %230 : vector<1x8x128xf32> to vector<8x128xf32>
    %cst_206 = arith.constant dense<0.000000e+00> : vector<8x128xf32>
    %232 = tpu.matmul %198, %231, %cst_206 {dimension_numbers = #tpu.dot_dimension_numbers<[1], [0], [0], [1], [0, 0, 1, 1], [], []>} : vector<8x8xf32>, vector<8x128xf32>, vector<8x128xf32> -> vector<8x128xf32>
    %233 = arith.addf %229, %232 : vector<8x128xf32>
    %c0_207 = arith.constant 0 : index
    %c0_208 = arith.constant 0 : index
    %c129_209 = arith.constant 129 : index
    %234 = vector.load %arg16[%c0_207, %c0_208, %c129_209] : memref<2x12x384xf32, #tpu.memory_space<vmem>>, vector<1x8x128xf32>
    %235 = vector.shape_cast %234 : vector<1x8x128xf32> to vector<8x128xf32>
    %cst_210 = arith.constant dense<0.000000e+00> : vector<8x128xf32>
    %236 = tpu.matmul %200, %235, %cst_210 {dimension_numbers = #tpu.dot_dimension_numbers<[1], [0], [0], [1], [0, 0, 1, 1], [], []>} : vector<8x8xf32>, vector<8x128xf32>, vector<8x128xf32> -> vector<8x128xf32>
    %237 = arith.addf %233, %236 : vector<8x128xf32>
    %238 = vector.broadcast %201 : vector<8x1xf32> to vector<8x128xf32>
    %239 = arith.mulf %237, %238 : vector<8x128xf32>
    %240 = vector.broadcast %202 : vector<8x1xf32> to vector<8x128xf32>
    %241 = arith.addf %239, %240 : vector<8x128xf32>
    %cst_211 = arith.constant 0.000000e+00 : f32
    %242 = vector.broadcast %cst_211 : f32 to vector<8x128xf32>
    %243 = arith.maximumf %241, %242 : vector<8x128xf32>
    %c0_212 = arith.constant 0 : index
    %c1_213 = arith.constant 1 : index
    %c0_214 = arith.constant 0 : index
    %c0_215 = arith.constant 0 : index
    %244 = vector.load %arg14[%c0_212, %c1_213, %c0_214, %c0_215] : memref<1x2x8x128xf32, #tpu.memory_space<vmem>>, vector<1x1x8x128xf32>
    %245 = vector.shape_cast %244 : vector<1x1x8x128xf32> to vector<8x128xf32>
    %246 = vector.shape_cast %243 : vector<8x128xf32> to vector<1x1x8x128xf32>
    tpu.vector_store %arg14[%c0_212, %c1_213, %c0_214, %c0_215], %246 {strides = array<i32>} : memref<1x2x8x128xf32, #tpu.memory_space<vmem>>, vector<1x1x8x128xf32>,
    return
  }
  func.func @transform_0(%arg0: i32) -> (i32, i32, i32) {
    %c0_i32 = arith.constant 0 : i32
    %c0_i32_0 = arith.constant 0 : i32
    %c0_i32_1 = arith.constant 0 : i32
    return %arg0, %c0_i32, %c0_i32_0 : i32, i32, i32
  }
  func.func @transform_1(%arg0: i32) -> (i32, i32, i32, i32) {
    %c0_i32 = arith.constant 0 : i32
    %c0_i32_0 = arith.constant 0 : i32
    %c0_i32_1 = arith.constant 0 : i32
    %c0_i32_2 = arith.constant 0 : i32
    return %arg0, %c0_i32, %c0_i32_0, %c0_i32_1 : i32, i32, i32, i32
  }
  func.func @transform_2(%arg0: i32) -> (i32, i32, i32) {
    %c0_i32 = arith.constant 0 : i32
    %c0_i32_0 = arith.constant 0 : i32
    %c0_i32_1 = arith.constant 0 : i32
    %c0_i32_2 = arith.constant 0 : i32
    return %c0_i32, %c0_i32_0, %c0_i32_1 : i32, i32, i32
  }
  func.func @transform_3(%arg0: i32) -> (i32, i32) {
    %c0_i32 = arith.constant 0 : i32
    %c0_i32_0 = arith.constant 0 : i32
    %c0_i32_1 = arith.constant 0 : i32
    return %c0_i32, %c0_i32_0 : i32, i32
  }
  func.func @transform_4(%arg0: i32) -> (i32, i32, i32) {
    %c0_i32 = arith.constant 0 : i32
    %c0_i32_0 = arith.constant 0 : i32
    %c0_i32_1 = arith.constant 0 : i32
    %c0_i32_2 = arith.constant 0 : i32
    return %c0_i32, %c0_i32_0, %c0_i32_1 : i32, i32, i32
  }
  func.func @transform_5(%arg0: i32) -> (i32, i32) {
    %c0_i32 = arith.constant 0 : i32
    %c0_i32_0 = arith.constant 0 : i32
    %c0_i32_1 = arith.constant 0 : i32
    return %c0_i32, %c0_i32_0 : i32, i32
  }
  func.func @transform_6(%arg0: i32) -> (i32, i32) {
    %c0_i32 = arith.constant 0 : i32
    %c0_i32_0 = arith.constant 0 : i32
    %c0_i32_1 = arith.constant 0 : i32
    return %c0_i32, %c0_i32_0 : i32, i32
  }
  func.func @transform_7(%arg0: i32) -> (i32, i32, i32) {
    %c0_i32 = arith.constant 0 : i32
    %c0_i32_0 = arith.constant 0 : i32
    %c0_i32_1 = arith.constant 0 : i32
    %c0_i32_2 = arith.constant 0 : i32
    return %c0_i32, %c0_i32_0, %c0_i32_1 : i32, i32, i32
  }
  func.func @transform_8(%arg0: i32) -> (i32, i32) {
    %c0_i32 = arith.constant 0 : i32
    %c0_i32_0 = arith.constant 0 : i32
    %c0_i32_1 = arith.constant 0 : i32
    return %c0_i32, %c0_i32_0 : i32, i32
  }
  func.func @transform_9(%arg0: i32) -> (i32, i32) {
    %c0_i32 = arith.constant 0 : i32
    %c0_i32_0 = arith.constant 0 : i32
    %c0_i32_1 = arith.constant 0 : i32
    return %c0_i32, %c0_i32_0 : i32, i32
  }
  func.func @transform_10(%arg0: i32) -> (i32, i32, i32) {
    %c0_i32 = arith.constant 0 : i32
    %c0_i32_0 = arith.constant 0 : i32
    %c0_i32_1 = arith.constant 0 : i32
    %c0_i32_2 = arith.constant 0 : i32
    return %c0_i32, %c0_i32_0, %c0_i32_1 : i32, i32, i32
  }
  func.func @transform_11(%arg0: i32) -> (i32, i32) {
    %c0_i32 = arith.constant 0 : i32
    %c0_i32_0 = arith.constant 0 : i32
    %c0_i32_1 = arith.constant 0 : i32
    return %c0_i32, %c0_i32_0 : i32, i32
  }
  func.func @transform_12(%arg0: i32) -> (i32, i32) {
    %c0_i32 = arith.constant 0 : i32
    %c0_i32_0 = arith.constant 0 : i32
    %c0_i32_1 = arith.constant 0 : i32
    return %c0_i32, %c0_i32_0 : i32, i32
  }
  func.func @transform_13(%arg0: i32) -> (i32, i32, i32, i32) {
    %c0_i32 = arith.constant 0 : i32
    %c0_i32_0 = arith.constant 0 : i32
    %c0_i32_1 = arith.constant 0 : i32
    %c0_i32_2 = arith.constant 0 : i32
    return %arg0, %c0_i32, %c0_i32_0, %c0_i32_1 : i32, i32, i32, i32
  }
}

</mosaic_0001>

<llo_original>
// kernel: tpu_custom_call.1
$region0: #{tpu_custom_call.1}
  #allocation0 [shape = 'u32[]', space=smem, size = 0x4, offset = 0x4, fixed_abs, tag = 'smem constant byte address 0x4 - core index']
  #allocation1 [shape = 'u32[144,128]{1,0:T(1,128)}', space=vmem, size = 0x12000, scoped, tag = 'internal scratch']
  #allocation2 [shape = 'f32[4,384]{1,0:T(4,128)}', space=vmem, size = 0x1800, scoped, tag = 'scratch operand']
  #allocation3 [shape = 'f32[2,12,384]{2,1,0:T(8,128)}', space=vmem, size = 0xc000, scoped, tag = 'scratch operand']
  #allocation4 [shape = 'f32[2,12,384]{2,1,0:T(8,128)}', space=vmem, size = 0xc000, scoped, tag = 'scratch operand']
  %s0 = inlined_call_operand.hbm [shape: f32[2,4,128], index: 0, kind: input, shape index: {}]
  %s1 = inlined_call_operand.vmem [shape: f32[2,2,8,128], index: 1, kind: input, shape index: {}]
  %s2 = inlined_call_operand.hbm [shape: f32[4,4,4], index: 2, kind: input, shape index: {}]
  %s3 = inlined_call_operand.vmem [shape: f32[4,1], index: 3, kind: input, shape index: {}]
  %s4 = inlined_call_operand.vmem [shape: f32[3,8,12], index: 4, kind: input, shape index: {}]
  %s5 = inlined_call_operand.vmem [shape: f32[8,1], index: 5, kind: input, shape index: {}]
  %s6 = inlined_call_operand.vmem [shape: f32[8,1], index: 6, kind: input, shape index: {}]
  %s7 = inlined_call_operand.hbm [shape: f32[3,8,8], index: 7, kind: input, shape index: {}]
  %s8 = inlined_call_operand.vmem [shape: f32[8,1], index: 8, kind: input, shape index: {}]
  %s9 = inlined_call_operand.vmem [shape: f32[8,1], index: 9, kind: input, shape index: {}]
  %s10 = inlined_call_operand.hbm [shape: f32[3,8,8], index: 10, kind: input, shape index: {}]
  %s11 = inlined_call_operand.vmem [shape: f32[8,1], index: 11, kind: input, shape index: {}]
  %s12 = inlined_call_operand.vmem [shape: f32[8,1], index: 12, kind: input, shape index: {}]
  %s13 = inlined_call_operand.hbm [shape: f32[2,2,8,128], index: 13, kind: output, shape index: {}]
  %s14 = sld [smem:[#allocation0]]
  $region101: #{tpu_custom_call.1} parent=0
    _
  %s16 = ssub.s32 1, %s14
  %s17 = scalar_select 0, %s16, %s14
  $region1: #{tpu_custom_call.1} parent=0
    #allocation5 [shape = 'u8[4096]{0}', space=vmem, size = 0x1000, scoped, tag = 'input window, operand 0']
    #allocation6 [shape = 's32[2]{0}', space=sflag, size = 0x8, scoped, tag = 'scoped memory for tpu_custom_call.1']
    #allocation7 [shape = 's32[2]{0}', space=sflag, size = 0x8, scoped, tag = 'scoped memory for tpu_custom_call.1']
    #allocation8 [shape = 'u8[8192]{0}', space=vmem, size = 0x2000, scoped, tag = 'input window, operand 2, single buffered']
    #allocation9 [shape = 's32[1]{0}', space=sflag, size = 0x4, scoped, tag = 'scoped memory for tpu_custom_call.1']
    #allocation10 [shape = 'u8[12288]{0}', space=vmem, size = 0x3000, scoped, tag = 'input window, operand 7, single buffered']
    #allocation11 [shape = 'u8[12288]{0}', space=vmem, size = 0x3000, scoped, tag = 'input window, operand 10, single buffered']
    #allocation12 [shape = 's32[1]{0}', space=sflag, size = 0x4, scoped, tag = 'scoped memory for tpu_custom_call.1']
    #allocation13 [shape = 'u8[16384]{0}', space=vmem, size = 0x4000, scoped, tag = 'output window, operand 0']
    %18 = vsyncpa [#allocation6], 0
    %s19 = scalar_lea.sflag [#allocation6], 1
    %20 = vsyncpa %s19, 0
    %21 = vsyncpa [#allocation9], 0
    %22 = vsyncpa [#allocation12], 0
    %23 = vsyncpa [#allocation7], 0
    %s24 = scalar_lea.sflag [#allocation7], 1
    %25 = vsyncpa %s24, 0
    loop: start=0, step=1, limit=4
    $region2: #{tpu_custom_call.1} parent=1 // loop_pre_header
      _
    $region3: #{tpu_custom_call.1} parent=1 // loop_header
      %s27 = sphi 0, %s31
      %p28 = scmp.ge.s32.totalorder %s27, 4
      %s37 = sphi 0, %s39
      %s40 = sphi 0, %s37
      %s41 = sphi 0, %s40
      %s57 = sphi 0, %s41
      %s63 = sphi 0, %s65
      %s66 = sphi 0, %s63
      %s67 = sphi 0, %s66
      %s83 = sphi 0, %s67
      %s87 = sphi 0, %s87
      %s89 = sphi 0, %s87
      %s90 = sphi 0, %s89
      %s104 = sphi 0, %s90
      %s108 = sphi 0, %s108
      %s110 = sphi 0, %s108
      %s111 = sphi 0, %s110
      %s125 = sphi 0, %s111
      %s129 = sphi 0, %s129
      %s131 = sphi 0, %s129
      %s132 = sphi 0, %s131
      %s146 = sphi 0, %s132
      %s150 = sphi 0, %s150
      %s152 = sphi 0, %s150
      %s153 = sphi 0, %s152
      %s167 = sphi 0, %s153
      %s171 = sphi 0, %s171
      %s173 = sphi 0, %s171
      %s174 = sphi 0, %s173
      %s188 = sphi 0, %s174
      %s192 = sphi 0, %s192
      %s194 = sphi 0, %s192
      %s195 = sphi 0, %s194
      %s209 = sphi 0, %s195
      %s213 = sphi 0, %s213
      %s215 = sphi 0, %s213
      %s216 = sphi 0, %s215
      %s230 = sphi 0, %s216
      %s234 = sphi 0, %s234
      %s236 = sphi 0, %s234
      %s237 = sphi 0, %s236
      %s251 = sphi 0, %s237
      %s255 = sphi 0, %s255
      %s257 = sphi 0, %s255
      %s258 = sphi 0, %s257
      %s272 = sphi 0, %s258
      %s276 = sphi 0, %s276
      %s278 = sphi 0, %s276
      %s279 = sphi 0, %s278
      %s293 = sphi 0, %s279
      %s297 = sphi 0, %s297
      %s299 = sphi 0, %s297
      %s300 = sphi 0, %s299
      %s314 = sphi 0, %s300
      %s320 = sphi 0, %s322
      %s323 = sphi 0, %s320
      %s324 = sphi 0, %s323
      %s340 = sphi 0, %s324
    $region4: #{tpu_custom_call.1} parent=1 // loop_header_branch
      %30 = sbr.rel (%p28) target = $region8
    $region5: #{tpu_custom_call.1} parent=1 // loop_body
      %s32 = ssub.s32 %s27, 1
      %s33 = ssub.s32 %s27, 2
      %s34 = sadd.s32 %s27, 1
      %s35 = ssub.s32 %s27, %s34
      %p36 = scmp.eq.s32.totalorder %s35, 0
      %s38 = sadd.s32 %s37, 1
      %s39 = scalar_select %p36, %s37, %s38
      %p42 = pneg %p36
      %p43 = scmp.eq.s32.totalorder %s27, 1
      %p44 = por %p42, %p43
      %p45 = scmp.ne.s32.totalorder %s37, %s40
      %p46 = scmp.eq.s32.totalorder %s27, 0
      %p47 = por %p45, %p46
      %p48 = scmp.ne.s32.totalorder %s37, %s40
      %p49 = scmp.eq.s32.totalorder %s32, 1
      %p50 = por %p48, %p49
      %p51 = scmp.ne.s32.totalorder %s40, %s41
      %p52 = scmp.eq.s32.totalorder %s32, 0
      %p53 = por %p51, %p52
      %p54 = scmp.ne.s32.totalorder %s40, %s41
      %p55 = scmp.eq.s32.totalorder %s33, 1
      %p56 = por %p54, %p55
      %p58 = scmp.ne.s32.totalorder %s41, %s57
      %p59 = scmp.eq.s32.totalorder %s33, 0
      %p60 = por %p58, %p59
      %s61 = ssub.s32 %s27, %s34
      %p62 = scmp.eq.s32.totalorder %s61, 0
      %s64 = sadd.s32 %s63, 1
      %s65 = scalar_select %p62, %s63, %s64
      %p68 = pneg %p62
      %p69 = scmp.eq.s32.totalorder %s27, 1
      %p70 = por %p68, %p69
      %p71 = scmp.ne.s32.totalorder %s63, %s66
      %p72 = scmp.eq.s32.totalorder %s27, 0
      %p73 = por %p71, %p72
      %p74 = scmp.ne.s32.totalorder %s63, %s66
      %p75 = scmp.eq.s32.totalorder %s32, 1
      %p76 = por %p74, %p75
      %p77 = scmp.ne.s32.totalorder %s66, %s67
      %p78 = scmp.eq.s32.totalorder %s32, 0
      %p79 = por %p77, %p78
      %p80 = scmp.ne.s32.totalorder %s66, %s67
      %p81 = scmp.eq.s32.totalorder %s33, 1
      %p82 = por %p80, %p81
      %p84 = scmp.ne.s32.totalorder %s67, %s83
      %p85 = scmp.eq.s32.totalorder %s33, 0
      %p86 = por %p84, %p85
      %s88 = sadd.s32 %s87, 1
      %p91 = scmp.eq.s32.totalorder %s27, 1
      %p92 = scmp.ne.s32.totalorder %s87, %s89
      %p93 = scmp.eq.s32.totalorder %s27, 0
      %p94 = por %p92, %p93
      %p95 = scmp.ne.s32.totalorder %s87, %s89
      %p96 = scmp.eq.s32.totalorder %s32, 1
      %p97 = por %p95, %p96
      %p98 = scmp.ne.s32.totalorder %s89, %s90
      %p99 = scmp.eq.s32.totalorder %s32, 0
      %p100 = por %p98, %p99
      %p101 = scmp.ne.s32.totalorder %s89, %s90
      %p102 = scmp.eq.s32.totalorder %s33, 1
      %p103 = por %p101, %p102
      %p105 = scmp.ne.s32.totalorder %s90, %s104
      %p106 = scmp.eq.s32.totalorder %s33, 0
      %p107 = por %p105, %p106
      %s109 = sadd.s32 %s108, 1
      %p112 = scmp.eq.s32.totalorder %s27, 1
      %p113 = scmp.ne.s32.totalorder %s108, %s110
      %p114 = scmp.eq.s32.totalorder %s27, 0
      %p115 = por %p113, %p114
      %p116 = scmp.ne.s32.totalorder %s108, %s110
      %p117 = scmp.eq.s32.totalorder %s32, 1
      %p118 = por %p116, %p117
      %p119 = scmp.ne.s32.totalorder %s110, %s111
      %p120 = scmp.eq.s32.totalorder %s32, 0
      %p121 = por %p119, %p120
      %p122 = scmp.ne.s32.totalorder %s110, %s111
      %p123 = scmp.eq.s32.totalorder %s33, 1
      %p124 = por %p122, %p123
      %p126 = scmp.ne.s32.totalorder %s111, %s125
      %p127 = scmp.eq.s32.totalorder %s33, 0
      %p128 = por %p126, %p127
      %s130 = sadd.s32 %s129, 1
      %p133 = scmp.eq.s32.totalorder %s27, 1
      %p134 = scmp.ne.s32.totalorder %s129, %s131
      %p135 = scmp.eq.s32.totalorder %s27, 0
      %p136 = por %p134, %p135
      %p137 = scmp.ne.s32.totalorder %s129, %s131
      %p138 = scmp.eq.s32.totalorder %s32, 1
      %p139 = por %p137, %p138
      %p140 = scmp.ne.s32.totalorder %s131, %s132
      %p141 = scmp.eq.s32.totalorder %s32, 0
      %p142 = por %p140, %p141
      %p143 = scmp.ne.s32.totalorder %s131, %s132
      %p144 = scmp.eq.s32.totalorder %s33, 1
      %p145 = por %p143, %p144
      %p147 = scmp.ne.s32.totalorder %s132, %s146
      %p148 = scmp.eq.s32.totalorder %s33, 0
      %p149 = por %p147, %p148
      %s151 = sadd.s32 %s150, 1
      %p154 = scmp.eq.s32.totalorder %s27, 1
      %p155 = scmp.ne.s32.totalorder %s150, %s152
      %p156 = scmp.eq.s32.totalorder %s27, 0
      %p157 = por %p155, %p156
      %p158 = scmp.ne.s32.totalorder %s150, %s152
      %p159 = scmp.eq.s32.totalorder %s32, 1
      %p160 = por %p158, %p159
      %p161 = scmp.ne.s32.totalorder %s152, %s153
      %p162 = scmp.eq.s32.totalorder %s32, 0
      %p163 = por %p161, %p162
      %p164 = scmp.ne.s32.totalorder %s152, %s153
      %p165 = scmp.eq.s32.totalorder %s33, 1
      %p166 = por %p164, %p165
      %p168 = scmp.ne.s32.totalorder %s153, %s167
      %p169 = scmp.eq.s32.totalorder %s33, 0
      %p170 = por %p168, %p169
      %s172 = sadd.s32 %s171, 1
      %p175 = scmp.eq.s32.totalorder %s27, 1
      %p176 = scmp.ne.s32.totalorder %s171, %s173
      %p177 = scmp.eq.s32.totalorder %s27, 0
      %p178 = por %p176, %p177
      %p179 = scmp.ne.s32.totalorder %s171, %s173
      %p180 = scmp.eq.s32.totalorder %s32, 1
      %p181 = por %p179, %p180
      %p182 = scmp.ne.s32.totalorder %s173, %s174
      %p183 = scmp.eq.s32.totalorder %s32, 0
      %p184 = por %p182, %p183
      %p185 = scmp.ne.s32.totalorder %s173, %s174
      %p186 = scmp.eq.s32.totalorder %s33, 1
      %p187 = por %p185, %p186
      %p189 = scmp.ne.s32.totalorder %s174, %s188
      %p190 = scmp.eq.s32.totalorder %s33, 0
      %p191 = por %p189, %p190
      %s193 = sadd.s32 %s192, 1
      %p196 = scmp.eq.s32.totalorder %s27, 1
      %p197 = scmp.ne.s32.totalorder %s192, %s194
      %p198 = scmp.eq.s32.totalorder %s27, 0
      %p199 = por %p197, %p198
      %p200 = scmp.ne.s32.totalorder %s192, %s194
      %p201 = scmp.eq.s32.totalorder %s32, 1
      %p202 = por %p200, %p201
      %p203 = scmp.ne.s32.totalorder %s194, %s195
      %p204 = scmp.eq.s32.totalorder %s32, 0
      %p205 = por %p203, %p204
      %p206 = scmp.ne.s32.totalorder %s194, %s195
      %p207 = scmp.eq.s32.totalorder %s33, 1
      %p208 = por %p206, %p207
      %p210 = scmp.ne.s32.totalorder %s195, %s209
      %p211 = scmp.eq.s32.totalorder %s33, 0
      %p212 = por %p210, %p211
      %s214 = sadd.s32 %s213, 1
      %p217 = scmp.eq.s32.totalorder %s27, 1
      %p218 = scmp.ne.s32.totalorder %s213, %s215
      %p219 = scmp.eq.s32.totalorder %s27, 0
      %p220 = por %p218, %p219
      %p221 = scmp.ne.s32.totalorder %s213, %s215
      %p222 = scmp.eq.s32.totalorder %s32, 1
      %p223 = por %p221, %p222
      %p224 = scmp.ne.s32.totalorder %s215, %s216
      %p225 = scmp.eq.s32.totalorder %s32, 0
      %p226 = por %p224, %p225
      %p227 = scmp.ne.s32.totalorder %s215, %s216
      %p228 = scmp.eq.s32.totalorder %s33, 1
      %p229 = por %p227, %p228
      %p231 = scmp.ne.s32.totalorder %s216, %s230
      %p232 = scmp.eq.s32.totalorder %s33, 0
      %p233 = por %p231, %p232
      %s235 = sadd.s32 %s234, 1
      %p238 = scmp.eq.s32.totalorder %s27, 1
      %p239 = scmp.ne.s32.totalorder %s234, %s236
      %p240 = scmp.eq.s32.totalorder %s27, 0
      %p241 = por %p239, %p240
      %p242 = scmp.ne.s32.totalorder %s234, %s236
      %p243 = scmp.eq.s32.totalorder %s32, 1
      %p244 = por %p242, %p243
      %p245 = scmp.ne.s32.totalorder %s236, %s237
      %p246 = scmp.eq.s32.totalorder %s32, 0
      %p247 = por %p245, %p246
      %p248 = scmp.ne.s32.totalorder %s236, %s237
      %p249 = scmp.eq.s32.totalorder %s33, 1
      %p250 = por %p248, %p249
      %p252 = scmp.ne.s32.totalorder %s237, %s251
      %p253 = scmp.eq.s32.totalorder %s33, 0
      %p254 = por %p252, %p253
      %s256 = sadd.s32 %s255, 1
      %p259 = scmp.eq.s32.totalorder %s27, 1
      %p260 = scmp.ne.s32.totalorder %s255, %s257
      %p261 = scmp.eq.s32.totalorder %s27, 0
      %p262 = por %p260, %p261
      %p263 = scmp.ne.s32.totalorder %s255, %s257
      %p264 = scmp.eq.s32.totalorder %s32, 1
      %p265 = por %p263, %p264
      %p266 = scmp.ne.s32.totalorder %s257, %s258
      %p267 = scmp.eq.s32.totalorder %s32, 0
      %p268 = por %p266, %p267
      %p269 = scmp.ne.s32.totalorder %s257, %s258
      %p270 = scmp.eq.s32.totalorder %s33, 1
      %p271 = por %p269, %p270
      %p273 = scmp.ne.s32.totalorder %s258, %s272
      %p274 = scmp.eq.s32.totalorder %s33, 0
      %p275 = por %p273, %p274
      %s277 = sadd.s32 %s276, 1
      %p280 = scmp.eq.s32.totalorder %s27, 1
      %p281 = scmp.ne.s32.totalorder %s276, %s278
      %p282 = scmp.eq.s32.totalorder %s27, 0
      %p283 = por %p281, %p282
      %p284 = scmp.ne.s32.totalorder %s276, %s278
      %p285 = scmp.eq.s32.totalorder %s32, 1
      %p286 = por %p284, %p285
      %p287 = scmp.ne.s32.totalorder %s278, %s279
      %p288 = scmp.eq.s32.totalorder %s32, 0
      %p289 = por %p287, %p288
      %p290 = scmp.ne.s32.totalorder %s278, %s279
      %p291 = scmp.eq.s32.totalorder %s33, 1
      %p292 = por %p290, %p291
      %p294 = scmp.ne.s32.totalorder %s279, %s293
      %p295 = scmp.eq.s32.totalorder %s33, 0
      %p296 = por %p294, %p295
      %s298 = sadd.s32 %s297, 1
      %p301 = scmp.eq.s32.totalorder %s27, 1
      %p302 = scmp.ne.s32.totalorder %s297, %s299
      %p303 = scmp.eq.s32.totalorder %s27, 0
      %p304 = por %p302, %p303
      %p305 = scmp.ne.s32.totalorder %s297, %s299
      %p306 = scmp.eq.s32.totalorder %s32, 1
      %p307 = por %p305, %p306
      %p308 = scmp.ne.s32.totalorder %s299, %s300
      %p309 = scmp.eq.s32.totalorder %s32, 0
      %p310 = por %p308, %p309
      %p311 = scmp.ne.s32.totalorder %s299, %s300
      %p312 = scmp.eq.s32.totalorder %s33, 1
      %p313 = por %p311, %p312
      %p315 = scmp.ne.s32.totalorder %s300, %s314
      %p316 = scmp.eq.s32.totalorder %s33, 0
      %p317 = por %p315, %p316
      %s318 = ssub.s32 %s27, %s34
      %p319 = scmp.eq.s32.totalorder %s318, 0
      %s321 = sadd.s32 %s320, 1
      %s322 = scalar_select %p319, %s320, %s321
      %p325 = pneg %p319
      %p326 = scmp.eq.s32.totalorder %s27, 1
      %p327 = por %p325, %p326
      %p328 = scmp.ne.s32.totalorder %s320, %s323
      %p329 = scmp.eq.s32.totalorder %s27, 0
      %p330 = por %p328, %p329
      %p331 = scmp.ne.s32.totalorder %s320, %s323
      %p332 = scmp.eq.s32.totalorder %s32, 1
      %p333 = por %p331, %p332
      %p334 = scmp.ne.s32.totalorder %s323, %s324
      %p335 = scmp.eq.s32.totalorder %s32, 0
      %p336 = por %p334, %p335
      %p337 = scmp.ne.s32.totalorder %s323, %s324
      %p338 = scmp.eq.s32.totalorder %s33, 1
      %p339 = por %p337, %p338
      %p341 = scmp.ne.s32.totalorder %s324, %s340
      %p342 = scmp.eq.s32.totalorder %s33, 0
      %p343 = por %p341, %p342
      %p344 = scmp.le.s32.totalorder 1, %s27
      %p345 = scmp.lt.s32.totalorder %s27, 3
      %p346 = pnand %p344, %p345
      %p347 = pneg %p346
      // Predicated region
      $region9: #{tpu_custom_call.1} parent=5 // pred_check
        _
      $region10: #{tpu_custom_call.1} parent=5 // pred_check_branch
        %349 = sbr.rel (%p346) target = $region12
      $region11: #{tpu_custom_call.1} parent=5 // pred_region
        %s350 = ssub.s32 %s27, 1
        // Predicated region
        $region13: #{tpu_custom_call.1} parent=11 // pred_check
          %p351 = pneg %p100
        $region14: #{tpu_custom_call.1} parent=11 // pred_check_branch
          %353 = sbr.rel (%p351) target = $region16
        $region15: #{tpu_custom_call.1} parent=11 // pred_region
          %s355 = ssub.s32 256, 256
          %356 = vsyncadd [#allocation9], %s355
          %s357 = sshll.u32 [#allocation8], 4
          %s358 = int_to_ptr.vmem [resolvable:$true] %s357
          %363 = dma.hbm_to_vmem [thread:$0]  %s2, 256, %s358, [#allocation9], 64, 64, 4
        $region16: #{tpu_custom_call.1} parent=11 // pred_fallthru
          _
        // Predicated region
        $region17: #{tpu_custom_call.1} parent=11 // pred_check
          %p364 = pneg %p121
        $region18: #{tpu_custom_call.1} parent=11 // pred_check_branch
          %366 = sbr.rel (%p364) target = $region20
        $region19: #{tpu_custom_call.1} parent=11 // pred_region
          _
        $region20: #{tpu_custom_call.1} parent=11 // pred_fallthru
          _
        // Predicated region
        $region21: #{tpu_custom_call.1} parent=11 // pred_check
          %p367 = pneg %p142
        $region22: #{tpu_custom_call.1} parent=11 // pred_check_branch
          %369 = sbr.rel (%p367) target = $region24
        $region23: #{tpu_custom_call.1} parent=11 // pred_region
          _
        $region24: #{tpu_custom_call.1} parent=11 // pred_fallthru
          _
        // Predicated region
        $region25: #{tpu_custom_call.1} parent=11 // pred_check
          %p370 = pneg %p163
        $region26: #{tpu_custom_call.1} parent=11 // pred_check_branch
          %372 = sbr.rel (%p370) target = $region28
        $region27: #{tpu_custom_call.1} parent=11 // pred_region
          _
        $region28: #{tpu_custom_call.1} parent=11 // pred_fallthru
          _
        // Predicated region
        $region29: #{tpu_custom_call.1} parent=11 // pred_check
          %p373 = pneg %p184
        $region30: #{tpu_custom_call.1} parent=11 // pred_check_branch
          %375 = sbr.rel (%p373) target = $region32
        $region31: #{tpu_custom_call.1} parent=11 // pred_region
          _
        $region32: #{tpu_custom_call.1} parent=11 // pred_fallthru
          _
        // Predicated region
        $region33: #{tpu_custom_call.1} parent=11 // pred_check
          %p376 = pneg %p205
        $region34: #{tpu_custom_call.1} parent=11 // pred_check_branch
          %378 = sbr.rel (%p376) target = $region36
        $region35: #{tpu_custom_call.1} parent=11 // pred_region
          %s380 = ssub.s32 384, 384
          %381 = vsyncadd [#allocation9], %s380
          %s382 = sshll.u32 [#allocation10], 4
          %s383 = int_to_ptr.vmem [resolvable:$true] %s382
          %388 = dma.hbm_to_vmem [thread:$0]  %s7, 384, %s383, [#allocation9], 128, 128, 8
        $region36: #{tpu_custom_call.1} parent=11 // pred_fallthru
          _
        // Predicated region
        $region37: #{tpu_custom_call.1} parent=11 // pred_check
          %p389 = pneg %p226
        $region38: #{tpu_custom_call.1} parent=11 // pred_check_branch
          %391 = sbr.rel (%p389) target = $region40
        $region39: #{tpu_custom_call.1} parent=11 // pred_region
          _
        $region40: #{tpu_custom_call.1} parent=11 // pred_fallthru
          _
        // Predicated region
        $region41: #{tpu_custom_call.1} parent=11 // pred_check
          %p392 = pneg %p247
        $region42: #{tpu_custom_call.1} parent=11 // pred_check_branch
          %394 = sbr.rel (%p392) target = $region44
        $region43: #{tpu_custom_call.1} parent=11 // pred_region
          _
        $region44: #{tpu_custom_call.1} parent=11 // pred_fallthru
          _
        // Predicated region
        $region45: #{tpu_custom_call.1} parent=11 // pred_check
          %p395 = pneg %p268
        $region46: #{tpu_custom_call.1} parent=11 // pred_check_branch
          %397 = sbr.rel (%p395) target = $region48
        $region47: #{tpu_custom_call.1} parent=11 // pred_region
          %s399 = ssub.s32 384, 384
          %400 = vsyncadd [#allocation12], %s399
          %s401 = sshll.u32 [#allocation11], 4
          %s402 = int_to_ptr.vmem [resolvable:$true] %s401
          %407 = dma.hbm_to_vmem [thread:$0]  %s10, 384, %s402, [#allocation12], 128, 128, 8
        $region48: #{tpu_custom_call.1} parent=11 // pred_fallthru
          _
        // Predicated region
        $region49: #{tpu_custom_call.1} parent=11 // pred_check
          %p408 = pneg %p289
        $region50: #{tpu_custom_call.1} parent=11 // pred_check_branch
          %410 = sbr.rel (%p408) target = $region52
        $region51: #{tpu_custom_call.1} parent=11 // pred_region
          _
        $region52: #{tpu_custom_call.1} parent=11 // pred_fallthru
          _
        // Predicated region
        $region53: #{tpu_custom_call.1} parent=11 // pred_check
          %p411 = pneg %p310
        $region54: #{tpu_custom_call.1} parent=11 // pred_check_branch
          %413 = sbr.rel (%p411) target = $region56
        $region55: #{tpu_custom_call.1} parent=11 // pred_region
          _
        $region56: #{tpu_custom_call.1} parent=11 // pred_fallthru
          _
      $region12: #{tpu_custom_call.1} parent=5 // pred_fallthru
        _
      %p414 = scmp.lt.s32.totalorder %s27, 2
      // Predicated region
      $region57: #{tpu_custom_call.1} parent=5 // pred_check
        %p415 = pneg %p414
      $region58: #{tpu_custom_call.1} parent=5 // pred_check_branch
        %417 = sbr.rel (%p415) target = $region60
      $region59: #{tpu_custom_call.1} parent=5 // pred_region
        // Predicated region
        $region61: #{tpu_custom_call.1} parent=59 // pred_check
          %p418 = pneg %p47
        $region62: #{tpu_custom_call.1} parent=59 // pred_check_branch
          %420 = sbr.rel (%p418) target = $region64
        $region63: #{tpu_custom_call.1} parent=59 // pred_region
          %s421 = sand.u32 %s37, 1
          %s422 = scalar_lea.sflag [#allocation6], %s421
          %s423 = sand.u32 %s37, 1
          %s424 = smul.addr %s423, 4
          %s425 = scalar_lea.vmem [#allocation5], %s424
          %s427 = ssub.s32 64, 64
          %428 = vsyncadd %s422, %s427
          %s429 = smul.addr %s27, 64
          %s430 = scalar_lea.hbm %s0, %s429
          %s432 = sshll.u32 %s425, 4
          %s433 = int_to_ptr.vmem [resolvable:$true] %s432
          %435 = dma.hbm_to_vmem [thread:$0]  %s430, 64, %s433, %s422
        $region64: #{tpu_custom_call.1} parent=59 // pred_fallthru
          _
        // Predicated region
        $region65: #{tpu_custom_call.1} parent=59 // pred_check
          %p436 = pneg %p73
        $region66: #{tpu_custom_call.1} parent=59 // pred_check_branch
          %438 = sbr.rel (%p436) target = $region68
        $region67: #{tpu_custom_call.1} parent=59 // pred_region
          %p439 = scmp.lt.s32.totalorder %s27, 1
          %s440 = scalar_select %p439, %s27, 1
          %s441 = smul.addr %s440, 2
          %s442 = smul.addr %s441, 8
          %s443 = scalar_lea.vmem %s1, %s442
        $region68: #{tpu_custom_call.1} parent=59 // pred_fallthru
          _
      $region60: #{tpu_custom_call.1} parent=5 // pred_fallthru
        _
      %p444 = scmp.le.s32.totalorder 1, %s27
      %p445 = scmp.lt.s32.totalorder %s27, 3
      %p446 = pnand %p444, %p445
      %p447 = pneg %p446
      // Predicated region
      $region69: #{tpu_custom_call.1} parent=5 // pred_check
        _
      $region70: #{tpu_custom_call.1} parent=5 // pred_check_branch
        %449 = sbr.rel (%p446) target = $region72
      $region71: #{tpu_custom_call.1} parent=5 // pred_region
        %s450 = ssub.s32 %s27, 1
        %s451 = sand.u32 %s40, 1
        %s452 = scalar_lea.sflag [#allocation6], %s451
        %s453 = sand.u32 %s40, 1
        %s454 = smul.addr %s453, 4
        %s455 = scalar_lea.vmem [#allocation5], %s454
        // Predicated region
        $region73: #{tpu_custom_call.1} parent=71 // pred_check
          %p456 = pneg %p53
        $region74: #{tpu_custom_call.1} parent=71 // pred_check_branch
          %458 = sbr.rel (%p456) target = $region76
        $region75: #{tpu_custom_call.1} parent=71 // pred_region
          %459 = dma.done %s452, 64
        $region76: #{tpu_custom_call.1} parent=71 // pred_fallthru
          _
        // Predicated region
        $region77: #{tpu_custom_call.1} parent=71 // pred_check
          %p460 = pneg %p100
        $region78: #{tpu_custom_call.1} parent=71 // pred_check_branch
          %462 = sbr.rel (%p460) target = $region80
        $region79: #{tpu_custom_call.1} parent=71 // pred_region
          %463 = dma.done [#allocation9], 256
        $region80: #{tpu_custom_call.1} parent=71 // pred_fallthru
          _
        // Predicated region
        $region81: #{tpu_custom_call.1} parent=71 // pred_check
          %p464 = pneg %p205
        $region82: #{tpu_custom_call.1} parent=71 // pred_check_branch
          %466 = sbr.rel (%p464) target = $region84
        $region83: #{tpu_custom_call.1} parent=71 // pred_region
          %467 = dma.done [#allocation9], 384
        $region84: #{tpu_custom_call.1} parent=71 // pred_fallthru
          _
        // Predicated region
        $region85: #{tpu_custom_call.1} parent=71 // pred_check
          %p468 = pneg %p268
        $region86: #{tpu_custom_call.1} parent=71 // pred_check_branch
          %470 = sbr.rel (%p468) target = $region88
        $region87: #{tpu_custom_call.1} parent=71 // pred_region
          %471 = dma.done [#allocation12], 384
        $region88: #{tpu_custom_call.1} parent=71 // pred_fallthru
          _
        %s472 = sand.u32 %s40, 1
        %s473 = scalar_lea.sflag [#allocation6], %s472
        %s474 = sand.u32 %s40, 1
        %s475 = smul.addr %s474, 4
        %s476 = scalar_lea.vmem [#allocation5], %s475
        %p477 = pneg %p53
        %p478 = pneg %p50
        %p479 = scmp.lt.s32.totalorder %s32, 1
        %s480 = scalar_select %p479, %s32, 1
        %s481 = smul.addr %s480, 2
        %s482 = smul.addr %s481, 8
        %s483 = scalar_lea.vmem %s1, %s482
        %p484 = pneg %p79
        %p485 = pneg %p76
        %p486 = pneg %p100
        %p487 = pneg %p97
        %p488 = pneg %p121
        %p489 = pneg %p118
        %p490 = pneg %p142
        %p491 = pneg %p139
        %p492 = pneg %p163
        %p493 = pneg %p160
        %p494 = pneg %p184
        %p495 = pneg %p181
        %p496 = pneg %p205
        %p497 = pneg %p202
        %p498 = pneg %p226
        %p499 = pneg %p223
        %p500 = pneg %p247
        %p501 = pneg %p244
        %p502 = pneg %p268
        %p503 = pneg %p265
        %p504 = pneg %p289
        %p505 = pneg %p286
        %p506 = pneg %p310
        %p507 = pneg %p307
        %p508 = pneg %p336
        %p509 = pneg %p333
        %s510 = sand.u32 %s323, 1
        %s511 = scalar_lea.sflag [#allocation7], %s510
        %s512 = sand.u32 %s323, 1
        %s513 = smul.addr %s512, 16
        %s514 = scalar_lea.vmem [#allocation13], %s513
        %p515 = scmp.lt.s32.totalorder %s32, 1
        %s516 = scalar_select %p515, %s32, 1
        %s517 = smul.addr %s516, 2
        %s518 = smul.addr %s517, 8
        %s519 = scalar_lea.vmem %s1, %s518
        %vm520 = vcmask 1044472
        %521 = vst.msk [vmem:[#allocation2] sm:$0xf] %vm520, 0.0
        %vm522 = vcmask 3072
        %523 = vst.msk [vmem:[#allocation2 + $0x8] sm:$0xf] %vm522, 0.0
        %vm524 = vcmask 1048568
        %525 = vst.msk [vmem:[#allocation3] sm:$0xff] %vm524, 0.0
        %526 = vst.msk [vmem:[#allocation3 + $0x18] sm:$0xf] %vm520, 0.0
        %vm527 = vcmask 7168
        %528 = vst.msk [vmem:[#allocation3 + $0x10] sm:$0xff] %vm527, 0.0
        %529 = vst.msk [vmem:[#allocation3 + $0x28] sm:$0xf] %vm522, 0.0
        %530 = vst.msk [vmem:[#allocation4] sm:$0xff] %vm524, 0.0
        %531 = vst.msk [vmem:[#allocation4 + $0x18] sm:$0xf] %vm520, 0.0
        %532 = vst.msk [vmem:[#allocation4 + $0x10] sm:$0xff] %vm527, 0.0
        %533 = vst.msk [vmem:[#allocation4 + $0x28] sm:$0xf] %vm522, 0.0
        %s534 = scalar_lea.vmem [#allocation3], 48
        %535 = vst.msk [vmem:[%s534] sm:$0xff] %vm524, 0.0
        %536 = vst.msk [vmem:[%s534 + $0x18] sm:$0xf] %vm520, 0.0
        %537 = vst.msk [vmem:[%s534 + $0x10] sm:$0xff] %vm527, 0.0
        %538 = vst.msk [vmem:[%s534 + $0x28] sm:$0xf] %vm522, 0.0
        %s539 = scalar_lea.vmem [#allocation4], 48
        %540 = vst.msk [vmem:[%s539] sm:$0xff] %vm524, 0.0
        %541 = vst.msk [vmem:[%s539 + $0x18] sm:$0xf] %vm520, 0.0
        %542 = vst.msk [vmem:[%s539 + $0x10] sm:$0xff] %vm527, 0.0
        %543 = vst.msk [vmem:[%s539 + $0x28] sm:$0xf] %vm522, 0.0
        %v544 = vlaneseq
        %v545 = vand.u32 %v544, 127
        %vm546 = vcmp.lt.s32.totalorder %v545, 8
        %v547 = vsel %vm546, 1, 0
        %v548 = vcvt.s32.f32 %v547
        %v549 = vld [vmem:[%s455] sm:$0xf]
        %550 = vst [vmem:[#allocation2 + $0x4] sm:$0xf] %v549
        %v551 = vld [vmem:[%s519] sm:$0xff]
        %552 = vst [vmem:[#allocation3 + $0x8] sm:$0xff] %v551
        %s553 = scalar_lea.vmem %s519, 8
        %v554 = vld [vmem:[%s553] sm:$0xff]
        %555 = vst [vmem:[%s534 + $0x8] sm:$0xff] %v554
        %v556 = vld [vmem:[#allocation8] sm:$0xf]
        %s557 = scalar_lea.vmem [#allocation8], 4
        %v558 = vld [vmem:[%s557] sm:$0xf]
        %s559 = scalar_lea.vmem [#allocation8], 8
        %v560 = vld [vmem:[%s559] sm:$0xf]
        %s561 = scalar_lea.vmem [#allocation8], 12
        %v562 = vld [vmem:[%s561] sm:$0xf]
        %v563 = vld [vmem:[%s3] sm:$0xf]
        %v564 = vld [vmem:[#allocation2 + $0x4] sm:$0xf]
        %v565 = vld [vmem:[#allocation2] sm:$0xff]
        %v567 = vcombine.high %v565, %v565
        %568 = vrot.lane.b32.xlu0 %v565, 1
        %v569 = vpop.permute.xlu0 %568
        %570 = vrot.lane.b32.xlu0 %v567, 1
        %v571 = vpop.permute.xlu0 %570
        %v572 = vsel %vm527, %v569, %v571
        %vm573 = vcmask 31744
        %v575 = vsel %vm573, %v562, 0
        %vm577 = vcmask 1043456
        %v578 = vsel %vm577, %v572, 0
        %580 = vmatprep.subr.mxu0 0.0
        %581 = vmatpush1.msra.mxu0 0.0
        %582 = vmatprep.subr.mxu0 0.0
        %583 = vmatpush1.msra.mxu0 0.0
        %584 = vmatprep.subr.mxu0 0.0
        %585 = vmatpush1.msra.mxu0 0.0
        %586 = vmatprep.subr.mxu0 0.0
        %587 = vmatpush1.msra.mxu0 0.0
        %588 = vmatprep.subr.mxu0 0.0
        %589 = vmatpush1.msra.mxu0 0.0
        %590 = vmatprep.subr.mxu0 0.0
        %591 = vmatpush1.msra.mxu0 0.0
        %592 = vmatprep.subr.mxu0 0.0
        %593 = vmatpush1.msra.mxu0 0.0
        %594 = vmatprep.subr.mxu0 0.0
        %595 = vmatpush1.msra.mxu0 0.0
        %596 = vmatprep.subr.mxu0 0.0
        %597 = vmatpush1.msra.mxu0 0.0
        %598 = vmatprep.subr.mxu0 0.0
        %599 = vmatpush1.msra.mxu0 0.0
        %600 = vmatprep.subr.mxu0 0.0
        %601 = vmatpush1.msra.mxu0 0.0
        %602 = vmatprep.subr.mxu0 0.0
        %603 = vmatpush1.msra.mxu0 0.0
        %604 = vmatprep.subr.mxu0 0.0
        %605 = vmatpush1.msra.mxu0 0.0
        %606 = vmatprep.subr.mxu0 0.0
        %607 = vmatpush1.msra.mxu0 0.0
        %608 = vmatprep.subr.mxu0 0.0
        %609 = vmatpush1.msra.mxu0 0.0
        %610 = vmatprep.subr.mxu0 0.0
        %611 = vmatpush1.msra.mxu0 %v578
        %612 = vmatprep.subr.mxu0 0.0
        %613 = vmatpush2.msra.mxu0 0.0
        %614 = vmatprep.subr.mxu0 0.0
        %615 = vmatpush2.msra.mxu0 0.0
        %616 = vmatprep.subr.mxu0 0.0
        %617 = vmatpush2.msra.mxu0 0.0
        %618 = vmatprep.subr.mxu0 0.0
        %619 = vmatpush2.msra.mxu0 0.0
        %620 = vmatprep.subr.mxu0 0.0
        %621 = vmatpush2.msra.mxu0 0.0
        %622 = vmatprep.subr.mxu0 0.0
        %623 = vmatpush2.msra.mxu0 0.0
        %624 = vmatprep.subr.mxu0 0.0
        %625 = vmatpush2.msra.mxu0 0.0
        %626 = vmatprep.subr.mxu0 0.0
        %627 = vmatpush2.msra.mxu0 0.0
        %628 = vmatprep.subr.mxu0 0.0
        %629 = vmatpush2.msra.mxu0 0.0
        %630 = vmatprep.subr.mxu0 0.0
        %631 = vmatpush2.msra.mxu0 0.0
        %632 = vmatprep.subr.mxu0 0.0
        %633 = vmatpush2.msra.mxu0 0.0
        %634 = vmatprep.subr.mxu0 0.0
        %635 = vmatpush2.msra.mxu0 0.0
        %636 = vmatprep.subr.mxu0 0.0
        %637 = vmatpush2.msra.mxu0 0.0
        %638 = vmatprep.subr.mxu0 0.0
        %639 = vmatpush2.msra.mxu0 0.0
        %640 = vmatprep.subr.mxu0 0.0
        %641 = vmatpush2.msra.mxu0 0.0
        %642 = vmatprep.subr.mxu0 0.0
        %643 = vmatpush2.msra.mxu0 0.0
        %644 = vmatprep.mubr.f32.mxu0 0.0
        %645 = vmatmul.mubr.f32.gmra.mxu0 %v575
        %v646 = vpop.f32.mrf.mxu0
        %v647 = vadd.f32 0.0, %v646
        %v648 = vpop.f32.mrf.mxu0
        %649 = vdwg.mxu0
        %v651 = vsel %vm573, %v558, 0
        %v654 = vsel %vm577, %v564, 0
        %656 = vmatprep.subr.mxu0 0.0
        %657 = vmatpush1.msra.mxu0 0.0
        %658 = vmatprep.subr.mxu0 0.0
        %659 = vmatpush1.msra.mxu0 0.0
        %660 = vmatprep.subr.mxu0 0.0
        %661 = vmatpush1.msra.mxu0 0.0
        %662 = vmatprep.subr.mxu0 0.0
        %663 = vmatpush1.msra.mxu0 0.0
        %664 = vmatprep.subr.mxu0 0.0
        %665 = vmatpush1.msra.mxu0 0.0
        %666 = vmatprep.subr.mxu0 0.0
        %667 = vmatpush1.msra.mxu0 0.0
        %668 = vmatprep.subr.mxu0 0.0
        %669 = vmatpush1.msra.mxu0 0.0
        %670 = vmatprep.subr.mxu0 0.0
        %671 = vmatpush1.msra.mxu0 0.0
        %672 = vmatprep.subr.mxu0 0.0
        %673 = vmatpush1.msra.mxu0 0.0
        %674 = vmatprep.subr.mxu0 0.0
        %675 = vmatpush1.msra.mxu0 0.0
        %676 = vmatprep.subr.mxu0 0.0
        %677 = vmatpush1.msra.mxu0 0.0
        %678 = vmatprep.subr.mxu0 0.0
        %679 = vmatpush1.msra.mxu0 0.0
        %680 = vmatprep.subr.mxu0 0.0
        %681 = vmatpush1.msra.mxu0 0.0
        %682 = vmatprep.subr.mxu0 0.0
        %683 = vmatpush1.msra.mxu0 0.0
        %684 = vmatprep.subr.mxu0 0.0
        %685 = vmatpush1.msra.mxu0 0.0
        %686 = vmatprep.subr.mxu0 0.0
        %687 = vmatpush1.msra.mxu0 %v654
        %688 = vmatprep.subr.mxu0 0.0
        %689 = vmatpush2.msra.mxu0 0.0
        %690 = vmatprep.subr.mxu0 0.0
        %691 = vmatpush2.msra.mxu0 0.0
        %692 = vmatprep.subr.mxu0 0.0
        %693 = vmatpush2.msra.mxu0 0.0
        %694 = vmatprep.subr.mxu0 0.0
        %695 = vmatpush2.msra.mxu0 0.0
        %696 = vmatprep.subr.mxu0 0.0
        %697 = vmatpush2.msra.mxu0 0.0
        %698 = vmatprep.subr.mxu0 0.0
        %699 = vmatpush2.msra.mxu0 0.0
        %700 = vmatprep.subr.mxu0 0.0
        %701 = vmatpush2.msra.mxu0 0.0
        %702 = vmatprep.subr.mxu0 0.0
        %703 = vmatpush2.msra.mxu0 0.0
        %704 = vmatprep.subr.mxu0 0.0
        %705 = vmatpush2.msra.mxu0 0.0
        %706 = vmatprep.subr.mxu0 0.0
        %707 = vmatpush2.msra.mxu0 0.0
        %708 = vmatprep.subr.mxu0 0.0
        %709 = vmatpush2.msra.mxu0 0.0
        %710 = vmatprep.subr.mxu0 0.0
        %711 = vmatpush2.msra.mxu0 0.0
        %712 = vmatprep.subr.mxu0 0.0
        %713 = vmatpush2.msra.mxu0 0.0
        %714 = vmatprep.subr.mxu0 0.0
        %715 = vmatpush2.msra.mxu0 0.0
        %716 = vmatprep.subr.mxu0 0.0
        %717 = vmatpush2.msra.mxu0 0.0
        %718 = vmatprep.subr.mxu0 0.0
        %719 = vmatpush2.msra.mxu0 0.0
        %720 = vmatprep.mubr.f32.mxu0 0.0
        %721 = vmatmul.mubr.f32.gmra.mxu0 %v651
        %v722 = vpop.f32.mrf.mxu0
        %v723 = vadd.f32 %v647, %v722
        %v724 = vpop.f32.mrf.mxu0
        %725 = vdwg.mxu0
        %727 = vset.pattern.permute.xlu0 0
        %728 = vperm.xlu0 %727, %v563
        %v729 = vpop.permute.xlu0 %728
        %v731 = vadd.f32 %v723, %v729
        %v732 = vmul.f32 %v731, %v548
        %733 = vst [vmem:[#allocation3 + $0x20] sm:$0xf] %v732
        %v734 = vld [vmem:[#allocation2 + $0x4] sm:$0xff]
        %v735 = vld [vmem:[#allocation2 + $0x4] sm:$0xf]
        %v737 = vsel %vm573, %v560, 0
        %v740 = vsel %vm577, %v735, 0
        %742 = vmatprep.subr.mxu0 0.0
        %743 = vmatpush1.msra.mxu0 0.0
        %744 = vmatprep.subr.mxu0 0.0
        %745 = vmatpush1.msra.mxu0 0.0
        %746 = vmatprep.subr.mxu0 0.0
        %747 = vmatpush1.msra.mxu0 0.0
        %748 = vmatprep.subr.mxu0 0.0
        %749 = vmatpush1.msra.mxu0 0.0
        %750 = vmatprep.subr.mxu0 0.0
        %751 = vmatpush1.msra.mxu0 0.0
        %752 = vmatprep.subr.mxu0 0.0
        %753 = vmatpush1.msra.mxu0 0.0
        %754 = vmatprep.subr.mxu0 0.0
        %755 = vmatpush1.msra.mxu0 0.0
        %756 = vmatprep.subr.mxu0 0.0
        %757 = vmatpush1.msra.mxu0 0.0
        %758 = vmatprep.subr.mxu0 0.0
        %759 = vmatpush1.msra.mxu0 0.0
        %760 = vmatprep.subr.mxu0 0.0
        %761 = vmatpush1.msra.mxu0 0.0
        %762 = vmatprep.subr.mxu0 0.0
        %763 = vmatpush1.msra.mxu0 0.0
        %764 = vmatprep.subr.mxu0 0.0
        %765 = vmatpush1.msra.mxu0 0.0
        %766 = vmatprep.subr.mxu0 0.0
        %767 = vmatpush1.msra.mxu0 0.0
        %768 = vmatprep.subr.mxu0 0.0
        %769 = vmatpush1.msra.mxu0 0.0
        %770 = vmatprep.subr.mxu0 0.0
        %771 = vmatpush1.msra.mxu0 0.0
        %772 = vmatprep.subr.mxu0 0.0
        %773 = vmatpush1.msra.mxu0 %v740
        %774 = vmatprep.subr.mxu0 0.0
        %775 = vmatpush2.msra.mxu0 0.0
        %776 = vmatprep.subr.mxu0 0.0
        %777 = vmatpush2.msra.mxu0 0.0
        %778 = vmatprep.subr.mxu0 0.0
        %779 = vmatpush2.msra.mxu0 0.0
        %780 = vmatprep.subr.mxu0 0.0
        %781 = vmatpush2.msra.mxu0 0.0
        %782 = vmatprep.subr.mxu0 0.0
        %783 = vmatpush2.msra.mxu0 0.0
        %784 = vmatprep.subr.mxu0 0.0
        %785 = vmatpush2.msra.mxu0 0.0
        %786 = vmatprep.subr.mxu0 0.0
        %787 = vmatpush2.msra.mxu0 0.0
        %788 = vmatprep.subr.mxu0 0.0
        %789 = vmatpush2.msra.mxu0 0.0
        %790 = vmatprep.subr.mxu0 0.0
        %791 = vmatpush2.msra.mxu0 0.0
        %792 = vmatprep.subr.mxu0 0.0
        %793 = vmatpush2.msra.mxu0 0.0
        %794 = vmatprep.subr.mxu0 0.0
        %795 = vmatpush2.msra.mxu0 0.0
        %796 = vmatprep.subr.mxu0 0.0
        %797 = vmatpush2.msra.mxu0 0.0
        %798 = vmatprep.subr.mxu0 0.0
        %799 = vmatpush2.msra.mxu0 0.0
        %800 = vmatprep.subr.mxu0 0.0
        %801 = vmatpush2.msra.mxu0 0.0
        %802 = vmatprep.subr.mxu0 0.0
        %803 = vmatpush2.msra.mxu0 0.0
        %804 = vmatprep.subr.mxu0 0.0
        %805 = vmatpush2.msra.mxu0 0.0
        %806 = vmatprep.mubr.f32.mxu0 0.0
        %807 = vmatmul.mubr.f32.gmra.mxu0 %v737
        %v808 = vpop.f32.mrf.mxu0
        %v809 = vadd.f32 0.0, %v808
        %v810 = vpop.f32.mrf.mxu0
        %811 = vdwg.mxu0
        %v813 = vcombine.high %v734, %v734
        %814 = vrot.lane.b32.xlu0 %v734, 127
        %v815 = vpop.permute.xlu0 %814
        %816 = vrot.lane.b32.xlu0 %v813, 127
        %v817 = vpop.permute.xlu0 %816
        %vm818 = vcmask 1039360
        %v819 = vsel %vm818, %v815, %v817
        %v821 = vsel %vm573, %v556, 0
        %v823 = vsel %vm577, %v819, 0
        %825 = vmatprep.subr.mxu0 0.0
        %826 = vmatpush1.msra.mxu0 0.0
        %827 = vmatprep.subr.mxu0 0.0
        %828 = vmatpush1.msra.mxu0 0.0
        %829 = vmatprep.subr.mxu0 0.0
        %830 = vmatpush1.msra.mxu0 0.0
        %831 = vmatprep.subr.mxu0 0.0
        %832 = vmatpush1.msra.mxu0 0.0
        %833 = vmatprep.subr.mxu0 0.0
        %834 = vmatpush1.msra.mxu0 0.0
        %835 = vmatprep.subr.mxu0 0.0
        %836 = vmatpush1.msra.mxu0 0.0
        %837 = vmatprep.subr.mxu0 0.0
        %838 = vmatpush1.msra.mxu0 0.0
        %839 = vmatprep.subr.mxu0 0.0
        %840 = vmatpush1.msra.mxu0 0.0
        %841 = vmatprep.subr.mxu0 0.0
        %842 = vmatpush1.msra.mxu0 0.0
        %843 = vmatprep.subr.mxu0 0.0
        %844 = vmatpush1.msra.mxu0 0.0
        %845 = vmatprep.subr.mxu0 0.0
        %846 = vmatpush1.msra.mxu0 0.0
        %847 = vmatprep.subr.mxu0 0.0
        %848 = vmatpush1.msra.mxu0 0.0
        %849 = vmatprep.subr.mxu0 0.0
        %850 = vmatpush1.msra.mxu0 0.0
        %851 = vmatprep.subr.mxu0 0.0
        %852 = vmatpush1.msra.mxu0 0.0
        %853 = vmatprep.subr.mxu0 0.0
        %854 = vmatpush1.msra.mxu0 0.0
        %855 = vmatprep.subr.mxu0 0.0
        %856 = vmatpush1.msra.mxu0 %v823
        %857 = vmatprep.subr.mxu0 0.0
        %858 = vmatpush2.msra.mxu0 0.0
        %859 = vmatprep.subr.mxu0 0.0
        %860 = vmatpush2.msra.mxu0 0.0
        %861 = vmatprep.subr.mxu0 0.0
        %862 = vmatpush2.msra.mxu0 0.0
        %863 = vmatprep.subr.mxu0 0.0
        %864 = vmatpush2.msra.mxu0 0.0
        %865 = vmatprep.subr.mxu0 0.0
        %866 = vmatpush2.msra.mxu0 0.0
        %867 = vmatprep.subr.mxu0 0.0
        %868 = vmatpush2.msra.mxu0 0.0
        %869 = vmatprep.subr.mxu0 0.0
        %870 = vmatpush2.msra.mxu0 0.0
        %871 = vmatprep.subr.mxu0 0.0
        %872 = vmatpush2.msra.mxu0 0.0
        %873 = vmatprep.subr.mxu0 0.0
        %874 = vmatpush2.msra.mxu0 0.0
        %875 = vmatprep.subr.mxu0 0.0
        %876 = vmatpush2.msra.mxu0 0.0
        %877 = vmatprep.subr.mxu0 0.0
        %878 = vmatpush2.msra.mxu0 0.0
        %879 = vmatprep.subr.mxu0 0.0
        %880 = vmatpush2.msra.mxu0 0.0
        %881 = vmatprep.subr.mxu0 0.0
        %882 = vmatpush2.msra.mxu0 0.0
        %883 = vmatprep.subr.mxu0 0.0
        %884 = vmatpush2.msra.mxu0 0.0
        %885 = vmatprep.subr.mxu0 0.0
        %886 = vmatpush2.msra.mxu0 0.0
        %887 = vmatprep.subr.mxu0 0.0
        %888 = vmatpush2.msra.mxu0 0.0
        %889 = vmatprep.mubr.f32.mxu0 0.0
        %890 = vmatmul.mubr.f32.gmra.mxu0 %v821
        %v891 = vpop.f32.mrf.mxu0
        %v892 = vadd.f32 %v809, %v891
        %v893 = vpop.f32.mrf.mxu0
        %894 = vdwg.mxu0
        %v895 = vadd.f32 %v892, %v729
        %v896 = vmul.f32 %v895, %v548
        %897 = vst [vmem:[%s534 + $0x20] sm:$0xf] %v896
        %v898 = vld [vmem:[%s4] sm:$0xff]
        %s899 = scalar_lea.vmem %s4, 8
        %v900 = vld [vmem:[%s899] sm:$0xff]
        %s901 = scalar_lea.vmem %s4, 16
        %v902 = vld [vmem:[%s901] sm:$0xff]
        %v903 = vld [vmem:[%s5] sm:$0xff]
        %v904 = vld [vmem:[%s6] sm:$0xff]
        %v905 = vld [vmem:[%s534] sm:$0xff]
        %v906 = vld [vmem:[%s534 + $0x8] sm:$0xff]
        %v907 = vld [vmem:[%s534 + $0x18] sm:$0xf]
        %v908 = vld [vmem:[%s534 + $0x20] sm:$0xf]
        %v909 = vld [vmem:[#allocation3 + $0x8] sm:$0xff]
        %v910 = vld [vmem:[#allocation3 + $0x20] sm:$0xf]
        %vm911 = vcmask 97280
        %v913 = vsel %vm911, %v900, 0
        %v916 = vsel %vm577, %v910, 0
        %918 = vmatprep.subr.mxu0 0.0
        %919 = vmatpush1.msra.mxu0 0.0
        %920 = vmatprep.subr.mxu0 0.0
        %921 = vmatpush1.msra.mxu0 0.0
        %922 = vmatprep.subr.mxu0 0.0
        %923 = vmatpush1.msra.mxu0 0.0
        %924 = vmatprep.subr.mxu0 0.0
        %925 = vmatpush1.msra.mxu0 0.0
        %926 = vmatprep.subr.mxu0 0.0
        %927 = vmatpush1.msra.mxu0 0.0
        %928 = vmatprep.subr.mxu0 0.0
        %929 = vmatpush1.msra.mxu0 0.0
        %930 = vmatprep.subr.mxu0 0.0
        %931 = vmatpush1.msra.mxu0 0.0
        %932 = vmatprep.subr.mxu0 0.0
        %933 = vmatpush1.msra.mxu0 0.0
        %934 = vmatprep.subr.mxu0 0.0
        %935 = vmatpush1.msra.mxu0 0.0
        %936 = vmatprep.subr.mxu0 0.0
        %937 = vmatpush1.msra.mxu0 0.0
        %938 = vmatprep.subr.mxu0 0.0
        %939 = vmatpush1.msra.mxu0 0.0
        %940 = vmatprep.subr.mxu0 0.0
        %941 = vmatpush1.msra.mxu0 0.0
        %942 = vmatprep.subr.mxu0 0.0
        %943 = vmatpush1.msra.mxu0 0.0
        %944 = vmatprep.subr.mxu0 0.0
        %945 = vmatpush1.msra.mxu0 0.0
        %946 = vmatprep.subr.mxu0 0.0
        %947 = vmatpush1.msra.mxu0 %v916
        %948 = vmatprep.subr.mxu0 0.0
        %949 = vmatpush1.msra.mxu0 %v909
        %950 = vmatprep.subr.mxu0 0.0
        %951 = vmatpush2.msra.mxu0 0.0
        %952 = vmatprep.subr.mxu0 0.0
        %953 = vmatpush2.msra.mxu0 0.0
        %954 = vmatprep.subr.mxu0 0.0
        %955 = vmatpush2.msra.mxu0 0.0
        %956 = vmatprep.subr.mxu0 0.0
        %957 = vmatpush2.msra.mxu0 0.0
        %958 = vmatprep.subr.mxu0 0.0
        %959 = vmatpush2.msra.mxu0 0.0
        %960 = vmatprep.subr.mxu0 0.0
        %961 = vmatpush2.msra.mxu0 0.0
        %962 = vmatprep.subr.mxu0 0.0
        %963 = vmatpush2.msra.mxu0 0.0
        %964 = vmatprep.subr.mxu0 0.0
        %965 = vmatpush2.msra.mxu0 0.0
        %966 = vmatprep.subr.mxu0 0.0
        %967 = vmatpush2.msra.mxu0 0.0
        %968 = vmatprep.subr.mxu0 0.0
        %969 = vmatpush2.msra.mxu0 0.0
        %970 = vmatprep.subr.mxu0 0.0
        %971 = vmatpush2.msra.mxu0 0.0
        %972 = vmatprep.subr.mxu0 0.0
        %973 = vmatpush2.msra.mxu0 0.0
        %974 = vmatprep.subr.mxu0 0.0
        %975 = vmatpush2.msra.mxu0 0.0
        %976 = vmatprep.subr.mxu0 0.0
        %977 = vmatpush2.msra.mxu0 0.0
        %978 = vmatprep.subr.mxu0 0.0
        %979 = vmatpush2.msra.mxu0 0.0
        %980 = vmatprep.subr.mxu0 0.0
        %981 = vmatpush2.msra.mxu0 0.0
        %982 = vmatprep.mubr.f32.mxu0 0.0
        %983 = vmatmul.mubr.f32.gmra.mxu0 %v913
        %v984 = vpop.f32.mrf.mxu0
        %v985 = vadd.f32 0.0, %v984
        %v986 = vpop.f32.mrf.mxu0
        %987 = vdwg.mxu0
        %992 = vrot.lane.b32.xlu0 %v905, 1
        %v993 = vpop.permute.xlu0 %992
        %994 = vrot.lane.b32.xlu0 %v906, 1
        %v995 = vpop.permute.xlu0 %994
        %996 = vrot.lane.b32.xlu0 %v907, 1
        %v997 = vpop.permute.xlu0 %996
        %998 = vrot.lane.b32.xlu0 %v908, 1
        %v999 = vpop.permute.xlu0 %998
        %v1000 = vsel %vm527, %v993, %v995
        %v1001 = vsel %vm527, %v997, %v999
        %v1004 = vsel %vm911, %v898, 0
        %v1006 = vsel %vm577, %v1001, 0
        %1008 = vmatprep.subr.mxu0 0.0
        %1009 = vmatpush1.msra.mxu0 0.0
        %1010 = vmatprep.subr.mxu0 0.0
        %1011 = vmatpush1.msra.mxu0 0.0
        %1012 = vmatprep.subr.mxu0 0.0
        %1013 = vmatpush1.msra.mxu0 0.0
        %1014 = vmatprep.subr.mxu0 0.0
        %1015 = vmatpush1.msra.mxu0 0.0
        %1016 = vmatprep.subr.mxu0 0.0
        %1017 = vmatpush1.msra.mxu0 0.0
        %1018 = vmatprep.subr.mxu0 0.0
        %1019 = vmatpush1.msra.mxu0 0.0
        %1020 = vmatprep.subr.mxu0 0.0
        %1021 = vmatpush1.msra.mxu0 0.0
        %1022 = vmatprep.subr.mxu0 0.0
        %1023 = vmatpush1.msra.mxu0 0.0
        %1024 = vmatprep.subr.mxu0 0.0
        %1025 = vmatpush1.msra.mxu0 0.0
        %1026 = vmatprep.subr.mxu0 0.0
        %1027 = vmatpush1.msra.mxu0 0.0
        %1028 = vmatprep.subr.mxu0 0.0
        %1029 = vmatpush1.msra.mxu0 0.0
        %1030 = vmatprep.subr.mxu0 0.0
        %1031 = vmatpush1.msra.mxu0 0.0
        %1032 = vmatprep.subr.mxu0 0.0
        %1033 = vmatpush1.msra.mxu0 0.0
        %1034 = vmatprep.subr.mxu0 0.0
        %1035 = vmatpush1.msra.mxu0 0.0
        %1036 = vmatprep.subr.mxu0 0.0
        %1037 = vmatpush1.msra.mxu0 %v1006
        %1038 = vmatprep.subr.mxu0 0.0
        %1039 = vmatpush1.msra.mxu0 %v1000
        %1040 = vmatprep.subr.mxu0 0.0
        %1041 = vmatpush2.msra.mxu0 0.0
        %1042 = vmatprep.subr.mxu0 0.0
        %1043 = vmatpush2.msra.mxu0 0.0
        %1044 = vmatprep.subr.mxu0 0.0
        %1045 = vmatpush2.msra.mxu0 0.0
        %1046 = vmatprep.subr.mxu0 0.0
        %1047 = vmatpush2.msra.mxu0 0.0
        %1048 = vmatprep.subr.mxu0 0.0
        %1049 = vmatpush2.msra.mxu0 0.0
        %1050 = vmatprep.subr.mxu0 0.0
        %1051 = vmatpush2.msra.mxu0 0.0
        %1052 = vmatprep.subr.mxu0 0.0
        %1053 = vmatpush2.msra.mxu0 0.0
        %1054 = vmatprep.subr.mxu0 0.0
        %1055 = vmatpush2.msra.mxu0 0.0
        %1056 = vmatprep.subr.mxu0 0.0
        %1057 = vmatpush2.msra.mxu0 0.0
        %1058 = vmatprep.subr.mxu0 0.0
        %1059 = vmatpush2.msra.mxu0 0.0
        %1060 = vmatprep.subr.mxu0 0.0
        %1061 = vmatpush2.msra.mxu0 0.0
        %1062 = vmatprep.subr.mxu0 0.0
        %1063 = vmatpush2.msra.mxu0 0.0
        %1064 = vmatprep.subr.mxu0 0.0
        %1065 = vmatpush2.msra.mxu0 0.0
        %1066 = vmatprep.subr.mxu0 0.0
        %1067 = vmatpush2.msra.mxu0 0.0
        %1068 = vmatprep.subr.mxu0 0.0
        %1069 = vmatpush2.msra.mxu0 0.0
        %1070 = vmatprep.subr.mxu0 0.0
        %1071 = vmatpush2.msra.mxu0 0.0
        %1072 = vmatprep.mubr.f32.mxu0 0.0
        %1073 = vmatmul.mubr.f32.gmra.mxu0 %v1004
        %v1074 = vpop.f32.mrf.mxu0
        %v1075 = vadd.f32 %v985, %v1074
        %v1076 = vpop.f32.mrf.mxu0
        %1077 = vdwg.mxu0
        %v1079 = vsel %vm911, %v902, 0
        %v1081 = vsel %vm577, %v908, 0
        %1083 = vmatprep.subr.mxu0 0.0
        %1084 = vmatpush1.msra.mxu0 0.0
        %1085 = vmatprep.subr.mxu0 0.0
        %1086 = vmatpush1.msra.mxu0 0.0
        %1087 = vmatprep.subr.mxu0 0.0
        %1088 = vmatpush1.msra.mxu0 0.0
        %1089 = vmatprep.subr.mxu0 0.0
        %1090 = vmatpush1.msra.mxu0 0.0
        %1091 = vmatprep.subr.mxu0 0.0
        %1092 = vmatpush1.msra.mxu0 0.0
        %1093 = vmatprep.subr.mxu0 0.0
        %1094 = vmatpush1.msra.mxu0 0.0
        %1095 = vmatprep.subr.mxu0 0.0
        %1096 = vmatpush1.msra.mxu0 0.0
        %1097 = vmatprep.subr.mxu0 0.0
        %1098 = vmatpush1.msra.mxu0 0.0
        %1099 = vmatprep.subr.mxu0 0.0
        %1100 = vmatpush1.msra.mxu0 0.0
        %1101 = vmatprep.subr.mxu0 0.0
        %1102 = vmatpush1.msra.mxu0 0.0
        %1103 = vmatprep.subr.mxu0 0.0
        %1104 = vmatpush1.msra.mxu0 0.0
        %1105 = vmatprep.subr.mxu0 0.0
        %1106 = vmatpush1.msra.mxu0 0.0
        %1107 = vmatprep.subr.mxu0 0.0
        %1108 = vmatpush1.msra.mxu0 0.0
        %1109 = vmatprep.subr.mxu0 0.0
        %1110 = vmatpush1.msra.mxu0 0.0
        %1111 = vmatprep.subr.mxu0 0.0
        %1112 = vmatpush1.msra.mxu0 %v1081
        %1113 = vmatprep.subr.mxu0 0.0
        %1114 = vmatpush1.msra.mxu0 %v906
        %1115 = vmatprep.subr.mxu0 0.0
        %1116 = vmatpush2.msra.mxu0 0.0
        %1117 = vmatprep.subr.mxu0 0.0
        %1118 = vmatpush2.msra.mxu0 0.0
        %1119 = vmatprep.subr.mxu0 0.0
        %1120 = vmatpush2.msra.mxu0 0.0
        %1121 = vmatprep.subr.mxu0 0.0
        %1122 = vmatpush2.msra.mxu0 0.0
        %1123 = vmatprep.subr.mxu0 0.0
        %1124 = vmatpush2.msra.mxu0 0.0
        %1125 = vmatprep.subr.mxu0 0.0
        %1126 = vmatpush2.msra.mxu0 0.0
        %1127 = vmatprep.subr.mxu0 0.0
        %1128 = vmatpush2.msra.mxu0 0.0
        %1129 = vmatprep.subr.mxu0 0.0
        %1130 = vmatpush2.msra.mxu0 0.0
        %1131 = vmatprep.subr.mxu0 0.0
        %1132 = vmatpush2.msra.mxu0 0.0
        %1133 = vmatprep.subr.mxu0 0.0
        %1134 = vmatpush2.msra.mxu0 0.0
        %1135 = vmatprep.subr.mxu0 0.0
        %1136 = vmatpush2.msra.mxu0 0.0
        %1137 = vmatprep.subr.mxu0 0.0
        %1138 = vmatpush2.msra.mxu0 0.0
        %1139 = vmatprep.subr.mxu0 0.0
        %1140 = vmatpush2.msra.mxu0 0.0
        %1141 = vmatprep.subr.mxu0 0.0
        %1142 = vmatpush2.msra.mxu0 0.0
        %1143 = vmatprep.subr.mxu0 0.0
        %1144 = vmatpush2.msra.mxu0 0.0
        %1145 = vmatprep.subr.mxu0 0.0
        %1146 = vmatpush2.msra.mxu0 0.0
        %1147 = vmatprep.mubr.f32.mxu0 0.0
        %1148 = vmatmul.mubr.f32.gmra.mxu0 %v1079
        %v1149 = vpop.f32.mrf.mxu0
        %v1150 = vadd.f32 0.0, %v1149
        %v1151 = vpop.f32.mrf.mxu0
        %1152 = vdwg.mxu0
        %v1153 = vadd.f32 %v1075, %v1150
        %1155 = vset.pattern.permute.xlu0 0
        %1156 = vperm.xlu0 %1155, %v903
        %v1157 = vpop.permute.xlu0 %1156
        %v1159 = vmul.f32 %v1153, %v1157
        %1161 = vset.pattern.permute.xlu0 0
        %1162 = vperm.xlu0 %1161, %v904
        %v1163 = vpop.permute.xlu0 %1162
        %v1165 = vadd.f32 %v1159, %v1163
        %v1166 = vmax.f32 %v1165, 0.0
        %v1167 = vmul.f32 %v1166, %v548
        %1168 = vst [vmem:[#allocation4 + $0x8] sm:$0xff] %v1167
        %v1169 = vld [vmem:[#allocation3 + $0x8] sm:$0xff]
        %v1170 = vld [vmem:[#allocation3 + $0x20] sm:$0xf]
        %v1171 = vld [vmem:[%s534 + $0x8] sm:$0xff]
        %v1172 = vld [vmem:[%s534 + $0x20] sm:$0xf]
        %v1174 = vsel %vm577, %v1172, 0
        %1176 = vmatprep.subr.mxu0 0.0
        %1177 = vmatpush1.msra.mxu0 0.0
        %1178 = vmatprep.subr.mxu0 0.0
        %1179 = vmatpush1.msra.mxu0 0.0
        %1180 = vmatprep.subr.mxu0 0.0
        %1181 = vmatpush1.msra.mxu0 0.0
        %1182 = vmatprep.subr.mxu0 0.0
        %1183 = vmatpush1.msra.mxu0 0.0
        %1184 = vmatprep.subr.mxu0 0.0
        %1185 = vmatpush1.msra.mxu0 0.0
        %1186 = vmatprep.subr.mxu0 0.0
        %1187 = vmatpush1.msra.mxu0 0.0
        %1188 = vmatprep.subr.mxu0 0.0
        %1189 = vmatpush1.msra.mxu0 0.0
        %1190 = vmatprep.subr.mxu0 0.0
        %1191 = vmatpush1.msra.mxu0 0.0
        %1192 = vmatprep.subr.mxu0 0.0
        %1193 = vmatpush1.msra.mxu0 0.0
        %1194 = vmatprep.subr.mxu0 0.0
        %1195 = vmatpush1.msra.mxu0 0.0
        %1196 = vmatprep.subr.mxu0 0.0
        %1197 = vmatpush1.msra.mxu0 0.0
        %1198 = vmatprep.subr.mxu0 0.0
        %1199 = vmatpush1.msra.mxu0 0.0
        %1200 = vmatprep.subr.mxu0 0.0
        %1201 = vmatpush1.msra.mxu0 0.0
        %1202 = vmatprep.subr.mxu0 0.0
        %1203 = vmatpush1.msra.mxu0 0.0
        %1204 = vmatprep.subr.mxu0 0.0
        %1205 = vmatpush1.msra.mxu0 %v1174
        %1206 = vmatprep.subr.mxu0 0.0
        %1207 = vmatpush1.msra.mxu0 %v1171
        %1208 = vmatprep.subr.mxu0 0.0
        %1209 = vmatpush2.msra.mxu0 0.0
        %1210 = vmatprep.subr.mxu0 0.0
        %1211 = vmatpush2.msra.mxu0 0.0
        %1212 = vmatprep.subr.mxu0 0.0
        %1213 = vmatpush2.msra.mxu0 0.0
        %1214 = vmatprep.subr.mxu0 0.0
        %1215 = vmatpush2.msra.mxu0 0.0
        %1216 = vmatprep.subr.mxu0 0.0
        %1217 = vmatpush2.msra.mxu0 0.0
        %1218 = vmatprep.subr.mxu0 0.0
        %1219 = vmatpush2.msra.mxu0 0.0
        %1220 = vmatprep.subr.mxu0 0.0
        %1221 = vmatpush2.msra.mxu0 0.0
        %1222 = vmatprep.subr.mxu0 0.0
        %1223 = vmatpush2.msra.mxu0 0.0
        %1224 = vmatprep.subr.mxu0 0.0
        %1225 = vmatpush2.msra.mxu0 0.0
        %1226 = vmatprep.subr.mxu0 0.0
        %1227 = vmatpush2.msra.mxu0 0.0
        %1228 = vmatprep.subr.mxu0 0.0
        %1229 = vmatpush2.msra.mxu0 0.0
        %1230 = vmatprep.subr.mxu0 0.0
        %1231 = vmatpush2.msra.mxu0 0.0
        %1232 = vmatprep.subr.mxu0 0.0
        %1233 = vmatpush2.msra.mxu0 0.0
        %1234 = vmatprep.subr.mxu0 0.0
        %1235 = vmatpush2.msra.mxu0 0.0
        %1236 = vmatprep.subr.mxu0 0.0
        %1237 = vmatpush2.msra.mxu0 0.0
        %1238 = vmatprep.subr.mxu0 0.0
        %1239 = vmatpush2.msra.mxu0 0.0
        %1240 = vmatprep.mubr.f32.mxu0 0.0
        %1241 = vmatmul.mubr.f32.gmra.mxu0 %v913
        %v1242 = vpop.f32.mrf.mxu0
        %v1243 = vadd.f32 0.0, %v1242
        %v1244 = vpop.f32.mrf.mxu0
        %1245 = vdwg.mxu0
        %v1247 = vsel %vm577, %v1170, 0
        %1249 = vmatprep.subr.mxu0 0.0
        %1250 = vmatpush1.msra.mxu0 0.0
        %1251 = vmatprep.subr.mxu0 0.0
        %1252 = vmatpush1.msra.mxu0 0.0
        %1253 = vmatprep.subr.mxu0 0.0
        %1254 = vmatpush1.msra.mxu0 0.0
        %1255 = vmatprep.subr.mxu0 0.0
        %1256 = vmatpush1.msra.mxu0 0.0
        %1257 = vmatprep.subr.mxu0 0.0
        %1258 = vmatpush1.msra.mxu0 0.0
        %1259 = vmatprep.subr.mxu0 0.0
        %1260 = vmatpush1.msra.mxu0 0.0
        %1261 = vmatprep.subr.mxu0 0.0
        %1262 = vmatpush1.msra.mxu0 0.0
        %1263 = vmatprep.subr.mxu0 0.0
        %1264 = vmatpush1.msra.mxu0 0.0
        %1265 = vmatprep.subr.mxu0 0.0
        %1266 = vmatpush1.msra.mxu0 0.0
        %1267 = vmatprep.subr.mxu0 0.0
        %1268 = vmatpush1.msra.mxu0 0.0
        %1269 = vmatprep.subr.mxu0 0.0
        %1270 = vmatpush1.msra.mxu0 0.0
        %1271 = vmatprep.subr.mxu0 0.0
        %1272 = vmatpush1.msra.mxu0 0.0
        %1273 = vmatprep.subr.mxu0 0.0
        %1274 = vmatpush1.msra.mxu0 0.0
        %1275 = vmatprep.subr.mxu0 0.0
        %1276 = vmatpush1.msra.mxu0 0.0
        %1277 = vmatprep.subr.mxu0 0.0
        %1278 = vmatpush1.msra.mxu0 %v1247
        %1279 = vmatprep.subr.mxu0 0.0
        %1280 = vmatpush1.msra.mxu0 %v1169
        %1281 = vmatprep.subr.mxu0 0.0
        %1282 = vmatpush2.msra.mxu0 0.0
        %1283 = vmatprep.subr.mxu0 0.0
        %1284 = vmatpush2.msra.mxu0 0.0
        %1285 = vmatprep.subr.mxu0 0.0
        %1286 = vmatpush2.msra.mxu0 0.0
        %1287 = vmatprep.subr.mxu0 0.0
        %1288 = vmatpush2.msra.mxu0 0.0
        %1289 = vmatprep.subr.mxu0 0.0
        %1290 = vmatpush2.msra.mxu0 0.0
        %1291 = vmatprep.subr.mxu0 0.0
        %1292 = vmatpush2.msra.mxu0 0.0
        %1293 = vmatprep.subr.mxu0 0.0
        %1294 = vmatpush2.msra.mxu0 0.0
        %1295 = vmatprep.subr.mxu0 0.0
        %1296 = vmatpush2.msra.mxu0 0.0
        %1297 = vmatprep.subr.mxu0 0.0
        %1298 = vmatpush2.msra.mxu0 0.0
        %1299 = vmatprep.subr.mxu0 0.0
        %1300 = vmatpush2.msra.mxu0 0.0
        %1301 = vmatprep.subr.mxu0 0.0
        %1302 = vmatpush2.msra.mxu0 0.0
        %1303 = vmatprep.subr.mxu0 0.0
        %1304 = vmatpush2.msra.mxu0 0.0
        %1305 = vmatprep.subr.mxu0 0.0
        %1306 = vmatpush2.msra.mxu0 0.0
        %1307 = vmatprep.subr.mxu0 0.0
        %1308 = vmatpush2.msra.mxu0 0.0
        %1309 = vmatprep.subr.mxu0 0.0
        %1310 = vmatpush2.msra.mxu0 0.0
        %1311 = vmatprep.subr.mxu0 0.0
        %1312 = vmatpush2.msra.mxu0 0.0
        %1313 = vmatprep.mubr.f32.mxu0 0.0
        %1314 = vmatmul.mubr.f32.gmra.mxu0 %v1004
        %v1315 = vpop.f32.mrf.mxu0
        %v1316 = vadd.f32 %v1243, %v1315
        %v1317 = vpop.f32.mrf.mxu0
        %1318 = vdwg.mxu0
        %v1319 = vld [vmem:[#allocation3 + $0x8] sm:$0xff]
        %v1320 = vld [vmem:[#allocation3 + $0x10] sm:$0xff]
        %v1321 = vld [vmem:[#allocation3 + $0x20] sm:$0xf]
        %v1322 = vld [vmem:[#allocation3 + $0x28] sm:$0xf]
        %1327 = vrot.lane.b32.xlu0 %v1319, 127
        %v1328 = vpop.permute.xlu0 %1327
        %1329 = vrot.lane.b32.xlu0 %v1320, 127
        %v1330 = vpop.permute.xlu0 %1329
        %1331 = vrot.lane.b32.xlu0 %v1321, 127
        %v1332 = vpop.permute.xlu0 %1331
        %1333 = vrot.lane.b32.xlu0 %v1322, 127
        %v1334 = vpop.permute.xlu0 %1333
        %v1335 = vsel %vm818, %v1328, %v1330
        %v1336 = vsel %vm818, %v1332, %v1334
        %v1338 = vsel %vm577, %v1336, 0
        %1340 = vmatprep.subr.mxu0 0.0
        %1341 = vmatpush1.msra.mxu0 0.0
        %1342 = vmatprep.subr.mxu0 0.0
        %1343 = vmatpush1.msra.mxu0 0.0
        %1344 = vmatprep.subr.mxu0 0.0
        %1345 = vmatpush1.msra.mxu0 0.0
        %1346 = vmatprep.subr.mxu0 0.0
        %1347 = vmatpush1.msra.mxu0 0.0
        %1348 = vmatprep.subr.mxu0 0.0
        %1349 = vmatpush1.msra.mxu0 0.0
        %1350 = vmatprep.subr.mxu0 0.0
        %1351 = vmatpush1.msra.mxu0 0.0
        %1352 = vmatprep.subr.mxu0 0.0
        %1353 = vmatpush1.msra.mxu0 0.0
        %1354 = vmatprep.subr.mxu0 0.0
        %1355 = vmatpush1.msra.mxu0 0.0
        %1356 = vmatprep.subr.mxu0 0.0
        %1357 = vmatpush1.msra.mxu0 0.0
        %1358 = vmatprep.subr.mxu0 0.0
        %1359 = vmatpush1.msra.mxu0 0.0
        %1360 = vmatprep.subr.mxu0 0.0
        %1361 = vmatpush1.msra.mxu0 0.0
        %1362 = vmatprep.subr.mxu0 0.0
        %1363 = vmatpush1.msra.mxu0 0.0
        %1364 = vmatprep.subr.mxu0 0.0
        %1365 = vmatpush1.msra.mxu0 0.0
        %1366 = vmatprep.subr.mxu0 0.0
        %1367 = vmatpush1.msra.mxu0 0.0
        %1368 = vmatprep.subr.mxu0 0.0
        %1369 = vmatpush1.msra.mxu0 %v1338
        %1370 = vmatprep.subr.mxu0 0.0
        %1371 = vmatpush1.msra.mxu0 %v1335
        %1372 = vmatprep.subr.mxu0 0.0
        %1373 = vmatpush2.msra.mxu0 0.0
        %1374 = vmatprep.subr.mxu0 0.0
        %1375 = vmatpush2.msra.mxu0 0.0
        %1376 = vmatprep.subr.mxu0 0.0
        %1377 = vmatpush2.msra.mxu0 0.0
        %1378 = vmatprep.subr.mxu0 0.0
        %1379 = vmatpush2.msra.mxu0 0.0
        %1380 = vmatprep.subr.mxu0 0.0
        %1381 = vmatpush2.msra.mxu0 0.0
        %1382 = vmatprep.subr.mxu0 0.0
        %1383 = vmatpush2.msra.mxu0 0.0
        %1384 = vmatprep.subr.mxu0 0.0
        %1385 = vmatpush2.msra.mxu0 0.0
        %1386 = vmatprep.subr.mxu0 0.0
        %1387 = vmatpush2.msra.mxu0 0.0
        %1388 = vmatprep.subr.mxu0 0.0
        %1389 = vmatpush2.msra.mxu0 0.0
        %1390 = vmatprep.subr.mxu0 0.0
        %1391 = vmatpush2.msra.mxu0 0.0
        %1392 = vmatprep.subr.mxu0 0.0
        %1393 = vmatpush2.msra.mxu0 0.0
        %1394 = vmatprep.subr.mxu0 0.0
        %1395 = vmatpush2.msra.mxu0 0.0
        %1396 = vmatprep.subr.mxu0 0.0
        %1397 = vmatpush2.msra.mxu0 0.0
        %1398 = vmatprep.subr.mxu0 0.0
        %1399 = vmatpush2.msra.mxu0 0.0
        %1400 = vmatprep.subr.mxu0 0.0
        %1401 = vmatpush2.msra.mxu0 0.0
        %1402 = vmatprep.subr.mxu0 0.0
        %1403 = vmatpush2.msra.mxu0 0.0
        %1404 = vmatprep.mubr.f32.mxu0 0.0
        %1405 = vmatmul.mubr.f32.gmra.mxu0 %v1079
        %v1406 = vpop.f32.mrf.mxu0
        %v1407 = vadd.f32 0.0, %v1406
        %v1408 = vpop.f32.mrf.mxu0
        %1409 = vdwg.mxu0
        %v1410 = vadd.f32 %v1316, %v1407
        %v1411 = vmul.f32 %v1410, %v1157
        %v1412 = vadd.f32 %v1411, %v1163
        %v1413 = vmax.f32 %v1412, 0.0
        %v1414 = vmul.f32 %v1413, %v548
        %1415 = vst [vmem:[%s539 + $0x8] sm:$0xff] %v1414
        %v1416 = vld [vmem:[#allocation10] sm:$0xff]
        %s1417 = scalar_lea.vmem [#allocation10], 8
        %v1418 = vld [vmem:[%s1417] sm:$0xff]
        %s1419 = scalar_lea.vmem [#allocation10], 16
        %v1420 = vld [vmem:[%s1419] sm:$0xff]
        %v1421 = vld [vmem:[%s8] sm:$0xff]
        %v1422 = vld [vmem:[%s9] sm:$0xff]
        %v1423 = vld [vmem:[%s539] sm:$0xff]
        %v1424 = vld [vmem:[%s539 + $0x8] sm:$0xff]
        %v1425 = vld [vmem:[#allocation4 + $0x8] sm:$0xff]
        %vm1426 = vcmask 64512
        %v1428 = vsel %vm1426, %v1418, 0
        %1430 = vmatprep.subr.mxu0 0.0
        %1431 = vmatpush1.msra.mxu0 0.0
        %1432 = vmatprep.subr.mxu0 0.0
        %1433 = vmatpush1.msra.mxu0 0.0
        %1434 = vmatprep.subr.mxu0 0.0
        %1435 = vmatpush1.msra.mxu0 0.0
        %1436 = vmatprep.subr.mxu0 0.0
        %1437 = vmatpush1.msra.mxu0 0.0
        %1438 = vmatprep.subr.mxu0 0.0
        %1439 = vmatpush1.msra.mxu0 0.0
        %1440 = vmatprep.subr.mxu0 0.0
        %1441 = vmatpush1.msra.mxu0 0.0
        %1442 = vmatprep.subr.mxu0 0.0
        %1443 = vmatpush1.msra.mxu0 0.0
        %1444 = vmatprep.subr.mxu0 0.0
        %1445 = vmatpush1.msra.mxu0 0.0
        %1446 = vmatprep.subr.mxu0 0.0
        %1447 = vmatpush1.msra.mxu0 0.0
        %1448 = vmatprep.subr.mxu0 0.0
        %1449 = vmatpush1.msra.mxu0 0.0
        %1450 = vmatprep.subr.mxu0 0.0
        %1451 = vmatpush1.msra.mxu0 0.0
        %1452 = vmatprep.subr.mxu0 0.0
        %1453 = vmatpush1.msra.mxu0 0.0
        %1454 = vmatprep.subr.mxu0 0.0
        %1455 = vmatpush1.msra.mxu0 0.0
        %1456 = vmatprep.subr.mxu0 0.0
        %1457 = vmatpush1.msra.mxu0 0.0
        %1458 = vmatprep.subr.mxu0 0.0
        %1459 = vmatpush1.msra.mxu0 0.0
        %1460 = vmatprep.subr.mxu0 0.0
        %1461 = vmatpush1.msra.mxu0 %v1425
        %1462 = vmatprep.subr.mxu0 0.0
        %1463 = vmatpush2.msra.mxu0 0.0
        %1464 = vmatprep.subr.mxu0 0.0
        %1465 = vmatpush2.msra.mxu0 0.0
        %1466 = vmatprep.subr.mxu0 0.0
        %1467 = vmatpush2.msra.mxu0 0.0
        %1468 = vmatprep.subr.mxu0 0.0
        %1469 = vmatpush2.msra.mxu0 0.0
        %1470 = vmatprep.subr.mxu0 0.0
        %1471 = vmatpush2.msra.mxu0 0.0
        %1472 = vmatprep.subr.mxu0 0.0
        %1473 = vmatpush2.msra.mxu0 0.0
        %1474 = vmatprep.subr.mxu0 0.0
        %1475 = vmatpush2.msra.mxu0 0.0
        %1476 = vmatprep.subr.mxu0 0.0
        %1477 = vmatpush2.msra.mxu0 0.0
        %1478 = vmatprep.subr.mxu0 0.0
        %1479 = vmatpush2.msra.mxu0 0.0
        %1480 = vmatprep.subr.mxu0 0.0
        %1481 = vmatpush2.msra.mxu0 0.0
        %1482 = vmatprep.subr.mxu0 0.0
        %1483 = vmatpush2.msra.mxu0 0.0
        %1484 = vmatprep.subr.mxu0 0.0
        %1485 = vmatpush2.msra.mxu0 0.0
        %1486 = vmatprep.subr.mxu0 0.0
        %1487 = vmatpush2.msra.mxu0 0.0
        %1488 = vmatprep.subr.mxu0 0.0
        %1489 = vmatpush2.msra.mxu0 0.0
        %1490 = vmatprep.subr.mxu0 0.0
        %1491 = vmatpush2.msra.mxu0 0.0
        %1492 = vmatprep.subr.mxu0 0.0
        %1493 = vmatpush2.msra.mxu0 0.0
        %1494 = vmatprep.mubr.f32.mxu0 0.0
        %1495 = vmatmul.mubr.f32.gmra.mxu0 %v1428
        %v1496 = vpop.f32.mrf.mxu0
        %v1497 = vadd.f32 0.0, %v1496
        %v1498 = vpop.f32.mrf.mxu0
        %1499 = vdwg.mxu0
        %1502 = vrot.lane.b32.xlu0 %v1423, 1
        %v1503 = vpop.permute.xlu0 %1502
        %1504 = vrot.lane.b32.xlu0 %v1424, 1
        %v1505 = vpop.permute.xlu0 %1504
        %v1506 = vsel %vm527, %v1503, %v1505
        %v1509 = vsel %vm1426, %v1416, 0
        %1511 = vmatprep.subr.mxu0 0.0
        %1512 = vmatpush1.msra.mxu0 0.0
        %1513 = vmatprep.subr.mxu0 0.0
        %1514 = vmatpush1.msra.mxu0 0.0
        %1515 = vmatprep.subr.mxu0 0.0
        %1516 = vmatpush1.msra.mxu0 0.0
        %1517 = vmatprep.subr.mxu0 0.0
        %1518 = vmatpush1.msra.mxu0 0.0
        %1519 = vmatprep.subr.mxu0 0.0
        %1520 = vmatpush1.msra.mxu0 0.0
        %1521 = vmatprep.subr.mxu0 0.0
        %1522 = vmatpush1.msra.mxu0 0.0
        %1523 = vmatprep.subr.mxu0 0.0
        %1524 = vmatpush1.msra.mxu0 0.0
        %1525 = vmatprep.subr.mxu0 0.0
        %1526 = vmatpush1.msra.mxu0 0.0
        %1527 = vmatprep.subr.mxu0 0.0
        %1528 = vmatpush1.msra.mxu0 0.0
        %1529 = vmatprep.subr.mxu0 0.0
        %1530 = vmatpush1.msra.mxu0 0.0
        %1531 = vmatprep.subr.mxu0 0.0
        %1532 = vmatpush1.msra.mxu0 0.0
        %1533 = vmatprep.subr.mxu0 0.0
        %1534 = vmatpush1.msra.mxu0 0.0
        %1535 = vmatprep.subr.mxu0 0.0
        %1536 = vmatpush1.msra.mxu0 0.0
        %1537 = vmatprep.subr.mxu0 0.0
        %1538 = vmatpush1.msra.mxu0 0.0
        %1539 = vmatprep.subr.mxu0 0.0
        %1540 = vmatpush1.msra.mxu0 0.0
        %1541 = vmatprep.subr.mxu0 0.0
        %1542 = vmatpush1.msra.mxu0 %v1506
        %1543 = vmatprep.subr.mxu0 0.0
        %1544 = vmatpush2.msra.mxu0 0.0
        %1545 = vmatprep.subr.mxu0 0.0
        %1546 = vmatpush2.msra.mxu0 0.0
        %1547 = vmatprep.subr.mxu0 0.0
        %1548 = vmatpush2.msra.mxu0 0.0
        %1549 = vmatprep.subr.mxu0 0.0
        %1550 = vmatpush2.msra.mxu0 0.0
        %1551 = vmatprep.subr.mxu0 0.0
        %1552 = vmatpush2.msra.mxu0 0.0
        %1553 = vmatprep.subr.mxu0 0.0
        %1554 = vmatpush2.msra.mxu0 0.0
        %1555 = vmatprep.subr.mxu0 0.0
        %1556 = vmatpush2.msra.mxu0 0.0
        %1557 = vmatprep.subr.mxu0 0.0
        %1558 = vmatpush2.msra.mxu0 0.0
        %1559 = vmatprep.subr.mxu0 0.0
        %1560 = vmatpush2.msra.mxu0 0.0
        %1561 = vmatprep.subr.mxu0 0.0
        %1562 = vmatpush2.msra.mxu0 0.0
        %1563 = vmatprep.subr.mxu0 0.0
        %1564 = vmatpush2.msra.mxu0 0.0
        %1565 = vmatprep.subr.mxu0 0.0
        %1566 = vmatpush2.msra.mxu0 0.0
        %1567 = vmatprep.subr.mxu0 0.0
        %1568 = vmatpush2.msra.mxu0 0.0
        %1569 = vmatprep.subr.mxu0 0.0
        %1570 = vmatpush2.msra.mxu0 0.0
        %1571 = vmatprep.subr.mxu0 0.0
        %1572 = vmatpush2.msra.mxu0 0.0
        %1573 = vmatprep.subr.mxu0 0.0
        %1574 = vmatpush2.msra.mxu0 0.0
        %1575 = vmatprep.mubr.f32.mxu0 0.0
        %1576 = vmatmul.mubr.f32.gmra.mxu0 %v1509
        %v1577 = vpop.f32.mrf.mxu0
        %v1578 = vadd.f32 %v1497, %v1577
        %v1579 = vpop.f32.mrf.mxu0
        %1580 = vdwg.mxu0
        %v1582 = vsel %vm1426, %v1420, 0
        %1584 = vmatprep.subr.mxu0 0.0
        %1585 = vmatpush1.msra.mxu0 0.0
        %1586 = vmatprep.subr.mxu0 0.0
        %1587 = vmatpush1.msra.mxu0 0.0
        %1588 = vmatprep.subr.mxu0 0.0
        %1589 = vmatpush1.msra.mxu0 0.0
        %1590 = vmatprep.subr.mxu0 0.0
        %1591 = vmatpush1.msra.mxu0 0.0
        %1592 = vmatprep.subr.mxu0 0.0
        %1593 = vmatpush1.msra.mxu0 0.0
        %1594 = vmatprep.subr.mxu0 0.0
        %1595 = vmatpush1.msra.mxu0 0.0
        %1596 = vmatprep.subr.mxu0 0.0
        %1597 = vmatpush1.msra.mxu0 0.0
        %1598 = vmatprep.subr.mxu0 0.0
        %1599 = vmatpush1.msra.mxu0 0.0
        %1600 = vmatprep.subr.mxu0 0.0
        %1601 = vmatpush1.msra.mxu0 0.0
        %1602 = vmatprep.subr.mxu0 0.0
        %1603 = vmatpush1.msra.mxu0 0.0
        %1604 = vmatprep.subr.mxu0 0.0
        %1605 = vmatpush1.msra.mxu0 0.0
        %1606 = vmatprep.subr.mxu0 0.0
        %1607 = vmatpush1.msra.mxu0 0.0
        %1608 = vmatprep.subr.mxu0 0.0
        %1609 = vmatpush1.msra.mxu0 0.0
        %1610 = vmatprep.subr.mxu0 0.0
        %1611 = vmatpush1.msra.mxu0 0.0
        %1612 = vmatprep.subr.mxu0 0.0
        %1613 = vmatpush1.msra.mxu0 0.0
        %1614 = vmatprep.subr.mxu0 0.0
        %1615 = vmatpush1.msra.mxu0 %v1424
        %1616 = vmatprep.subr.mxu0 0.0
        %1617 = vmatpush2.msra.mxu0 0.0
        %1618 = vmatprep.subr.mxu0 0.0
        %1619 = vmatpush2.msra.mxu0 0.0
        %1620 = vmatprep.subr.mxu0 0.0
        %1621 = vmatpush2.msra.mxu0 0.0
        %1622 = vmatprep.subr.mxu0 0.0
        %1623 = vmatpush2.msra.mxu0 0.0
        %1624 = vmatprep.subr.mxu0 0.0
        %1625 = vmatpush2.msra.mxu0 0.0
        %1626 = vmatprep.subr.mxu0 0.0
        %1627 = vmatpush2.msra.mxu0 0.0
        %1628 = vmatprep.subr.mxu0 0.0
        %1629 = vmatpush2.msra.mxu0 0.0
        %1630 = vmatprep.subr.mxu0 0.0
        %1631 = vmatpush2.msra.mxu0 0.0
        %1632 = vmatprep.subr.mxu0 0.0
        %1633 = vmatpush2.msra.mxu0 0.0
        %1634 = vmatprep.subr.mxu0 0.0
        %1635 = vmatpush2.msra.mxu0 0.0
        %1636 = vmatprep.subr.mxu0 0.0
        %1637 = vmatpush2.msra.mxu0 0.0
        %1638 = vmatprep.subr.mxu0 0.0
        %1639 = vmatpush2.msra.mxu0 0.0
        %1640 = vmatprep.subr.mxu0 0.0
        %1641 = vmatpush2.msra.mxu0 0.0
        %1642 = vmatprep.subr.mxu0 0.0
        %1643 = vmatpush2.msra.mxu0 0.0
        %1644 = vmatprep.subr.mxu0 0.0
        %1645 = vmatpush2.msra.mxu0 0.0
        %1646 = vmatprep.subr.mxu0 0.0
        %1647 = vmatpush2.msra.mxu0 0.0
        %1648 = vmatprep.mubr.f32.mxu0 0.0
        %1649 = vmatmul.mubr.f32.gmra.mxu0 %v1582
        %v1650 = vpop.f32.mrf.mxu0
        %v1651 = vadd.f32 0.0, %v1650
        %v1652 = vpop.f32.mrf.mxu0
        %1653 = vdwg.mxu0
        %v1654 = vadd.f32 %v1578, %v1651
        %1656 = vset.pattern.permute.xlu0 0
        %1657 = vperm.xlu0 %1656, %v1421
        %v1658 = vpop.permute.xlu0 %1657
        %v1660 = vmul.f32 %v1654, %v1658
        %1662 = vset.pattern.permute.xlu0 0
        %1663 = vperm.xlu0 %1662, %v1422
        %v1664 = vpop.permute.xlu0 %1663
        %v1666 = vadd.f32 %v1660, %v1664
        %v1667 = vmax.f32 %v1666, 0.0
        %v1668 = vmul.f32 %v1667, %v548
        %1669 = vst [vmem:[#allocation3 + $0x8] sm:$0xff] %v1668
        %v1670 = vld [vmem:[#allocation4 + $0x8] sm:$0xff]
        %v1671 = vld [vmem:[%s539 + $0x8] sm:$0xff]
        %1672 = vmatprep.subr.mxu0 0.0
        %1673 = vmatpush1.msra.mxu0 0.0
        %1674 = vmatprep.subr.mxu0 0.0
        %1675 = vmatpush1.msra.mxu0 0.0
        %1676 = vmatprep.subr.mxu0 0.0
        %1677 = vmatpush1.msra.mxu0 0.0
        %1678 = vmatprep.subr.mxu0 0.0
        %1679 = vmatpush1.msra.mxu0 0.0
        %1680 = vmatprep.subr.mxu0 0.0
        %1681 = vmatpush1.msra.mxu0 0.0
        %1682 = vmatprep.subr.mxu0 0.0
        %1683 = vmatpush1.msra.mxu0 0.0
        %1684 = vmatprep.subr.mxu0 0.0
        %1685 = vmatpush1.msra.mxu0 0.0
        %1686 = vmatprep.subr.mxu0 0.0
        %1687 = vmatpush1.msra.mxu0 0.0
        %1688 = vmatprep.subr.mxu0 0.0
        %1689 = vmatpush1.msra.mxu0 0.0
        %1690 = vmatprep.subr.mxu0 0.0
        %1691 = vmatpush1.msra.mxu0 0.0
        %1692 = vmatprep.subr.mxu0 0.0
        %1693 = vmatpush1.msra.mxu0 0.0
        %1694 = vmatprep.subr.mxu0 0.0
        %1695 = vmatpush1.msra.mxu0 0.0
        %1696 = vmatprep.subr.mxu0 0.0
        %1697 = vmatpush1.msra.mxu0 0.0
        %1698 = vmatprep.subr.mxu0 0.0
        %1699 = vmatpush1.msra.mxu0 0.0
        %1700 = vmatprep.subr.mxu0 0.0
        %1701 = vmatpush1.msra.mxu0 0.0
        %1702 = vmatprep.subr.mxu0 0.0
        %1703 = vmatpush1.msra.mxu0 %v1671
        %1704 = vmatprep.subr.mxu0 0.0
        %1705 = vmatpush2.msra.mxu0 0.0
        %1706 = vmatprep.subr.mxu0 0.0
        %1707 = vmatpush2.msra.mxu0 0.0
        %1708 = vmatprep.subr.mxu0 0.0
        %1709 = vmatpush2.msra.mxu0 0.0
        %1710 = vmatprep.subr.mxu0 0.0
        %1711 = vmatpush2.msra.mxu0 0.0
        %1712 = vmatprep.subr.mxu0 0.0
        %1713 = vmatpush2.msra.mxu0 0.0
        %1714 = vmatprep.subr.mxu0 0.0
        %1715 = vmatpush2.msra.mxu0 0.0
        %1716 = vmatprep.subr.mxu0 0.0
        %1717 = vmatpush2.msra.mxu0 0.0
        %1718 = vmatprep.subr.mxu0 0.0
        %1719 = vmatpush2.msra.mxu0 0.0
        %1720 = vmatprep.subr.mxu0 0.0
        %1721 = vmatpush2.msra.mxu0 0.0
        %1722 = vmatprep.subr.mxu0 0.0
        %1723 = vmatpush2.msra.mxu0 0.0
        %1724 = vmatprep.subr.mxu0 0.0
        %1725 = vmatpush2.msra.mxu0 0.0
        %1726 = vmatprep.subr.mxu0 0.0
        %1727 = vmatpush2.msra.mxu0 0.0
        %1728 = vmatprep.subr.mxu0 0.0
        %1729 = vmatpush2.msra.mxu0 0.0
        %1730 = vmatprep.subr.mxu0 0.0
        %1731 = vmatpush2.msra.mxu0 0.0
        %1732 = vmatprep.subr.mxu0 0.0
        %1733 = vmatpush2.msra.mxu0 0.0
        %1734 = vmatprep.subr.mxu0 0.0
        %1735 = vmatpush2.msra.mxu0 0.0
        %1736 = vmatprep.mubr.f32.mxu0 0.0
        %1737 = vmatmul.mubr.f32.gmra.mxu0 %v1428
        %v1738 = vpop.f32.mrf.mxu0
        %v1739 = vadd.f32 0.0, %v1738
        %v1740 = vpop.f32.mrf.mxu0
        %1741 = vdwg.mxu0
        %1742 = vmatprep.subr.mxu0 0.0
        %1743 = vmatpush1.msra.mxu0 0.0
        %1744 = vmatprep.subr.mxu0 0.0
        %1745 = vmatpush1.msra.mxu0 0.0
        %1746 = vmatprep.subr.mxu0 0.0
        %1747 = vmatpush1.msra.mxu0 0.0
        %1748 = vmatprep.subr.mxu0 0.0
        %1749 = vmatpush1.msra.mxu0 0.0
        %1750 = vmatprep.subr.mxu0 0.0
        %1751 = vmatpush1.msra.mxu0 0.0
        %1752 = vmatprep.subr.mxu0 0.0
        %1753 = vmatpush1.msra.mxu0 0.0
        %1754 = vmatprep.subr.mxu0 0.0
        %1755 = vmatpush1.msra.mxu0 0.0
        %1756 = vmatprep.subr.mxu0 0.0
        %1757 = vmatpush1.msra.mxu0 0.0
        %1758 = vmatprep.subr.mxu0 0.0
        %1759 = vmatpush1.msra.mxu0 0.0
        %1760 = vmatprep.subr.mxu0 0.0
        %1761 = vmatpush1.msra.mxu0 0.0
        %1762 = vmatprep.subr.mxu0 0.0
        %1763 = vmatpush1.msra.mxu0 0.0
        %1764 = vmatprep.subr.mxu0 0.0
        %1765 = vmatpush1.msra.mxu0 0.0
        %1766 = vmatprep.subr.mxu0 0.0
        %1767 = vmatpush1.msra.mxu0 0.0
        %1768 = vmatprep.subr.mxu0 0.0
        %1769 = vmatpush1.msra.mxu0 0.0
        %1770 = vmatprep.subr.mxu0 0.0
        %1771 = vmatpush1.msra.mxu0 0.0
        %1772 = vmatprep.subr.mxu0 0.0
        %1773 = vmatpush1.msra.mxu0 %v1670
        %1774 = vmatprep.subr.mxu0 0.0
        %1775 = vmatpush2.msra.mxu0 0.0
        %1776 = vmatprep.subr.mxu0 0.0
        %1777 = vmatpush2.msra.mxu0 0.0
        %1778 = vmatprep.subr.mxu0 0.0
        %1779 = vmatpush2.msra.mxu0 0.0
        %1780 = vmatprep.subr.mxu0 0.0
        %1781 = vmatpush2.msra.mxu0 0.0
        %1782 = vmatprep.subr.mxu0 0.0
        %1783 = vmatpush2.msra.mxu0 0.0
        %1784 = vmatprep.subr.mxu0 0.0
        %1785 = vmatpush2.msra.mxu0 0.0
        %1786 = vmatprep.subr.mxu0 0.0
        %1787 = vmatpush2.msra.mxu0 0.0
        %1788 = vmatprep.subr.mxu0 0.0
        %1789 = vmatpush2.msra.mxu0 0.0
        %1790 = vmatprep.subr.mxu0 0.0
        %1791 = vmatpush2.msra.mxu0 0.0
        %1792 = vmatprep.subr.mxu0 0.0
        %1793 = vmatpush2.msra.mxu0 0.0
        %1794 = vmatprep.subr.mxu0 0.0
        %1795 = vmatpush2.msra.mxu0 0.0
        %1796 = vmatprep.subr.mxu0 0.0
        %1797 = vmatpush2.msra.mxu0 0.0
        %1798 = vmatprep.subr.mxu0 0.0
        %1799 = vmatpush2.msra.mxu0 0.0
        %1800 = vmatprep.subr.mxu0 0.0
        %1801 = vmatpush2.msra.mxu0 0.0
        %1802 = vmatprep.subr.mxu0 0.0
        %1803 = vmatpush2.msra.mxu0 0.0
        %1804 = vmatprep.subr.mxu0 0.0
        %1805 = vmatpush2.msra.mxu0 0.0
        %1806 = vmatprep.mubr.f32.mxu0 0.0
        %1807 = vmatmul.mubr.f32.gmra.mxu0 %v1509
        %v1808 = vpop.f32.mrf.mxu0
        %v1809 = vadd.f32 %v1739, %v1808
        %v1810 = vpop.f32.mrf.mxu0
        %1811 = vdwg.mxu0
        %v1812 = vld [vmem:[#allocation4 + $0x8] sm:$0xff]
        %v1813 = vld [vmem:[#allocation4 + $0x10] sm:$0xff]
        %1816 = vrot.lane.b32.xlu0 %v1812, 127
        %v1817 = vpop.permute.xlu0 %1816
        %1818 = vrot.lane.b32.xlu0 %v1813, 127
        %v1819 = vpop.permute.xlu0 %1818
        %v1820 = vsel %vm818, %v1817, %v1819
        %1822 = vmatprep.subr.mxu0 0.0
        %1823 = vmatpush1.msra.mxu0 0.0
        %1824 = vmatprep.subr.mxu0 0.0
        %1825 = vmatpush1.msra.mxu0 0.0
        %1826 = vmatprep.subr.mxu0 0.0
        %1827 = vmatpush1.msra.mxu0 0.0
        %1828 = vmatprep.subr.mxu0 0.0
        %1829 = vmatpush1.msra.mxu0 0.0
        %1830 = vmatprep.subr.mxu0 0.0
        %1831 = vmatpush1.msra.mxu0 0.0
        %1832 = vmatprep.subr.mxu0 0.0
        %1833 = vmatpush1.msra.mxu0 0.0
        %1834 = vmatprep.subr.mxu0 0.0
        %1835 = vmatpush1.msra.mxu0 0.0
        %1836 = vmatprep.subr.mxu0 0.0
        %1837 = vmatpush1.msra.mxu0 0.0
        %1838 = vmatprep.subr.mxu0 0.0
        %1839 = vmatpush1.msra.mxu0 0.0
        %1840 = vmatprep.subr.mxu0 0.0
        %1841 = vmatpush1.msra.mxu0 0.0
        %1842 = vmatprep.subr.mxu0 0.0
        %1843 = vmatpush1.msra.mxu0 0.0
        %1844 = vmatprep.subr.mxu0 0.0
        %1845 = vmatpush1.msra.mxu0 0.0
        %1846 = vmatprep.subr.mxu0 0.0
        %1847 = vmatpush1.msra.mxu0 0.0
        %1848 = vmatprep.subr.mxu0 0.0
        %1849 = vmatpush1.msra.mxu0 0.0
        %1850 = vmatprep.subr.mxu0 0.0
        %1851 = vmatpush1.msra.mxu0 0.0
        %1852 = vmatprep.subr.mxu0 0.0
        %1853 = vmatpush1.msra.mxu0 %v1820
        %1854 = vmatprep.subr.mxu0 0.0
        %1855 = vmatpush2.msra.mxu0 0.0
        %1856 = vmatprep.subr.mxu0 0.0
        %1857 = vmatpush2.msra.mxu0 0.0
        %1858 = vmatprep.subr.mxu0 0.0
        %1859 = vmatpush2.msra.mxu0 0.0
        %1860 = vmatprep.subr.mxu0 0.0
        %1861 = vmatpush2.msra.mxu0 0.0
        %1862 = vmatprep.subr.mxu0 0.0
        %1863 = vmatpush2.msra.mxu0 0.0
        %1864 = vmatprep.subr.mxu0 0.0
        %1865 = vmatpush2.msra.mxu0 0.0
        %1866 = vmatprep.subr.mxu0 0.0
        %1867 = vmatpush2.msra.mxu0 0.0
        %1868 = vmatprep.subr.mxu0 0.0
        %1869 = vmatpush2.msra.mxu0 0.0
        %1870 = vmatprep.subr.mxu0 0.0
        %1871 = vmatpush2.msra.mxu0 0.0
        %1872 = vmatprep.subr.mxu0 0.0
        %1873 = vmatpush2.msra.mxu0 0.0
        %1874 = vmatprep.subr.mxu0 0.0
        %1875 = vmatpush2.msra.mxu0 0.0
        %1876 = vmatprep.subr.mxu0 0.0
        %1877 = vmatpush2.msra.mxu0 0.0
        %1878 = vmatprep.subr.mxu0 0.0
        %1879 = vmatpush2.msra.mxu0 0.0
        %1880 = vmatprep.subr.mxu0 0.0
        %1881 = vmatpush2.msra.mxu0 0.0
        %1882 = vmatprep.subr.mxu0 0.0
        %1883 = vmatpush2.msra.mxu0 0.0
        %1884 = vmatprep.subr.mxu0 0.0
        %1885 = vmatpush2.msra.mxu0 0.0
        %1886 = vmatprep.mubr.f32.mxu0 0.0
        %1887 = vmatmul.mubr.f32.gmra.mxu0 %v1582
        %v1888 = vpop.f32.mrf.mxu0
        %v1889 = vadd.f32 0.0, %v1888
        %v1890 = vpop.f32.mrf.mxu0
        %1891 = vdwg.mxu0
        %v1892 = vadd.f32 %v1809, %v1889
        %v1893 = vmul.f32 %v1892, %v1658
        %v1894 = vadd.f32 %v1893, %v1664
        %v1895 = vmax.f32 %v1894, 0.0
        %v1896 = vmul.f32 %v1895, %v548
        %1897 = vst [vmem:[%s534 + $0x8] sm:$0xff] %v1896
        %v1898 = vld [vmem:[#allocation11] sm:$0xff]
        %s1899 = scalar_lea.vmem [#allocation11], 8
        %v1900 = vld [vmem:[%s1899] sm:$0xff]
        %s1901 = scalar_lea.vmem [#allocation11], 16
        %v1902 = vld [vmem:[%s1901] sm:$0xff]
        %v1903 = vld [vmem:[%s11] sm:$0xff]
        %v1904 = vld [vmem:[%s12] sm:$0xff]
        %v1905 = vld [vmem:[%s534] sm:$0xff]
        %v1906 = vld [vmem:[%s534 + $0x8] sm:$0xff]
        %v1907 = vld [vmem:[#allocation3 + $0x8] sm:$0xff]
        %v1909 = vsel %vm1426, %v1900, 0
        %1911 = vmatprep.subr.mxu0 0.0
        %1912 = vmatpush1.msra.mxu0 0.0
        %1913 = vmatprep.subr.mxu0 0.0
        %1914 = vmatpush1.msra.mxu0 0.0
        %1915 = vmatprep.subr.mxu0 0.0
        %1916 = vmatpush1.msra.mxu0 0.0
        %1917 = vmatprep.subr.mxu0 0.0
        %1918 = vmatpush1.msra.mxu0 0.0
        %1919 = vmatprep.subr.mxu0 0.0
        %1920 = vmatpush1.msra.mxu0 0.0
        %1921 = vmatprep.subr.mxu0 0.0
        %1922 = vmatpush1.msra.mxu0 0.0
        %1923 = vmatprep.subr.mxu0 0.0
        %1924 = vmatpush1.msra.mxu0 0.0
        %1925 = vmatprep.subr.mxu0 0.0
        %1926 = vmatpush1.msra.mxu0 0.0
        %1927 = vmatprep.subr.mxu0 0.0
        %1928 = vmatpush1.msra.mxu0 0.0
        %1929 = vmatprep.subr.mxu0 0.0
        %1930 = vmatpush1.msra.mxu0 0.0
        %1931 = vmatprep.subr.mxu0 0.0
        %1932 = vmatpush1.msra.mxu0 0.0
        %1933 = vmatprep.subr.mxu0 0.0
        %1934 = vmatpush1.msra.mxu0 0.0
        %1935 = vmatprep.subr.mxu0 0.0
        %1936 = vmatpush1.msra.mxu0 0.0
        %1937 = vmatprep.subr.mxu0 0.0
        %1938 = vmatpush1.msra.mxu0 0.0
        %1939 = vmatprep.subr.mxu0 0.0
        %1940 = vmatpush1.msra.mxu0 0.0
        %1941 = vmatprep.subr.mxu0 0.0
        %1942 = vmatpush1.msra.mxu0 %v1907
        %1943 = vmatprep.subr.mxu0 0.0
        %1944 = vmatpush2.msra.mxu0 0.0
        %1945 = vmatprep.subr.mxu0 0.0
        %1946 = vmatpush2.msra.mxu0 0.0
        %1947 = vmatprep.subr.mxu0 0.0
        %1948 = vmatpush2.msra.mxu0 0.0
        %1949 = vmatprep.subr.mxu0 0.0
        %1950 = vmatpush2.msra.mxu0 0.0
        %1951 = vmatprep.subr.mxu0 0.0
        %1952 = vmatpush2.msra.mxu0 0.0
        %1953 = vmatprep.subr.mxu0 0.0
        %1954 = vmatpush2.msra.mxu0 0.0
        %1955 = vmatprep.subr.mxu0 0.0
        %1956 = vmatpush2.msra.mxu0 0.0
        %1957 = vmatprep.subr.mxu0 0.0
        %1958 = vmatpush2.msra.mxu0 0.0
        %1959 = vmatprep.subr.mxu0 0.0
        %1960 = vmatpush2.msra.mxu0 0.0
        %1961 = vmatprep.subr.mxu0 0.0
        %1962 = vmatpush2.msra.mxu0 0.0
        %1963 = vmatprep.subr.mxu0 0.0
        %1964 = vmatpush2.msra.mxu0 0.0
        %1965 = vmatprep.subr.mxu0 0.0
        %1966 = vmatpush2.msra.mxu0 0.0
        %1967 = vmatprep.subr.mxu0 0.0
        %1968 = vmatpush2.msra.mxu0 0.0
        %1969 = vmatprep.subr.mxu0 0.0
        %1970 = vmatpush2.msra.mxu0 0.0
        %1971 = vmatprep.subr.mxu0 0.0
        %1972 = vmatpush2.msra.mxu0 0.0
        %1973 = vmatprep.subr.mxu0 0.0
        %1974 = vmatpush2.msra.mxu0 0.0
        %1975 = vmatprep.mubr.f32.mxu0 0.0
        %1976 = vmatmul.mubr.f32.gmra.mxu0 %v1909
        %v1977 = vpop.f32.mrf.mxu0
        %v1978 = vadd.f32 0.0, %v1977
        %v1979 = vpop.f32.mrf.mxu0
        %1980 = vdwg.mxu0
        %1983 = vrot.lane.b32.xlu0 %v1905, 1
        %v1984 = vpop.permute.xlu0 %1983
        %1985 = vrot.lane.b32.xlu0 %v1906, 1
        %v1986 = vpop.permute.xlu0 %1985
        %v1987 = vsel %vm527, %v1984, %v1986
        %v1990 = vsel %vm1426, %v1898, 0
        %1992 = vmatprep.subr.mxu0 0.0
        %1993 = vmatpush1.msra.mxu0 0.0
        %1994 = vmatprep.subr.mxu0 0.0
        %1995 = vmatpush1.msra.mxu0 0.0
        %1996 = vmatprep.subr.mxu0 0.0
        %1997 = vmatpush1.msra.mxu0 0.0
        %1998 = vmatprep.subr.mxu0 0.0
        %1999 = vmatpush1.msra.mxu0 0.0
        %2000 = vmatprep.subr.mxu0 0.0
        %2001 = vmatpush1.msra.mxu0 0.0
        %2002 = vmatprep.subr.mxu0 0.0
        %2003 = vmatpush1.msra.mxu0 0.0
        %2004 = vmatprep.subr.mxu0 0.0
        %2005 = vmatpush1.msra.mxu0 0.0
        %2006 = vmatprep.subr.mxu0 0.0
        %2007 = vmatpush1.msra.mxu0 0.0
        %2008 = vmatprep.subr.mxu0 0.0
        %2009 = vmatpush1.msra.mxu0 0.0
        %2010 = vmatprep.subr.mxu0 0.0
        %2011 = vmatpush1.msra.mxu0 0.0
        %2012 = vmatprep.subr.mxu0 0.0
        %2013 = vmatpush1.msra.mxu0 0.0
        %2014 = vmatprep.subr.mxu0 0.0
        %2015 = vmatpush1.msra.mxu0 0.0
        %2016 = vmatprep.subr.mxu0 0.0
        %2017 = vmatpush1.msra.mxu0 0.0
        %2018 = vmatprep.subr.mxu0 0.0
        %2019 = vmatpush1.msra.mxu0 0.0
        %2020 = vmatprep.subr.mxu0 0.0
        %2021 = vmatpush1.msra.mxu0 0.0
        %2022 = vmatprep.subr.mxu0 0.0
        %2023 = vmatpush1.msra.mxu0 %v1987
        %2024 = vmatprep.subr.mxu0 0.0
        %2025 = vmatpush2.msra.mxu0 0.0
        %2026 = vmatprep.subr.mxu0 0.0
        %2027 = vmatpush2.msra.mxu0 0.0
        %2028 = vmatprep.subr.mxu0 0.0
        %2029 = vmatpush2.msra.mxu0 0.0
        %2030 = vmatprep.subr.mxu0 0.0
        %2031 = vmatpush2.msra.mxu0 0.0
        %2032 = vmatprep.subr.mxu0 0.0
        %2033 = vmatpush2.msra.mxu0 0.0
        %2034 = vmatprep.subr.mxu0 0.0
        %2035 = vmatpush2.msra.mxu0 0.0
        %2036 = vmatprep.subr.mxu0 0.0
        %2037 = vmatpush2.msra.mxu0 0.0
        %2038 = vmatprep.subr.mxu0 0.0
        %2039 = vmatpush2.msra.mxu0 0.0
        %2040 = vmatprep.subr.mxu0 0.0
        %2041 = vmatpush2.msra.mxu0 0.0
        %2042 = vmatprep.subr.mxu0 0.0
        %2043 = vmatpush2.msra.mxu0 0.0
        %2044 = vmatprep.subr.mxu0 0.0
        %2045 = vmatpush2.msra.mxu0 0.0
        %2046 = vmatprep.subr.mxu0 0.0
        %2047 = vmatpush2.msra.mxu0 0.0
        %2048 = vmatprep.subr.mxu0 0.0
        %2049 = vmatpush2.msra.mxu0 0.0
        %2050 = vmatprep.subr.mxu0 0.0
        %2051 = vmatpush2.msra.mxu0 0.0
        %2052 = vmatprep.subr.mxu0 0.0
        %2053 = vmatpush2.msra.mxu0 0.0
        %2054 = vmatprep.subr.mxu0 0.0
        %2055 = vmatpush2.msra.mxu0 0.0
        %2056 = vmatprep.mubr.f32.mxu0 0.0
        %2057 = vmatmul.mubr.f32.gmra.mxu0 %v1990
        %v2058 = vpop.f32.mrf.mxu0
        %v2059 = vadd.f32 %v1978, %v2058
        %v2060 = vpop.f32.mrf.mxu0
        %2061 = vdwg.mxu0
        %v2063 = vsel %vm1426, %v1902, 0
        %2065 = vmatprep.subr.mxu0 0.0
        %2066 = vmatpush1.msra.mxu0 0.0
        %2067 = vmatprep.subr.mxu0 0.0
        %2068 = vmatpush1.msra.mxu0 0.0
        %2069 = vmatprep.subr.mxu0 0.0
        %2070 = vmatpush1.msra.mxu0 0.0
        %2071 = vmatprep.subr.mxu0 0.0
        %2072 = vmatpush1.msra.mxu0 0.0
        %2073 = vmatprep.subr.mxu0 0.0
        %2074 = vmatpush1.msra.mxu0 0.0
        %2075 = vmatprep.subr.mxu0 0.0
        %2076 = vmatpush1.msra.mxu0 0.0
        %2077 = vmatprep.subr.mxu0 0.0
        %2078 = vmatpush1.msra.mxu0 0.0
        %2079 = vmatprep.subr.mxu0 0.0
        %2080 = vmatpush1.msra.mxu0 0.0
        %2081 = vmatprep.subr.mxu0 0.0
        %2082 = vmatpush1.msra.mxu0 0.0
        %2083 = vmatprep.subr.mxu0 0.0
        %2084 = vmatpush1.msra.mxu0 0.0
        %2085 = vmatprep.subr.mxu0 0.0
        %2086 = vmatpush1.msra.mxu0 0.0
        %2087 = vmatprep.subr.mxu0 0.0
        %2088 = vmatpush1.msra.mxu0 0.0
        %2089 = vmatprep.subr.mxu0 0.0
        %2090 = vmatpush1.msra.mxu0 0.0
        %2091 = vmatprep.subr.mxu0 0.0
        %2092 = vmatpush1.msra.mxu0 0.0
        %2093 = vmatprep.subr.mxu0 0.0
        %2094 = vmatpush1.msra.mxu0 0.0
        %2095 = vmatprep.subr.mxu0 0.0
        %2096 = vmatpush1.msra.mxu0 %v1906
        %2097 = vmatprep.subr.mxu0 0.0
        %2098 = vmatpush2.msra.mxu0 0.0
        %2099 = vmatprep.subr.mxu0 0.0
        %2100 = vmatpush2.msra.mxu0 0.0
        %2101 = vmatprep.subr.mxu0 0.0
        %2102 = vmatpush2.msra.mxu0 0.0
        %2103 = vmatprep.subr.mxu0 0.0
        %2104 = vmatpush2.msra.mxu0 0.0
        %2105 = vmatprep.subr.mxu0 0.0
        %2106 = vmatpush2.msra.mxu0 0.0
        %2107 = vmatprep.subr.mxu0 0.0
        %2108 = vmatpush2.msra.mxu0 0.0
        %2109 = vmatprep.subr.mxu0 0.0
        %2110 = vmatpush2.msra.mxu0 0.0
        %2111 = vmatprep.subr.mxu0 0.0
        %2112 = vmatpush2.msra.mxu0 0.0
        %2113 = vmatprep.subr.mxu0 0.0
        %2114 = vmatpush2.msra.mxu0 0.0
        %2115 = vmatprep.subr.mxu0 0.0
        %2116 = vmatpush2.msra.mxu0 0.0
        %2117 = vmatprep.subr.mxu0 0.0
        %2118 = vmatpush2.msra.mxu0 0.0
        %2119 = vmatprep.subr.mxu0 0.0
        %2120 = vmatpush2.msra.mxu0 0.0
        %2121 = vmatprep.subr.mxu0 0.0
        %2122 = vmatpush2.msra.mxu0 0.0
        %2123 = vmatprep.subr.mxu0 0.0
        %2124 = vmatpush2.msra.mxu0 0.0
        %2125 = vmatprep.subr.mxu0 0.0
        %2126 = vmatpush2.msra.mxu0 0.0
        %2127 = vmatprep.subr.mxu0 0.0
        %2128 = vmatpush2.msra.mxu0 0.0
        %2129 = vmatprep.mubr.f32.mxu0 0.0
        %2130 = vmatmul.mubr.f32.gmra.mxu0 %v2063
        %v2131 = vpop.f32.mrf.mxu0
        %v2132 = vadd.f32 0.0, %v2131
        %v2133 = vpop.f32.mrf.mxu0
        %2134 = vdwg.mxu0
        %v2135 = vadd.f32 %v2059, %v2132
        %2137 = vset.pattern.permute.xlu0 0
        %2138 = vperm.xlu0 %2137, %v1903
        %v2139 = vpop.permute.xlu0 %2138
        %v2141 = vmul.f32 %v2135, %v2139
        %2143 = vset.pattern.permute.xlu0 0
        %2144 = vperm.xlu0 %2143, %v1904
        %v2145 = vpop.permute.xlu0 %2144
        %v2147 = vadd.f32 %v2141, %v2145
        %v2148 = vmax.f32 %v2147, 0.0
        %2149 = vst [vmem:[%s514] sm:$0xff] %v2148
        %v2150 = vld [vmem:[#allocation3 + $0x8] sm:$0xff]
        %v2151 = vld [vmem:[%s534 + $0x8] sm:$0xff]
        %2152 = vmatprep.subr.mxu0 0.0
        %2153 = vmatpush1.msra.mxu0 0.0
        %2154 = vmatprep.subr.mxu0 0.0
        %2155 = vmatpush1.msra.mxu0 0.0
        %2156 = vmatprep.subr.mxu0 0.0
        %2157 = vmatpush1.msra.mxu0 0.0
        %2158 = vmatprep.subr.mxu0 0.0
        %2159 = vmatpush1.msra.mxu0 0.0
        %2160 = vmatprep.subr.mxu0 0.0
        %2161 = vmatpush1.msra.mxu0 0.0
        %2162 = vmatprep.subr.mxu0 0.0
        %2163 = vmatpush1.msra.mxu0 0.0
        %2164 = vmatprep.subr.mxu0 0.0
        %2165 = vmatpush1.msra.mxu0 0.0
        %2166 = vmatprep.subr.mxu0 0.0
        %2167 = vmatpush1.msra.mxu0 0.0
        %2168 = vmatprep.subr.mxu0 0.0
        %2169 = vmatpush1.msra.mxu0 0.0
        %2170 = vmatprep.subr.mxu0 0.0
        %2171 = vmatpush1.msra.mxu0 0.0
        %2172 = vmatprep.subr.mxu0 0.0
        %2173 = vmatpush1.msra.mxu0 0.0
        %2174 = vmatprep.subr.mxu0 0.0
        %2175 = vmatpush1.msra.mxu0 0.0
        %2176 = vmatprep.subr.mxu0 0.0
        %2177 = vmatpush1.msra.mxu0 0.0
        %2178 = vmatprep.subr.mxu0 0.0
        %2179 = vmatpush1.msra.mxu0 0.0
        %2180 = vmatprep.subr.mxu0 0.0
        %2181 = vmatpush1.msra.mxu0 0.0
        %2182 = vmatprep.subr.mxu0 0.0
        %2183 = vmatpush1.msra.mxu0 %v2151
        %2184 = vmatprep.subr.mxu0 0.0
        %2185 = vmatpush2.msra.mxu0 0.0
        %2186 = vmatprep.subr.mxu0 0.0
        %2187 = vmatpush2.msra.mxu0 0.0
        %2188 = vmatprep.subr.mxu0 0.0
        %2189 = vmatpush2.msra.mxu0 0.0
        %2190 = vmatprep.subr.mxu0 0.0
        %2191 = vmatpush2.msra.mxu0 0.0
        %2192 = vmatprep.subr.mxu0 0.0
        %2193 = vmatpush2.msra.mxu0 0.0
        %2194 = vmatprep.subr.mxu0 0.0
        %2195 = vmatpush2.msra.mxu0 0.0
        %2196 = vmatprep.subr.mxu0 0.0
        %2197 = vmatpush2.msra.mxu0 0.0
        %2198 = vmatprep.subr.mxu0 0.0
        %2199 = vmatpush2.msra.mxu0 0.0
        %2200 = vmatprep.subr.mxu0 0.0
        %2201 = vmatpush2.msra.mxu0 0.0
        %2202 = vmatprep.subr.mxu0 0.0
        %2203 = vmatpush2.msra.mxu0 0.0
        %2204 = vmatprep.subr.mxu0 0.0
        %2205 = vmatpush2.msra.mxu0 0.0
        %2206 = vmatprep.subr.mxu0 0.0
        %2207 = vmatpush2.msra.mxu0 0.0
        %2208 = vmatprep.subr.mxu0 0.0
        %2209 = vmatpush2.msra.mxu0 0.0
        %2210 = vmatprep.subr.mxu0 0.0
        %2211 = vmatpush2.msra.mxu0 0.0
        %2212 = vmatprep.subr.mxu0 0.0
        %2213 = vmatpush2.msra.mxu0 0.0
        %2214 = vmatprep.subr.mxu0 0.0
        %2215 = vmatpush2.msra.mxu0 0.0
        %2216 = vmatprep.mubr.f32.mxu0 0.0
        %2217 = vmatmul.mubr.f32.gmra.mxu0 %v1909
        %v2218 = vpop.f32.mrf.mxu0
        %v2219 = vadd.f32 0.0, %v2218
        %v2220 = vpop.f32.mrf.mxu0
        %2221 = vdwg.mxu0
        %2222 = vmatprep.subr.mxu0 0.0
        %2223 = vmatpush1.msra.mxu0 0.0
        %2224 = vmatprep.subr.mxu0 0.0
        %2225 = vmatpush1.msra.mxu0 0.0
        %2226 = vmatprep.subr.mxu0 0.0
        %2227 = vmatpush1.msra.mxu0 0.0
        %2228 = vmatprep.subr.mxu0 0.0
        %2229 = vmatpush1.msra.mxu0 0.0
        %2230 = vmatprep.subr.mxu0 0.0
        %2231 = vmatpush1.msra.mxu0 0.0
        %2232 = vmatprep.subr.mxu0 0.0
        %2233 = vmatpush1.msra.mxu0 0.0
        %2234 = vmatprep.subr.mxu0 0.0
        %2235 = vmatpush1.msra.mxu0 0.0
        %2236 = vmatprep.subr.mxu0 0.0
        %2237 = vmatpush1.msra.mxu0 0.0
        %2238 = vmatprep.subr.mxu0 0.0
        %2239 = vmatpush1.msra.mxu0 0.0
        %2240 = vmatprep.subr.mxu0 0.0
        %2241 = vmatpush1.msra.mxu0 0.0
        %2242 = vmatprep.subr.mxu0 0.0
        %2243 = vmatpush1.msra.mxu0 0.0
        %2244 = vmatprep.subr.mxu0 0.0
        %2245 = vmatpush1.msra.mxu0 0.0
        %2246 = vmatprep.subr.mxu0 0.0
        %2247 = vmatpush1.msra.mxu0 0.0
        %2248 = vmatprep.subr.mxu0 0.0
        %2249 = vmatpush1.msra.mxu0 0.0
        %2250 = vmatprep.subr.mxu0 0.0
        %2251 = vmatpush1.msra.mxu0 0.0
        %2252 = vmatprep.subr.mxu0 0.0
        %2253 = vmatpush1.msra.mxu0 %v2150
        %2254 = vmatprep.subr.mxu0 0.0
        %2255 = vmatpush2.msra.mxu0 0.0
        %2256 = vmatprep.subr.mxu0 0.0
        %2257 = vmatpush2.msra.mxu0 0.0
        %2258 = vmatprep.subr.mxu0 0.0
        %2259 = vmatpush2.msra.mxu0 0.0
        %2260 = vmatprep.subr.mxu0 0.0
        %2261 = vmatpush2.msra.mxu0 0.0
        %2262 = vmatprep.subr.mxu0 0.0
        %2263 = vmatpush2.msra.mxu0 0.0
        %2264 = vmatprep.subr.mxu0 0.0
        %2265 = vmatpush2.msra.mxu0 0.0
        %2266 = vmatprep.subr.mxu0 0.0
        %2267 = vmatpush2.msra.mxu0 0.0
        %2268 = vmatprep.subr.mxu0 0.0
        %2269 = vmatpush2.msra.mxu0 0.0
        %2270 = vmatprep.subr.mxu0 0.0
        %2271 = vmatpush2.msra.mxu0 0.0
        %2272 = vmatprep.subr.mxu0 0.0
        %2273 = vmatpush2.msra.mxu0 0.0
        %2274 = vmatprep.subr.mxu0 0.0
        %2275 = vmatpush2.msra.mxu0 0.0
        %2276 = vmatprep.subr.mxu0 0.0
        %2277 = vmatpush2.msra.mxu0 0.0
        %2278 = vmatprep.subr.mxu0 0.0
        %2279 = vmatpush2.msra.mxu0 0.0
        %2280 = vmatprep.subr.mxu0 0.0
        %2281 = vmatpush2.msra.mxu0 0.0
        %2282 = vmatprep.subr.mxu0 0.0
        %2283 = vmatpush2.msra.mxu0 0.0
        %2284 = vmatprep.subr.mxu0 0.0
        %2285 = vmatpush2.msra.mxu0 0.0
        %2286 = vmatprep.mubr.f32.mxu0 0.0
        %2287 = vmatmul.mubr.f32.gmra.mxu0 %v1990
        %v2288 = vpop.f32.mrf.mxu0
        %v2289 = vadd.f32 %v2219, %v2288
        %v2290 = vpop.f32.mrf.mxu0
        %2291 = vdwg.mxu0
        %v2292 = vld [vmem:[#allocation3 + $0x8] sm:$0xff]
        %v2293 = vld [vmem:[#allocation3 + $0x10] sm:$0xff]
        %2296 = vrot.lane.b32.xlu0 %v2292, 127
        %v2297 = vpop.permute.xlu0 %2296
        %2298 = vrot.lane.b32.xlu0 %v2293, 127
        %v2299 = vpop.permute.xlu0 %2298
        %v2300 = vsel %vm818, %v2297, %v2299
        %2302 = vmatprep.subr.mxu0 0.0
        %2303 = vmatpush1.msra.mxu0 0.0
        %2304 = vmatprep.subr.mxu0 0.0
        %2305 = vmatpush1.msra.mxu0 0.0
        %2306 = vmatprep.subr.mxu0 0.0
        %2307 = vmatpush1.msra.mxu0 0.0
        %2308 = vmatprep.subr.mxu0 0.0
        %2309 = vmatpush1.msra.mxu0 0.0
        %2310 = vmatprep.subr.mxu0 0.0
        %2311 = vmatpush1.msra.mxu0 0.0
        %2312 = vmatprep.subr.mxu0 0.0
        %2313 = vmatpush1.msra.mxu0 0.0
        %2314 = vmatprep.subr.mxu0 0.0
        %2315 = vmatpush1.msra.mxu0 0.0
        %2316 = vmatprep.subr.mxu0 0.0
        %2317 = vmatpush1.msra.mxu0 0.0
        %2318 = vmatprep.subr.mxu0 0.0
        %2319 = vmatpush1.msra.mxu0 0.0
        %2320 = vmatprep.subr.mxu0 0.0
        %2321 = vmatpush1.msra.mxu0 0.0
        %2322 = vmatprep.subr.mxu0 0.0
        %2323 = vmatpush1.msra.mxu0 0.0
        %2324 = vmatprep.subr.mxu0 0.0
        %2325 = vmatpush1.msra.mxu0 0.0
        %2326 = vmatprep.subr.mxu0 0.0
        %2327 = vmatpush1.msra.mxu0 0.0
        %2328 = vmatprep.subr.mxu0 0.0
        %2329 = vmatpush1.msra.mxu0 0.0
        %2330 = vmatprep.subr.mxu0 0.0
        %2331 = vmatpush1.msra.mxu0 0.0
        %2332 = vmatprep.subr.mxu0 0.0
        %2333 = vmatpush1.msra.mxu0 %v2300
        %2334 = vmatprep.subr.mxu0 0.0
        %2335 = vmatpush2.msra.mxu0 0.0
        %2336 = vmatprep.subr.mxu0 0.0
        %2337 = vmatpush2.msra.mxu0 0.0
        %2338 = vmatprep.subr.mxu0 0.0
        %2339 = vmatpush2.msra.mxu0 0.0
        %2340 = vmatprep.subr.mxu0 0.0
        %2341 = vmatpush2.msra.mxu0 0.0
        %2342 = vmatprep.subr.mxu0 0.0
        %2343 = vmatpush2.msra.mxu0 0.0
        %2344 = vmatprep.subr.mxu0 0.0
        %2345 = vmatpush2.msra.mxu0 0.0
        %2346 = vmatprep.subr.mxu0 0.0
        %2347 = vmatpush2.msra.mxu0 0.0
        %2348 = vmatprep.subr.mxu0 0.0
        %2349 = vmatpush2.msra.mxu0 0.0
        %2350 = vmatprep.subr.mxu0 0.0
        %2351 = vmatpush2.msra.mxu0 0.0
        %2352 = vmatprep.subr.mxu0 0.0
        %2353 = vmatpush2.msra.mxu0 0.0
        %2354 = vmatprep.subr.mxu0 0.0
        %2355 = vmatpush2.msra.mxu0 0.0
        %2356 = vmatprep.subr.mxu0 0.0
        %2357 = vmatpush2.msra.mxu0 0.0
        %2358 = vmatprep.subr.mxu0 0.0
        %2359 = vmatpush2.msra.mxu0 0.0
        %2360 = vmatprep.subr.mxu0 0.0
        %2361 = vmatpush2.msra.mxu0 0.0
        %2362 = vmatprep.subr.mxu0 0.0
        %2363 = vmatpush2.msra.mxu0 0.0
        %2364 = vmatprep.subr.mxu0 0.0
        %2365 = vmatpush2.msra.mxu0 0.0
        %2366 = vmatprep.mubr.f32.mxu0 0.0
        %2367 = vmatmul.mubr.f32.gmra.mxu0 %v2063
        %v2368 = vpop.f32.mrf.mxu0
        %v2369 = vadd.f32 0.0, %v2368
        %v2370 = vpop.f32.mrf.mxu0
        %2371 = vdwg.mxu0
        %v2372 = vadd.f32 %v2289, %v2369
        %v2373 = vmul.f32 %v2372, %v2139
        %v2374 = vadd.f32 %v2373, %v2145
        %v2375 = vmax.f32 %v2374, 0.0
        %s2376 = scalar_lea.vmem %s514, 8 [#allocation13]
        %2377 = vst [vmem:[%s2376] sm:$0xff] %v2375
        %s2378 = sand.u32 %s323, 1
        %s2379 = scalar_lea.sflag [#allocation7], %s2378
        %s2380 = sand.u32 %s323, 1
        %s2381 = smul.addr %s2380, 16
        %s2382 = scalar_lea.vmem [#allocation13], %s2381
        // Predicated region
        $region89: #{tpu_custom_call.1} parent=71 // pred_check
          %p2383 = pneg %p333
        $region90: #{tpu_custom_call.1} parent=71 // pred_check_branch
          %2385 = sbr.rel (%p2383) target = $region92
        $region91: #{tpu_custom_call.1} parent=71 // pred_region
          %s2387 = ssub.s32 256, 256
          %2388 = vsyncadd %s2379, %s2387
          %s2389 = smul.addr %s32, 2
          %s2390 = smul.addr %s2389, 128
          %s2391 = scalar_lea.hbm %s13, %s2390
          %s2392 = sshll.u32 %s2382, 4
          %s2393 = int_to_ptr.vmem [resolvable:$true] %s2392
          %2398 = dma.vmem_to_hbm [thread:$0]  %s2393, 256, %s2391, %s2379, 128, 128, 8
        $region92: #{tpu_custom_call.1} parent=71 // pred_fallthru
          _
      $region72: #{tpu_custom_call.1} parent=5 // pred_fallthru
        _
      %p2399 = scmp.le.s32.totalorder 2, %s27
      // Predicated region
      $region93: #{tpu_custom_call.1} parent=5 // pred_check
        %p2400 = pneg %p2399
      $region94: #{tpu_custom_call.1} parent=5 // pred_check_branch
        %2402 = sbr.rel (%p2400) target = $region96
      $region95: #{tpu_custom_call.1} parent=5 // pred_region
        %s2403 = ssub.s32 %s27, 2
        // Predicated region
        $region97: #{tpu_custom_call.1} parent=95 // pred_check
          %p2404 = pneg %p339
        $region98: #{tpu_custom_call.1} parent=95 // pred_check_branch
          %2406 = sbr.rel (%p2404) target = $region100
        $region99: #{tpu_custom_call.1} parent=95 // pred_region
          %s2407 = sand.u32 %s324, 1
          %s2408 = scalar_lea.sflag [#allocation7], %s2407
          %s2409 = sand.u32 %s324, 1
          %s2410 = smul.addr %s2409, 16
          %s2411 = scalar_lea.vmem [#allocation13], %s2410
          %2412 = dma.done %s2408, 256
        $region100: #{tpu_custom_call.1} parent=95 // pred_fallthru
          _
      $region96: #{tpu_custom_call.1} parent=5 // pred_fallthru
        _
    $region6: #{tpu_custom_call.1} parent=1 // loop_footer
      %s31 = sadd.s32 1, %s27
    $region7: #{tpu_custom_call.1} parent=1 // loop_footer_branch
      %26 = sbr.rel target = $region3
    $region8: #{tpu_custom_call.1} parent=1 // loop_exit
      _
    %2413 = vsyncpa [#allocation6], 1
    %s2414 = scalar_lea.sflag [#allocation6], 1
    %2415 = vsyncpa %s2414, 1
    %2416 = vsyncpa [#allocation9], 1
    %2417 = vsyncpa [#allocation12], 1
    %2418 = vsyncpa [#allocation7], 1
    %s2419 = scalar_lea.sflag [#allocation7], 1
    %2420 = vsyncpa %s2419, 1

</llo_original>
